<compile_context>
chip_gen: v7x
topology: tpu7x:2x2x1
jax: 0.10.0
libtpu: 0.0.40
codegen_flags: <defaults>
</compile_context>

<pallas_src>
import functools

import jax
import jax.numpy as jnp
from jax.experimental import pallas as pl
from jax.experimental.pallas import tpu as pltpu

# ----------------------------- configuration ------------------------------
BATCH = 2
CHANNELS = 16
HEIGHT = 16
WIDTH = 16
KSIZE = 7
PAD = 3  # nn.Conv2d(2, 1, 7, padding=3, padding_mode='reflect')


# ------------------------------ fused kernel -------------------------------
def _sa_kernel(x_ref, w_ref, b_ref, o_ref, pad_ref, *, B, C, H, W):
    # x_ref:   (B, C, H, W) f32 in VMEM (full array, single grid step)
    # w_ref:   (98,) f32 in SMEM  (avg-channel taps [0:49], max-channel taps [49:98])
    # b_ref:   (1,)  f32 in SMEM
    # o_ref:   (B, 1, H, W) f32 in VMEM
    # pad_ref: (2, H+6, W+6) f32 VMEM scratch for the reflect-padded avg/max planes
    bias = b_ref[0]
    inv_c = 1.0 / C

    for b in range(B):  # B is tiny and static: fully unrolled inside one grid step
        x = x_ref[b]                                   # (C, H, W)

        # Channel mean / max: channels lead, so this is an elementwise reduce across
        # vreg planes (pure VALU, no cross-lane XLU traffic).
        avg = jnp.sum(x, axis=0) * inv_c               # (H, W)
        mx = jnp.max(x, axis=0)                        # (H, W)

        # In-kernel reflect pad (PyTorch 'reflect': edge excluded) of the two reduced
        # planes, built with static sliced stores into VMEM scratch.
        for c, plane in enumerate((avg, mx)):
            pad_ref[c, PAD:PAD + H, PAD:PAD + W] = plane
            for j in range(PAD):
                # top padded row j mirrors input row PAD - j
                pad_ref[c, j:j + 1, PAD:PAD + W] = plane[PAD - j:PAD - j + 1, :]
                # bottom padded row PAD+H+j mirrors input row H-2-j
                pad_ref[c, PAD + H + j:PAD + H + j + 1, PAD:PAD + W] = (
                    plane[H - 2 - j:H - 1 - j, :])
            for j in range(PAD):
                # columns reflect the row-padded plane (this also fills the corners)
                pad_ref[c, :, j:j + 1] = pad_ref[c, :, 2 * PAD - j:2 * PAD - j + 1]
                pad_ref[c, :, PAD + W + j:PAD + W + j + 1] = (
                    pad_ref[c, :, PAD + W - 2 - j:PAD + W - 1 - j])

        avg_p = pad_ref[0]                             # (H+6, W+6)
        max_p = pad_ref[1]                             # (H+6, W+6)

        # 7x7 conv over the 2-channel [avg, max] map.
        #  - dx (lane shift) is the OUTER loop: only 14 lane-offset slices total.
        #  - inner dy taps are sublane slices + vector*scalar FMAs (weights are sregs).
        #  - 4 independent accumulators so the LLO scheduler can fill the VALU slots.
        acc_a0 = jnp.zeros((H, W), jnp.float32)
        acc_a1 = jnp.zeros((H, W), jnp.float32)
        acc_m0 = jnp.zeros((H, W), jnp.float32)
        acc_m1 = jnp.zeros((H, W), jnp.float32)
        for dx in range(KSIZE):
            a_cols = avg_p[:, dx:dx + W]               # (H+6, W), one lane shift per dx
            m_cols = max_p[:, dx:dx + W]
            for dy in range(KSIZE):
                wa = w_ref[dy * KSIZE + dx]                    # avg-channel tap
                wm = w_ref[KSIZE * KSIZE + dy * KSIZE + dx]    # max-channel tap
                ta = a_cols[dy:dy + H, :] * wa
                tm = m_cols[dy:dy + H, :] * wm
                if dy % 2 == 0:
                    acc_a0 = acc_a0 + ta
                    acc_m0 = acc_m0 + tm
                else:
                    acc_a1 = acc_a1 + ta
                    acc_m1 = acc_m1 + tm

        o_ref[b, 0] = (acc_a0 + acc_a1) + (acc_m0 + acc_m1) + bias


def spatial_attention_forward(x, w_flat, bias):
    """x: (B, C, H, W) f32 NCHW.  w_flat: (2*7*7,) = conv weight (1, 2, 7, 7) flattened
    (avg-channel taps first, then max-channel taps).  bias: (1,).
    Returns (B, 1, H, W) f32."""
    B, C, H, W = x.shape
    Hp, Wp = H + 2 * PAD, W + 2 * PAD

    kernel = functools.partial(_sa_kernel, B=B, C=C, H=H, W=W)
    return pl.pallas_call(
        kernel,
        out_shape=jax.ShapeDtypeStruct((B, 1, H, W), jnp.float32),
        grid=(1,),  # single grid step; batch is folded into the block
        in_specs=[
            pl.BlockSpec((B, C, H, W), lambda i: (0, 0, 0, 0)),
            pl.BlockSpec(memory_space=pltpu.MemorySpace.SMEM),   # conv weights (98,)
            pl.BlockSpec(memory_space=pltpu.MemorySpace.SMEM),   # bias (1,)
        ],
        out_specs=pl.BlockSpec((B, 1, H, W), lambda i: (0, 0, 0, 0)),
        scratch_shapes=[pltpu.VMEM((2, Hp, Wp), jnp.float32)],
    )(x, w_flat, bias)


# --------------------------- pure-JAX reference ----------------------------
def reference_forward(x, weight, bias):
    """Mirrors the PyTorch module: mean/max over channels, concat, 7x7 reflect conv."""
    x_avg = jnp.mean(x, axis=1, keepdims=True)
    x_max = jnp.max(x, axis=1, keepdims=True)
    x2 = jnp.concatenate([x_avg, x_max], axis=1)                    # (B, 2, H, W)
    x2p = jnp.pad(x2, ((0, 0), (0, 0), (PAD, PAD), (PAD, PAD)), mode="reflect")
    out = jax.lax.conv_general_dilated(
        x2p, weight, window_strides=(1, 1), padding="VALID",
        dimension_numbers=("NCHW", "OIHW", "NCHW"))
    return out + bias.reshape(1, 1, 1, 1)


# ---------------------------------- main -----------------------------------
if __name__ == "__main__":
    key = jax.random.PRNGKey(0)
    ks = jax.random.split(key, 3)

    x = jax.random.normal(ks[0], (BATCH, CHANNELS, HEIGHT, WIDTH), jnp.float32)
    # nn.Conv2d(2, 1, 7, padding=3, padding_mode='reflect', bias=True) parameters.
    weight = 0.1 * jax.random.normal(ks[1], (1, 2, KSIZE, KSIZE), jnp.float32)
    bias = 0.1 * jax.random.normal(ks[2], (1,), jnp.float32)

    # Flatten weights for SMEM: index = in_channel * 49 + dy * 7 + dx (avg channel first).
    w_flat = weight.reshape(-1)

    out = jax.jit(spatial_attention_forward)(x, w_flat, bias)
    out = jax.block_until_ready(out)

    ref = reference_forward(x, weight, bias)
    assert out.shape == (BATCH, 1, HEIGHT, WIDTH)
    assert jnp.allclose(out, ref, rtol=1e-4, atol=1e-4), (
        f"max abs diff {jnp.max(jnp.abs(out - ref))}"
    )

    print("KERNEL_OK")
</pallas_src>

<mosaic_0001>
module attributes {stable_mosaic.version = 11 : i64} {
  func.func @_sa_kernel(%arg0: i32, %arg1: memref<2x16x16x16xf32, #tpu.memory_space<vmem>>, %arg2: memref<98xf32, #tpu.memory_space<smem>>, %arg3: memref<1xf32, #tpu.memory_space<smem>>, %arg4: memref<2x1x16x16xf32, #tpu.memory_space<vmem>>, %arg5: memref<2x22x22xf32, #tpu.memory_space<vmem>>) attributes {dimension_semantics = [#tpu.dimension_semantics<arbitrary>], iteration_bounds = array<i64: 1>, scalar_prefetch = 0 : i64, scratch_operands = 1 : i64, tpu.core_type = #tpu.core_type<tc>, window_params = [{pipeline_mode = #tpu.pipeline_mode<synchronous>, transform_indices = @transform_0, window_bounds = array<i64: 2, 16, 16, 16>}, {transform_indices = @transform_1, window_bounds = array<i64: 98>}, {transform_indices = @transform_2, window_bounds = array<i64: 1>}, {pipeline_mode = #tpu.pipeline_mode<synchronous>, transform_indices = @transform_3, window_bounds = array<i64: 2, 1, 16, 16>}]} {
    %c0 = arith.constant 0 : index
    %0 = memref.load %arg3[%c0] : memref<1xf32, #tpu.memory_space<smem>>
    %c0_0 = arith.constant 0 : index
    %c0_1 = arith.constant 0 : index
    %c0_2 = arith.constant 0 : index
    %c0_3 = arith.constant 0 : index
    %1 = vector.load %arg1[%c0_0, %c0_1, %c0_2, %c0_3] : memref<2x16x16x16xf32, #tpu.memory_space<vmem>>, vector<1x16x16x16xf32>
    %2 = vector.shape_cast %1 : vector<1x16x16x16xf32> to vector<16x16x16xf32>
    %cst = arith.constant dense<0.000000e+00> : vector<16x16xf32>
    %3 = vector.multi_reduction <add>, %2, %cst [0] : vector<16x16x16xf32> to vector<16x16xf32>
    %cst_4 = arith.constant 6.250000e-02 : f32
    %4 = vector.broadcast %cst_4 : f32 to vector<16x16xf32>
    %5 = arith.mulf %3, %4 : vector<16x16xf32>
    %cst_5 = arith.constant dense<0xFF800000> : vector<16x16xf32>
    %6 = vector.multi_reduction <maximumf>, %2, %cst_5 [0] : vector<16x16x16xf32> to vector<16x16xf32>
    %c0_6 = arith.constant 0 : index
    %c3 = arith.constant 3 : index
    %c3_7 = arith.constant 3 : index
    %7 = vector.load %arg5[%c0_6, %c3, %c3_7] : memref<2x22x22xf32, #tpu.memory_space<vmem>>, vector<1x16x16xf32>
    %8 = vector.shape_cast %7 : vector<1x16x16xf32> to vector<16x16xf32>
    %9 = vector.shape_cast %5 : vector<16x16xf32> to vector<1x16x16xf32>
    tpu.vector_store %arg5[%c0_6, %c3, %c3_7], %9 {strides = array<i32>} : memref<2x22x22xf32, #tpu.memory_space<vmem>>, vector<1x16x16xf32>,
    %10 = vector.extract_strided_slice %5 {offsets = [3, 0], sizes = [1, 16], strides = [1, 1]} : vector<16x16xf32> to vector<1x16xf32>
    %c0_8 = arith.constant 0 : index
    %c0_9 = arith.constant 0 : index
    %c3_10 = arith.constant 3 : index
    %11 = vector.load %arg5[%c0_8, %c0_9, %c3_10] : memref<2x22x22xf32, #tpu.memory_space<vmem>>, vector<1x1x16xf32>
    %12 = vector.shape_cast %11 : vector<1x1x16xf32> to vector<1x16xf32>
    %13 = vector.shape_cast %10 : vector<1x16xf32> to vector<1x1x16xf32>
    tpu.vector_store %arg5[%c0_8, %c0_9, %c3_10], %13 {strides = array<i32>} : memref<2x22x22xf32, #tpu.memory_space<vmem>>, vector<1x1x16xf32>,
    %14 = vector.extract_strided_slice %5 {offsets = [14, 0], sizes = [1, 16], strides = [1, 1]} : vector<16x16xf32> to vector<1x16xf32>
    %c0_11 = arith.constant 0 : index
    %c19 = arith.constant 19 : index
    %c3_12 = arith.constant 3 : index
    %15 = vector.load %arg5[%c0_11, %c19, %c3_12] : memref<2x22x22xf32, #tpu.memory_space<vmem>>, vector<1x1x16xf32>
    %16 = vector.shape_cast %15 : vector<1x1x16xf32> to vector<1x16xf32>
    %17 = vector.shape_cast %14 : vector<1x16xf32> to vector<1x1x16xf32>
    tpu.vector_store %arg5[%c0_11, %c19, %c3_12], %17 {strides = array<i32>} : memref<2x22x22xf32, #tpu.memory_space<vmem>>, vector<1x1x16xf32>,
    %18 = vector.extract_strided_slice %5 {offsets = [2, 0], sizes = [1, 16], strides = [1, 1]} : vector<16x16xf32> to vector<1x16xf32>
    %c0_13 = arith.constant 0 : index
    %c1 = arith.constant 1 : index
    %c3_14 = arith.constant 3 : index
    %19 = vector.load %arg5[%c0_13, %c1, %c3_14] : memref<2x22x22xf32, #tpu.memory_space<vmem>>, vector<1x1x16xf32>
    %20 = vector.shape_cast %19 : vector<1x1x16xf32> to vector<1x16xf32>
    %21 = vector.shape_cast %18 : vector<1x16xf32> to vector<1x1x16xf32>
    tpu.vector_store %arg5[%c0_13, %c1, %c3_14], %21 {strides = array<i32>} : memref<2x22x22xf32, #tpu.memory_space<vmem>>, vector<1x1x16xf32>,
    %22 = vector.extract_strided_slice %5 {offsets = [13, 0], sizes = [1, 16], strides = [1, 1]} : vector<16x16xf32> to vector<1x16xf32>
    %c0_15 = arith.constant 0 : index
    %c20 = arith.constant 20 : index
    %c3_16 = arith.constant 3 : index
    %23 = vector.load %arg5[%c0_15, %c20, %c3_16] : memref<2x22x22xf32, #tpu.memory_space<vmem>>, vector<1x1x16xf32>
    %24 = vector.shape_cast %23 : vector<1x1x16xf32> to vector<1x16xf32>
    %25 = vector.shape_cast %22 : vector<1x16xf32> to vector<1x1x16xf32>
    tpu.vector_store %arg5[%c0_15, %c20, %c3_16], %25 {strides = array<i32>} : memref<2x22x22xf32, #tpu.memory_space<vmem>>, vector<1x1x16xf32>,
    %26 = vector.extract_strided_slice %5 {offsets = [1, 0], sizes = [1, 16], strides = [1, 1]} : vector<16x16xf32> to vector<1x16xf32>
    %c0_17 = arith.constant 0 : index
    %c2 = arith.constant 2 : index
    %c3_18 = arith.constant 3 : index
    %27 = vector.load %arg5[%c0_17, %c2, %c3_18] : memref<2x22x22xf32, #tpu.memory_space<vmem>>, vector<1x1x16xf32>
    %28 = vector.shape_cast %27 : vector<1x1x16xf32> to vector<1x16xf32>
    %29 = vector.shape_cast %26 : vector<1x16xf32> to vector<1x1x16xf32>
    tpu.vector_store %arg5[%c0_17, %c2, %c3_18], %29 {strides = array<i32>} : memref<2x22x22xf32, #tpu.memory_space<vmem>>, vector<1x1x16xf32>,
    %30 = vector.extract_strided_slice %5 {offsets = [12, 0], sizes = [1, 16], strides = [1, 1]} : vector<16x16xf32> to vector<1x16xf32>
    %c0_19 = arith.constant 0 : index
    %c21 = arith.constant 21 : index
    %c3_20 = arith.constant 3 : index
    %31 = vector.load %arg5[%c0_19, %c21, %c3_20] : memref<2x22x22xf32, #tpu.memory_space<vmem>>, vector<1x1x16xf32>
    %32 = vector.shape_cast %31 : vector<1x1x16xf32> to vector<1x16xf32>
    %33 = vector.shape_cast %30 : vector<1x16xf32> to vector<1x1x16xf32>
    tpu.vector_store %arg5[%c0_19, %c21, %c3_20], %33 {strides = array<i32>} : memref<2x22x22xf32, #tpu.memory_space<vmem>>, vector<1x1x16xf32>,
    %c0_21 = arith.constant 0 : index
    %c0_22 = arith.constant 0 : index
    %c6 = arith.constant 6 : index
    %34 = vector.load %arg5[%c0_21, %c0_22, %c6] : memref<2x22x22xf32, #tpu.memory_space<vmem>>, vector<1x22x1xf32>
    %35 = vector.shape_cast %34 : vector<1x22x1xf32> to vector<22x1xf32>
    %c0_23 = arith.constant 0 : index
    %c0_24 = arith.constant 0 : index
    %c0_25 = arith.constant 0 : index
    %36 = vector.load %arg5[%c0_23, %c0_24, %c0_25] : memref<2x22x22xf32, #tpu.memory_space<vmem>>, vector<1x22x1xf32>
    %37 = vector.shape_cast %36 : vector<1x22x1xf32> to vector<22x1xf32>
    %38 = vector.shape_cast %35 : vector<22x1xf32> to vector<1x22x1xf32>
    tpu.vector_store %arg5[%c0_23, %c0_24, %c0_25], %38 {strides = array<i32>} : memref<2x22x22xf32, #tpu.memory_space<vmem>>, vector<1x22x1xf32>,
    %c0_26 = arith.constant 0 : index
    %c0_27 = arith.constant 0 : index
    %c17 = arith.constant 17 : index
    %39 = vector.load %arg5[%c0_26, %c0_27, %c17] : memref<2x22x22xf32, #tpu.memory_space<vmem>>, vector<1x22x1xf32>
    %40 = vector.shape_cast %39 : vector<1x22x1xf32> to vector<22x1xf32>
    %c0_28 = arith.constant 0 : index
    %c0_29 = arith.constant 0 : index
    %c19_30 = arith.constant 19 : index
    %41 = vector.load %arg5[%c0_28, %c0_29, %c19_30] : memref<2x22x22xf32, #tpu.memory_space<vmem>>, vector<1x22x1xf32>
    %42 = vector.shape_cast %41 : vector<1x22x1xf32> to vector<22x1xf32>
    %43 = vector.shape_cast %40 : vector<22x1xf32> to vector<1x22x1xf32>
    tpu.vector_store %arg5[%c0_28, %c0_29, %c19_30], %43 {strides = array<i32>} : memref<2x22x22xf32, #tpu.memory_space<vmem>>, vector<1x22x1xf32>,
    %c0_31 = arith.constant 0 : index
    %c0_32 = arith.constant 0 : index
    %c5 = arith.constant 5 : index
    %44 = vector.load %arg5[%c0_31, %c0_32, %c5] : memref<2x22x22xf32, #tpu.memory_space<vmem>>, vector<1x22x1xf32>
    %45 = vector.shape_cast %44 : vector<1x22x1xf32> to vector<22x1xf32>
    %c0_33 = arith.constant 0 : index
    %c0_34 = arith.constant 0 : index
    %c1_35 = arith.constant 1 : index
    %46 = vector.load %arg5[%c0_33, %c0_34, %c1_35] : memref<2x22x22xf32, #tpu.memory_space<vmem>>, vector<1x22x1xf32>
    %47 = vector.shape_cast %46 : vector<1x22x1xf32> to vector<22x1xf32>
    %48 = vector.shape_cast %45 : vector<22x1xf32> to vector<1x22x1xf32>
    tpu.vector_store %arg5[%c0_33, %c0_34, %c1_35], %48 {strides = array<i32>} : memref<2x22x22xf32, #tpu.memory_space<vmem>>, vector<1x22x1xf32>,
    %c0_36 = arith.constant 0 : index
    %c0_37 = arith.constant 0 : index
    %c16 = arith.constant 16 : index
    %49 = vector.load %arg5[%c0_36, %c0_37, %c16] : memref<2x22x22xf32, #tpu.memory_space<vmem>>, vector<1x22x1xf32>
    %50 = vector.shape_cast %49 : vector<1x22x1xf32> to vector<22x1xf32>
    %c0_38 = arith.constant 0 : index
    %c0_39 = arith.constant 0 : index
    %c20_40 = arith.constant 20 : index
    %51 = vector.load %arg5[%c0_38, %c0_39, %c20_40] : memref<2x22x22xf32, #tpu.memory_space<vmem>>, vector<1x22x1xf32>
    %52 = vector.shape_cast %51 : vector<1x22x1xf32> to vector<22x1xf32>
    %53 = vector.shape_cast %50 : vector<22x1xf32> to vector<1x22x1xf32>
    tpu.vector_store %arg5[%c0_38, %c0_39, %c20_40], %53 {strides = array<i32>} : memref<2x22x22xf32, #tpu.memory_space<vmem>>, vector<1x22x1xf32>,
    %c0_41 = arith.constant 0 : index
    %c0_42 = arith.constant 0 : index
    %c4 = arith.constant 4 : index
    %54 = vector.load %arg5[%c0_41, %c0_42, %c4] : memref<2x22x22xf32, #tpu.memory_space<vmem>>, vector<1x22x1xf32>
    %55 = vector.shape_cast %54 : vector<1x22x1xf32> to vector<22x1xf32>
    %c0_43 = arith.constant 0 : index
    %c0_44 = arith.constant 0 : index
    %c2_45 = arith.constant 2 : index
    %56 = vector.load %arg5[%c0_43, %c0_44, %c2_45] : memref<2x22x22xf32, #tpu.memory_space<vmem>>, vector<1x22x1xf32>
    %57 = vector.shape_cast %56 : vector<1x22x1xf32> to vector<22x1xf32>
    %58 = vector.shape_cast %55 : vector<22x1xf32> to vector<1x22x1xf32>
    tpu.vector_store %arg5[%c0_43, %c0_44, %c2_45], %58 {strides = array<i32>} : memref<2x22x22xf32, #tpu.memory_space<vmem>>, vector<1x22x1xf32>,
    %c0_46 = arith.constant 0 : index
    %c0_47 = arith.constant 0 : index
    %c15 = arith.constant 15 : index
    %59 = vector.load %arg5[%c0_46, %c0_47, %c15] : memref<2x22x22xf32, #tpu.memory_space<vmem>>, vector<1x22x1xf32>
    %60 = vector.shape_cast %59 : vector<1x22x1xf32> to vector<22x1xf32>
    %c0_48 = arith.constant 0 : index
    %c0_49 = arith.constant 0 : index
    %c21_50 = arith.constant 21 : index
    %61 = vector.load %arg5[%c0_48, %c0_49, %c21_50] : memref<2x22x22xf32, #tpu.memory_space<vmem>>, vector<1x22x1xf32>
    %62 = vector.shape_cast %61 : vector<1x22x1xf32> to vector<22x1xf32>
    %63 = vector.shape_cast %60 : vector<22x1xf32> to vector<1x22x1xf32>
    tpu.vector_store %arg5[%c0_48, %c0_49, %c21_50], %63 {strides = array<i32>} : memref<2x22x22xf32, #tpu.memory_space<vmem>>, vector<1x22x1xf32>,
    %c1_51 = arith.constant 1 : index
    %c3_52 = arith.constant 3 : index
    %c3_53 = arith.constant 3 : index
    %64 = vector.load %arg5[%c1_51, %c3_52, %c3_53] : memref<2x22x22xf32, #tpu.memory_space<vmem>>, vector<1x16x16xf32>
    %65 = vector.shape_cast %64 : vector<1x16x16xf32> to vector<16x16xf32>
    %66 = vector.shape_cast %6 : vector<16x16xf32> to vector<1x16x16xf32>
    tpu.vector_store %arg5[%c1_51, %c3_52, %c3_53], %66 {strides = array<i32>} : memref<2x22x22xf32, #tpu.memory_space<vmem>>, vector<1x16x16xf32>,
    %67 = vector.extract_strided_slice %6 {offsets = [3, 0], sizes = [1, 16], strides = [1, 1]} : vector<16x16xf32> to vector<1x16xf32>
    %c1_54 = arith.constant 1 : index
    %c0_55 = arith.constant 0 : index
    %c3_56 = arith.constant 3 : index
    %68 = vector.load %arg5[%c1_54, %c0_55, %c3_56] : memref<2x22x22xf32, #tpu.memory_space<vmem>>, vector<1x1x16xf32>
    %69 = vector.shape_cast %68 : vector<1x1x16xf32> to vector<1x16xf32>
    %70 = vector.shape_cast %67 : vector<1x16xf32> to vector<1x1x16xf32>
    tpu.vector_store %arg5[%c1_54, %c0_55, %c3_56], %70 {strides = array<i32>} : memref<2x22x22xf32, #tpu.memory_space<vmem>>, vector<1x1x16xf32>,
    %71 = vector.extract_strided_slice %6 {offsets = [14, 0], sizes = [1, 16], strides = [1, 1]} : vector<16x16xf32> to vector<1x16xf32>
    %c1_57 = arith.constant 1 : index
    %c19_58 = arith.constant 19 : index
    %c3_59 = arith.constant 3 : index
    %72 = vector.load %arg5[%c1_57, %c19_58, %c3_59] : memref<2x22x22xf32, #tpu.memory_space<vmem>>, vector<1x1x16xf32>
    %73 = vector.shape_cast %72 : vector<1x1x16xf32> to vector<1x16xf32>
    %74 = vector.shape_cast %71 : vector<1x16xf32> to vector<1x1x16xf32>
    tpu.vector_store %arg5[%c1_57, %c19_58, %c3_59], %74 {strides = array<i32>} : memref<2x22x22xf32, #tpu.memory_space<vmem>>, vector<1x1x16xf32>,
    %75 = vector.extract_strided_slice %6 {offsets = [2, 0], sizes = [1, 16], strides = [1, 1]} : vector<16x16xf32> to vector<1x16xf32>
    %c1_60 = arith.constant 1 : index
    %c1_61 = arith.constant 1 : index
    %c3_62 = arith.constant 3 : index
    %76 = vector.load %arg5[%c1_60, %c1_61, %c3_62] : memref<2x22x22xf32, #tpu.memory_space<vmem>>, vector<1x1x16xf32>
    %77 = vector.shape_cast %76 : vector<1x1x16xf32> to vector<1x16xf32>
    %78 = vector.shape_cast %75 : vector<1x16xf32> to vector<1x1x16xf32>
    tpu.vector_store %arg5[%c1_60, %c1_61, %c3_62], %78 {strides = array<i32>} : memref<2x22x22xf32, #tpu.memory_space<vmem>>, vector<1x1x16xf32>,
    %79 = vector.extract_strided_slice %6 {offsets = [13, 0], sizes = [1, 16], strides = [1, 1]} : vector<16x16xf32> to vector<1x16xf32>
    %c1_63 = arith.constant 1 : index
    %c20_64 = arith.constant 20 : index
    %c3_65 = arith.constant 3 : index
    %80 = vector.load %arg5[%c1_63, %c20_64, %c3_65] : memref<2x22x22xf32, #tpu.memory_space<vmem>>, vector<1x1x16xf32>
    %81 = vector.shape_cast %80 : vector<1x1x16xf32> to vector<1x16xf32>
    %82 = vector.shape_cast %79 : vector<1x16xf32> to vector<1x1x16xf32>
    tpu.vector_store %arg5[%c1_63, %c20_64, %c3_65], %82 {strides = array<i32>} : memref<2x22x22xf32, #tpu.memory_space<vmem>>, vector<1x1x16xf32>,
    %83 = vector.extract_strided_slice %6 {offsets = [1, 0], sizes = [1, 16], strides = [1, 1]} : vector<16x16xf32> to vector<1x16xf32>
    %c1_66 = arith.constant 1 : index
    %c2_67 = arith.constant 2 : index
    %c3_68 = arith.constant 3 : index
    %84 = vector.load %arg5[%c1_66, %c2_67, %c3_68] : memref<2x22x22xf32, #tpu.memory_space<vmem>>, vector<1x1x16xf32>
    %85 = vector.shape_cast %84 : vector<1x1x16xf32> to vector<1x16xf32>
    %86 = vector.shape_cast %83 : vector<1x16xf32> to vector<1x1x16xf32>
    tpu.vector_store %arg5[%c1_66, %c2_67, %c3_68], %86 {strides = array<i32>} : memref<2x22x22xf32, #tpu.memory_space<vmem>>, vector<1x1x16xf32>,
    %87 = vector.extract_strided_slice %6 {offsets = [12, 0], sizes = [1, 16], strides = [1, 1]} : vector<16x16xf32> to vector<1x16xf32>
    %c1_69 = arith.constant 1 : index
    %c21_70 = arith.constant 21 : index
    %c3_71 = arith.constant 3 : index
    %88 = vector.load %arg5[%c1_69, %c21_70, %c3_71] : memref<2x22x22xf32, #tpu.memory_space<vmem>>, vector<1x1x16xf32>
    %89 = vector.shape_cast %88 : vector<1x1x16xf32> to vector<1x16xf32>
    %90 = vector.shape_cast %87 : vector<1x16xf32> to vector<1x1x16xf32>
    tpu.vector_store %arg5[%c1_69, %c21_70, %c3_71], %90 {strides = array<i32>} : memref<2x22x22xf32, #tpu.memory_space<vmem>>, vector<1x1x16xf32>,
    %c1_72 = arith.constant 1 : index
    %c0_73 = arith.constant 0 : index
    %c6_74 = arith.constant 6 : index
    %91 = vector.load %arg5[%c1_72, %c0_73, %c6_74] : memref<2x22x22xf32, #tpu.memory_space<vmem>>, vector<1x22x1xf32>
    %92 = vector.shape_cast %91 : vector<1x22x1xf32> to vector<22x1xf32>
    %c1_75 = arith.constant 1 : index
    %c0_76 = arith.constant 0 : index
    %c0_77 = arith.constant 0 : index
    %93 = vector.load %arg5[%c1_75, %c0_76, %c0_77] : memref<2x22x22xf32, #tpu.memory_space<vmem>>, vector<1x22x1xf32>
    %94 = vector.shape_cast %93 : vector<1x22x1xf32> to vector<22x1xf32>
    %95 = vector.shape_cast %92 : vector<22x1xf32> to vector<1x22x1xf32>
    tpu.vector_store %arg5[%c1_75, %c0_76, %c0_77], %95 {strides = array<i32>} : memref<2x22x22xf32, #tpu.memory_space<vmem>>, vector<1x22x1xf32>,
    %c1_78 = arith.constant 1 : index
    %c0_79 = arith.constant 0 : index
    %c17_80 = arith.constant 17 : index
    %96 = vector.load %arg5[%c1_78, %c0_79, %c17_80] : memref<2x22x22xf32, #tpu.memory_space<vmem>>, vector<1x22x1xf32>
    %97 = vector.shape_cast %96 : vector<1x22x1xf32> to vector<22x1xf32>
    %c1_81 = arith.constant 1 : index
    %c0_82 = arith.constant 0 : index
    %c19_83 = arith.constant 19 : index
    %98 = vector.load %arg5[%c1_81, %c0_82, %c19_83] : memref<2x22x22xf32, #tpu.memory_space<vmem>>, vector<1x22x1xf32>
    %99 = vector.shape_cast %98 : vector<1x22x1xf32> to vector<22x1xf32>
    %100 = vector.shape_cast %97 : vector<22x1xf32> to vector<1x22x1xf32>
    tpu.vector_store %arg5[%c1_81, %c0_82, %c19_83], %100 {strides = array<i32>} : memref<2x22x22xf32, #tpu.memory_space<vmem>>, vector<1x22x1xf32>,
    %c1_84 = arith.constant 1 : index
    %c0_85 = arith.constant 0 : index
    %c5_86 = arith.constant 5 : index
    %101 = vector.load %arg5[%c1_84, %c0_85, %c5_86] : memref<2x22x22xf32, #tpu.memory_space<vmem>>, vector<1x22x1xf32>
    %102 = vector.shape_cast %101 : vector<1x22x1xf32> to vector<22x1xf32>
    %c1_87 = arith.constant 1 : index
    %c0_88 = arith.constant 0 : index
    %c1_89 = arith.constant 1 : index
    %103 = vector.load %arg5[%c1_87, %c0_88, %c1_89] : memref<2x22x22xf32, #tpu.memory_space<vmem>>, vector<1x22x1xf32>
    %104 = vector.shape_cast %103 : vector<1x22x1xf32> to vector<22x1xf32>
    %105 = vector.shape_cast %102 : vector<22x1xf32> to vector<1x22x1xf32>
    tpu.vector_store %arg5[%c1_87, %c0_88, %c1_89], %105 {strides = array<i32>} : memref<2x22x22xf32, #tpu.memory_space<vmem>>, vector<1x22x1xf32>,
    %c1_90 = arith.constant 1 : index
    %c0_91 = arith.constant 0 : index
    %c16_92 = arith.constant 16 : index
    %106 = vector.load %arg5[%c1_90, %c0_91, %c16_92] : memref<2x22x22xf32, #tpu.memory_space<vmem>>, vector<1x22x1xf32>
    %107 = vector.shape_cast %106 : vector<1x22x1xf32> to vector<22x1xf32>
    %c1_93 = arith.constant 1 : index
    %c0_94 = arith.constant 0 : index
    %c20_95 = arith.constant 20 : index
    %108 = vector.load %arg5[%c1_93, %c0_94, %c20_95] : memref<2x22x22xf32, #tpu.memory_space<vmem>>, vector<1x22x1xf32>
    %109 = vector.shape_cast %108 : vector<1x22x1xf32> to vector<22x1xf32>
    %110 = vector.shape_cast %107 : vector<22x1xf32> to vector<1x22x1xf32>
    tpu.vector_store %arg5[%c1_93, %c0_94, %c20_95], %110 {strides = array<i32>} : memref<2x22x22xf32, #tpu.memory_space<vmem>>, vector<1x22x1xf32>,
    %c1_96 = arith.constant 1 : index
    %c0_97 = arith.constant 0 : index
    %c4_98 = arith.constant 4 : index
    %111 = vector.load %arg5[%c1_96, %c0_97, %c4_98] : memref<2x22x22xf32, #tpu.memory_space<vmem>>, vector<1x22x1xf32>
    %112 = vector.shape_cast %111 : vector<1x22x1xf32> to vector<22x1xf32>
    %c1_99 = arith.constant 1 : index
    %c0_100 = arith.constant 0 : index
    %c2_101 = arith.constant 2 : index
    %113 = vector.load %arg5[%c1_99, %c0_100, %c2_101] : memref<2x22x22xf32, #tpu.memory_space<vmem>>, vector<1x22x1xf32>
    %114 = vector.shape_cast %113 : vector<1x22x1xf32> to vector<22x1xf32>
    %115 = vector.shape_cast %112 : vector<22x1xf32> to vector<1x22x1xf32>
    tpu.vector_store %arg5[%c1_99, %c0_100, %c2_101], %115 {strides = array<i32>} : memref<2x22x22xf32, #tpu.memory_space<vmem>>, vector<1x22x1xf32>,
    %c1_102 = arith.constant 1 : index
    %c0_103 = arith.constant 0 : index
    %c15_104 = arith.constant 15 : index
    %116 = vector.load %arg5[%c1_102, %c0_103, %c15_104] : memref<2x22x22xf32, #tpu.memory_space<vmem>>, vector<1x22x1xf32>
    %117 = vector.shape_cast %116 : vector<1x22x1xf32> to vector<22x1xf32>
    %c1_105 = arith.constant 1 : index
    %c0_106 = arith.constant 0 : index
    %c21_107 = arith.constant 21 : index
    %118 = vector.load %arg5[%c1_105, %c0_106, %c21_107] : memref<2x22x22xf32, #tpu.memory_space<vmem>>, vector<1x22x1xf32>
    %119 = vector.shape_cast %118 : vector<1x22x1xf32> to vector<22x1xf32>
    %120 = vector.shape_cast %117 : vector<22x1xf32> to vector<1x22x1xf32>
    tpu.vector_store %arg5[%c1_105, %c0_106, %c21_107], %120 {strides = array<i32>} : memref<2x22x22xf32, #tpu.memory_space<vmem>>, vector<1x22x1xf32>,
    %c0_108 = arith.constant 0 : index
    %c0_109 = arith.constant 0 : index
    %c0_110 = arith.constant 0 : index
    %121 = vector.load %arg5[%c0_108, %c0_109, %c0_110] : memref<2x22x22xf32, #tpu.memory_space<vmem>>, vector<1x22x22xf32>
    %122 = vector.shape_cast %121 : vector<1x22x22xf32> to vector<22x22xf32>
    %c1_111 = arith.constant 1 : index
    %c0_112 = arith.constant 0 : index
    %c0_113 = arith.constant 0 : index
    %123 = vector.load %arg5[%c1_111, %c0_112, %c0_113] : memref<2x22x22xf32, #tpu.memory_space<vmem>>, vector<1x22x22xf32>
    %124 = vector.shape_cast %123 : vector<1x22x22xf32> to vector<22x22xf32>
    %cst_114 = arith.constant 0.000000e+00 : f32
    %125 = vector.broadcast %cst_114 : f32 to vector<16x16xf32>
    %cst_115 = arith.constant 0.000000e+00 : f32
    %126 = vector.broadcast %cst_115 : f32 to vector<16x16xf32>
    %cst_116 = arith.constant 0.000000e+00 : f32
    %127 = vector.broadcast %cst_116 : f32 to vector<16x16xf32>
    %cst_117 = arith.constant 0.000000e+00 : f32
    %128 = vector.broadcast %cst_117 : f32 to vector<16x16xf32>
    %129 = vector.extract_strided_slice %122 {offsets = [0, 0], sizes = [22, 16], strides = [1, 1]} : vector<22x22xf32> to vector<22x16xf32>
    %130 = vector.extract_strided_slice %124 {offsets = [0, 0], sizes = [22, 16], strides = [1, 1]} : vector<22x22xf32> to vector<22x16xf32>
    %c0_118 = arith.constant 0 : index
    %131 = memref.load %arg2[%c0_118] : memref<98xf32, #tpu.memory_space<smem>>
    %c49 = arith.constant 49 : index
    %132 = memref.load %arg2[%c49] : memref<98xf32, #tpu.memory_space<smem>>
    %133 = vector.extract_strided_slice %129 {offsets = [0, 0], sizes = [16, 16], strides = [1, 1]} : vector<22x16xf32> to vector<16x16xf32>
    %134 = vector.broadcast %131 : f32 to vector<16x16xf32>
    %135 = arith.mulf %133, %134 : vector<16x16xf32>
    %136 = vector.extract_strided_slice %130 {offsets = [0, 0], sizes = [16, 16], strides = [1, 1]} : vector<22x16xf32> to vector<16x16xf32>
    %137 = vector.broadcast %132 : f32 to vector<16x16xf32>
    %138 = arith.mulf %136, %137 : vector<16x16xf32>
    %139 = arith.addf %125, %135 : vector<16x16xf32>
    %140 = arith.addf %127, %138 : vector<16x16xf32>
    %c7 = arith.constant 7 : index
    %141 = memref.load %arg2[%c7] : memref<98xf32, #tpu.memory_space<smem>>
    %c56 = arith.constant 56 : index
    %142 = memref.load %arg2[%c56] : memref<98xf32, #tpu.memory_space<smem>>
    %143 = vector.extract_strided_slice %129 {offsets = [1, 0], sizes = [16, 16], strides = [1, 1]} : vector<22x16xf32> to vector<16x16xf32>
    %144 = vector.broadcast %141 : f32 to vector<16x16xf32>
    %145 = arith.mulf %143, %144 : vector<16x16xf32>
    %146 = vector.extract_strided_slice %130 {offsets = [1, 0], sizes = [16, 16], strides = [1, 1]} : vector<22x16xf32> to vector<16x16xf32>
    %147 = vector.broadcast %142 : f32 to vector<16x16xf32>
    %148 = arith.mulf %146, %147 : vector<16x16xf32>
    %149 = arith.addf %126, %145 : vector<16x16xf32>
    %150 = arith.addf %128, %148 : vector<16x16xf32>
    %c14 = arith.constant 14 : index
    %151 = memref.load %arg2[%c14] : memref<98xf32, #tpu.memory_space<smem>>
    %c63 = arith.constant 63 : index
    %152 = memref.load %arg2[%c63] : memref<98xf32, #tpu.memory_space<smem>>
    %153 = vector.extract_strided_slice %129 {offsets = [2, 0], sizes = [16, 16], strides = [1, 1]} : vector<22x16xf32> to vector<16x16xf32>
    %154 = vector.broadcast %151 : f32 to vector<16x16xf32>
    %155 = arith.mulf %153, %154 : vector<16x16xf32>
    %156 = vector.extract_strided_slice %130 {offsets = [2, 0], sizes = [16, 16], strides = [1, 1]} : vector<22x16xf32> to vector<16x16xf32>
    %157 = vector.broadcast %152 : f32 to vector<16x16xf32>
    %158 = arith.mulf %156, %157 : vector<16x16xf32>
    %159 = arith.addf %139, %155 : vector<16x16xf32>
    %160 = arith.addf %140, %158 : vector<16x16xf32>
    %c21_119 = arith.constant 21 : index
    %161 = memref.load %arg2[%c21_119] : memref<98xf32, #tpu.memory_space<smem>>
    %c70 = arith.constant 70 : index
    %162 = memref.load %arg2[%c70] : memref<98xf32, #tpu.memory_space<smem>>
    %163 = vector.extract_strided_slice %129 {offsets = [3, 0], sizes = [16, 16], strides = [1, 1]} : vector<22x16xf32> to vector<16x16xf32>
    %164 = vector.broadcast %161 : f32 to vector<16x16xf32>
    %165 = arith.mulf %163, %164 : vector<16x16xf32>
    %166 = vector.extract_strided_slice %130 {offsets = [3, 0], sizes = [16, 16], strides = [1, 1]} : vector<22x16xf32> to vector<16x16xf32>
    %167 = vector.broadcast %162 : f32 to vector<16x16xf32>
    %168 = arith.mulf %166, %167 : vector<16x16xf32>
    %169 = arith.addf %149, %165 : vector<16x16xf32>
    %170 = arith.addf %150, %168 : vector<16x16xf32>
    %c28 = arith.constant 28 : index
    %171 = memref.load %arg2[%c28] : memref<98xf32, #tpu.memory_space<smem>>
    %c77 = arith.constant 77 : index
    %172 = memref.load %arg2[%c77] : memref<98xf32, #tpu.memory_space<smem>>
    %173 = vector.extract_strided_slice %129 {offsets = [4, 0], sizes = [16, 16], strides = [1, 1]} : vector<22x16xf32> to vector<16x16xf32>
    %174 = vector.broadcast %171 : f32 to vector<16x16xf32>
    %175 = arith.mulf %173, %174 : vector<16x16xf32>
    %176 = vector.extract_strided_slice %130 {offsets = [4, 0], sizes = [16, 16], strides = [1, 1]} : vector<22x16xf32> to vector<16x16xf32>
    %177 = vector.broadcast %172 : f32 to vector<16x16xf32>
    %178 = arith.mulf %176, %177 : vector<16x16xf32>
    %179 = arith.addf %159, %175 : vector<16x16xf32>
    %180 = arith.addf %160, %178 : vector<16x16xf32>
    %c35 = arith.constant 35 : index
    %181 = memref.load %arg2[%c35] : memref<98xf32, #tpu.memory_space<smem>>
    %c84 = arith.constant 84 : index
    %182 = memref.load %arg2[%c84] : memref<98xf32, #tpu.memory_space<smem>>
    %183 = vector.extract_strided_slice %129 {offsets = [5, 0], sizes = [16, 16], strides = [1, 1]} : vector<22x16xf32> to vector<16x16xf32>
    %184 = vector.broadcast %181 : f32 to vector<16x16xf32>
    %185 = arith.mulf %183, %184 : vector<16x16xf32>
    %186 = vector.extract_strided_slice %130 {offsets = [5, 0], sizes = [16, 16], strides = [1, 1]} : vector<22x16xf32> to vector<16x16xf32>
    %187 = vector.broadcast %182 : f32 to vector<16x16xf32>
    %188 = arith.mulf %186, %187 : vector<16x16xf32>
    %189 = arith.addf %169, %185 : vector<16x16xf32>
    %190 = arith.addf %170, %188 : vector<16x16xf32>
    %c42 = arith.constant 42 : index
    %191 = memref.load %arg2[%c42] : memref<98xf32, #tpu.memory_space<smem>>
    %c91 = arith.constant 91 : index
    %192 = memref.load %arg2[%c91] : memref<98xf32, #tpu.memory_space<smem>>
    %193 = vector.extract_strided_slice %129 {offsets = [6, 0], sizes = [16, 16], strides = [1, 1]} : vector<22x16xf32> to vector<16x16xf32>
    %194 = vector.broadcast %191 : f32 to vector<16x16xf32>
    %195 = arith.mulf %193, %194 : vector<16x16xf32>
    %196 = vector.extract_strided_slice %130 {offsets = [6, 0], sizes = [16, 16], strides = [1, 1]} : vector<22x16xf32> to vector<16x16xf32>
    %197 = vector.broadcast %192 : f32 to vector<16x16xf32>
    %198 = arith.mulf %196, %197 : vector<16x16xf32>
    %199 = arith.addf %179, %195 : vector<16x16xf32>
    %200 = arith.addf %180, %198 : vector<16x16xf32>
    %201 = vector.extract_strided_slice %122 {offsets = [0, 1], sizes = [22, 16], strides = [1, 1]} : vector<22x22xf32> to vector<22x16xf32>
    %202 = vector.extract_strided_slice %124 {offsets = [0, 1], sizes = [22, 16], strides = [1, 1]} : vector<22x22xf32> to vector<22x16xf32>
    %c1_120 = arith.constant 1 : index
    %203 = memref.load %arg2[%c1_120] : memref<98xf32, #tpu.memory_space<smem>>
    %c50 = arith.constant 50 : index
    %204 = memref.load %arg2[%c50] : memref<98xf32, #tpu.memory_space<smem>>
    %205 = vector.extract_strided_slice %201 {offsets = [0, 0], sizes = [16, 16], strides = [1, 1]} : vector<22x16xf32> to vector<16x16xf32>
    %206 = vector.broadcast %203 : f32 to vector<16x16xf32>
    %207 = arith.mulf %205, %206 : vector<16x16xf32>
    %208 = vector.extract_strided_slice %202 {offsets = [0, 0], sizes = [16, 16], strides = [1, 1]} : vector<22x16xf32> to vector<16x16xf32>
    %209 = vector.broadcast %204 : f32 to vector<16x16xf32>
    %210 = arith.mulf %208, %209 : vector<16x16xf32>
    %211 = arith.addf %199, %207 : vector<16x16xf32>
    %212 = arith.addf %200, %210 : vector<16x16xf32>
    %c8 = arith.constant 8 : index
    %213 = memref.load %arg2[%c8] : memref<98xf32, #tpu.memory_space<smem>>
    %c57 = arith.constant 57 : index
    %214 = memref.load %arg2[%c57] : memref<98xf32, #tpu.memory_space<smem>>
    %215 = vector.extract_strided_slice %201 {offsets = [1, 0], sizes = [16, 16], strides = [1, 1]} : vector<22x16xf32> to vector<16x16xf32>
    %216 = vector.broadcast %213 : f32 to vector<16x16xf32>
    %217 = arith.mulf %215, %216 : vector<16x16xf32>
    %218 = vector.extract_strided_slice %202 {offsets = [1, 0], sizes = [16, 16], strides = [1, 1]} : vector<22x16xf32> to vector<16x16xf32>
    %219 = vector.broadcast %214 : f32 to vector<16x16xf32>
    %220 = arith.mulf %218, %219 : vector<16x16xf32>
    %221 = arith.addf %189, %217 : vector<16x16xf32>
    %222 = arith.addf %190, %220 : vector<16x16xf32>
    %c15_121 = arith.constant 15 : index
    %223 = memref.load %arg2[%c15_121] : memref<98xf32, #tpu.memory_space<smem>>
    %c64 = arith.constant 64 : index
    %224 = memref.load %arg2[%c64] : memref<98xf32, #tpu.memory_space<smem>>
    %225 = vector.extract_strided_slice %201 {offsets = [2, 0], sizes = [16, 16], strides = [1, 1]} : vector<22x16xf32> to vector<16x16xf32>
    %226 = vector.broadcast %223 : f32 to vector<16x16xf32>
    %227 = arith.mulf %225, %226 : vector<16x16xf32>
    %228 = vector.extract_strided_slice %202 {offsets = [2, 0], sizes = [16, 16], strides = [1, 1]} : vector<22x16xf32> to vector<16x16xf32>
    %229 = vector.broadcast %224 : f32 to vector<16x16xf32>
    %230 = arith.mulf %228, %229 : vector<16x16xf32>
    %231 = arith.addf %211, %227 : vector<16x16xf32>
    %232 = arith.addf %212, %230 : vector<16x16xf32>
    %c22 = arith.constant 22 : index
    %233 = memref.load %arg2[%c22] : memref<98xf32, #tpu.memory_space<smem>>
    %c71 = arith.constant 71 : index
    %234 = memref.load %arg2[%c71] : memref<98xf32, #tpu.memory_space<smem>>
    %235 = vector.extract_strided_slice %201 {offsets = [3, 0], sizes = [16, 16], strides = [1, 1]} : vector<22x16xf32> to vector<16x16xf32>
    %236 = vector.broadcast %233 : f32 to vector<16x16xf32>
    %237 = arith.mulf %235, %236 : vector<16x16xf32>
    %238 = vector.extract_strided_slice %202 {offsets = [3, 0], sizes = [16, 16], strides = [1, 1]} : vector<22x16xf32> to vector<16x16xf32>
    %239 = vector.broadcast %234 : f32 to vector<16x16xf32>
    %240 = arith.mulf %238, %239 : vector<16x16xf32>
    %241 = arith.addf %221, %237 : vector<16x16xf32>
    %242 = arith.addf %222, %240 : vector<16x16xf32>
    %c29 = arith.constant 29 : index
    %243 = memref.load %arg2[%c29] : memref<98xf32, #tpu.memory_space<smem>>
    %c78 = arith.constant 78 : index
    %244 = memref.load %arg2[%c78] : memref<98xf32, #tpu.memory_space<smem>>
    %245 = vector.extract_strided_slice %201 {offsets = [4, 0], sizes = [16, 16], strides = [1, 1]} : vector<22x16xf32> to vector<16x16xf32>
    %246 = vector.broadcast %243 : f32 to vector<16x16xf32>
    %247 = arith.mulf %245, %246 : vector<16x16xf32>
    %248 = vector.extract_strided_slice %202 {offsets = [4, 0], sizes = [16, 16], strides = [1, 1]} : vector<22x16xf32> to vector<16x16xf32>
    %249 = vector.broadcast %244 : f32 to vector<16x16xf32>
    %250 = arith.mulf %248, %249 : vector<16x16xf32>
    %251 = arith.addf %231, %247 : vector<16x16xf32>
    %252 = arith.addf %232, %250 : vector<16x16xf32>
    %c36 = arith.constant 36 : index
    %253 = memref.load %arg2[%c36] : memref<98xf32, #tpu.memory_space<smem>>
    %c85 = arith.constant 85 : index
    %254 = memref.load %arg2[%c85] : memref<98xf32, #tpu.memory_space<smem>>
    %255 = vector.extract_strided_slice %201 {offsets = [5, 0], sizes = [16, 16], strides = [1, 1]} : vector<22x16xf32> to vector<16x16xf32>
    %256 = vector.broadcast %253 : f32 to vector<16x16xf32>
    %257 = arith.mulf %255, %256 : vector<16x16xf32>
    %258 = vector.extract_strided_slice %202 {offsets = [5, 0], sizes = [16, 16], strides = [1, 1]} : vector<22x16xf32> to vector<16x16xf32>
    %259 = vector.broadcast %254 : f32 to vector<16x16xf32>
    %260 = arith.mulf %258, %259 : vector<16x16xf32>
    %261 = arith.addf %241, %257 : vector<16x16xf32>
    %262 = arith.addf %242, %260 : vector<16x16xf32>
    %c43 = arith.constant 43 : index
    %263 = memref.load %arg2[%c43] : memref<98xf32, #tpu.memory_space<smem>>
    %c92 = arith.constant 92 : index
    %264 = memref.load %arg2[%c92] : memref<98xf32, #tpu.memory_space<smem>>
    %265 = vector.extract_strided_slice %201 {offsets = [6, 0], sizes = [16, 16], strides = [1, 1]} : vector<22x16xf32> to vector<16x16xf32>
    %266 = vector.broadcast %263 : f32 to vector<16x16xf32>
    %267 = arith.mulf %265, %266 : vector<16x16xf32>
    %268 = vector.extract_strided_slice %202 {offsets = [6, 0], sizes = [16, 16], strides = [1, 1]} : vector<22x16xf32> to vector<16x16xf32>
    %269 = vector.broadcast %264 : f32 to vector<16x16xf32>
    %270 = arith.mulf %268, %269 : vector<16x16xf32>
    %271 = arith.addf %251, %267 : vector<16x16xf32>
    %272 = arith.addf %252, %270 : vector<16x16xf32>
    %273 = vector.extract_strided_slice %122 {offsets = [0, 2], sizes = [22, 16], strides = [1, 1]} : vector<22x22xf32> to vector<22x16xf32>
    %274 = vector.extract_strided_slice %124 {offsets = [0, 2], sizes = [22, 16], strides = [1, 1]} : vector<22x22xf32> to vector<22x16xf32>
    %c2_122 = arith.constant 2 : index
    %275 = memref.load %arg2[%c2_122] : memref<98xf32, #tpu.memory_space<smem>>
    %c51 = arith.constant 51 : index
    %276 = memref.load %arg2[%c51] : memref<98xf32, #tpu.memory_space<smem>>
    %277 = vector.extract_strided_slice %273 {offsets = [0, 0], sizes = [16, 16], strides = [1, 1]} : vector<22x16xf32> to vector<16x16xf32>
    %278 = vector.broadcast %275 : f32 to vector<16x16xf32>
    %279 = arith.mulf %277, %278 : vector<16x16xf32>
    %280 = vector.extract_strided_slice %274 {offsets = [0, 0], sizes = [16, 16], strides = [1, 1]} : vector<22x16xf32> to vector<16x16xf32>
    %281 = vector.broadcast %276 : f32 to vector<16x16xf32>
    %282 = arith.mulf %280, %281 : vector<16x16xf32>
    %283 = arith.addf %271, %279 : vector<16x16xf32>
    %284 = arith.addf %272, %282 : vector<16x16xf32>
    %c9 = arith.constant 9 : index
    %285 = memref.load %arg2[%c9] : memref<98xf32, #tpu.memory_space<smem>>
    %c58 = arith.constant 58 : index
    %286 = memref.load %arg2[%c58] : memref<98xf32, #tpu.memory_space<smem>>
    %287 = vector.extract_strided_slice %273 {offsets = [1, 0], sizes = [16, 16], strides = [1, 1]} : vector<22x16xf32> to vector<16x16xf32>
    %288 = vector.broadcast %285 : f32 to vector<16x16xf32>
    %289 = arith.mulf %287, %288 : vector<16x16xf32>
    %290 = vector.extract_strided_slice %274 {offsets = [1, 0], sizes = [16, 16], strides = [1, 1]} : vector<22x16xf32> to vector<16x16xf32>
    %291 = vector.broadcast %286 : f32 to vector<16x16xf32>
    %292 = arith.mulf %290, %291 : vector<16x16xf32>
    %293 = arith.addf %261, %289 : vector<16x16xf32>
    %294 = arith.addf %262, %292 : vector<16x16xf32>
    %c16_123 = arith.constant 16 : index
    %295 = memref.load %arg2[%c16_123] : memref<98xf32, #tpu.memory_space<smem>>
    %c65 = arith.constant 65 : index
    %296 = memref.load %arg2[%c65] : memref<98xf32, #tpu.memory_space<smem>>
    %297 = vector.extract_strided_slice %273 {offsets = [2, 0], sizes = [16, 16], strides = [1, 1]} : vector<22x16xf32> to vector<16x16xf32>
    %298 = vector.broadcast %295 : f32 to vector<16x16xf32>
    %299 = arith.mulf %297, %298 : vector<16x16xf32>
    %300 = vector.extract_strided_slice %274 {offsets = [2, 0], sizes = [16, 16], strides = [1, 1]} : vector<22x16xf32> to vector<16x16xf32>
    %301 = vector.broadcast %296 : f32 to vector<16x16xf32>
    %302 = arith.mulf %300, %301 : vector<16x16xf32>
    %303 = arith.addf %283, %299 : vector<16x16xf32>
    %304 = arith.addf %284, %302 : vector<16x16xf32>
    %c23 = arith.constant 23 : index
    %305 = memref.load %arg2[%c23] : memref<98xf32, #tpu.memory_space<smem>>
    %c72 = arith.constant 72 : index
    %306 = memref.load %arg2[%c72] : memref<98xf32, #tpu.memory_space<smem>>
    %307 = vector.extract_strided_slice %273 {offsets = [3, 0], sizes = [16, 16], strides = [1, 1]} : vector<22x16xf32> to vector<16x16xf32>
    %308 = vector.broadcast %305 : f32 to vector<16x16xf32>
    %309 = arith.mulf %307, %308 : vector<16x16xf32>
    %310 = vector.extract_strided_slice %274 {offsets = [3, 0], sizes = [16, 16], strides = [1, 1]} : vector<22x16xf32> to vector<16x16xf32>
    %311 = vector.broadcast %306 : f32 to vector<16x16xf32>
    %312 = arith.mulf %310, %311 : vector<16x16xf32>
    %313 = arith.addf %293, %309 : vector<16x16xf32>
    %314 = arith.addf %294, %312 : vector<16x16xf32>
    %c30 = arith.constant 30 : index
    %315 = memref.load %arg2[%c30] : memref<98xf32, #tpu.memory_space<smem>>
    %c79 = arith.constant 79 : index
    %316 = memref.load %arg2[%c79] : memref<98xf32, #tpu.memory_space<smem>>
    %317 = vector.extract_strided_slice %273 {offsets = [4, 0], sizes = [16, 16], strides = [1, 1]} : vector<22x16xf32> to vector<16x16xf32>
    %318 = vector.broadcast %315 : f32 to vector<16x16xf32>
    %319 = arith.mulf %317, %318 : vector<16x16xf32>
    %320 = vector.extract_strided_slice %274 {offsets = [4, 0], sizes = [16, 16], strides = [1, 1]} : vector<22x16xf32> to vector<16x16xf32>
    %321 = vector.broadcast %316 : f32 to vector<16x16xf32>
    %322 = arith.mulf %320, %321 : vector<16x16xf32>
    %323 = arith.addf %303, %319 : vector<16x16xf32>
    %324 = arith.addf %304, %322 : vector<16x16xf32>
    %c37 = arith.constant 37 : index
    %325 = memref.load %arg2[%c37] : memref<98xf32, #tpu.memory_space<smem>>
    %c86 = arith.constant 86 : index
    %326 = memref.load %arg2[%c86] : memref<98xf32, #tpu.memory_space<smem>>
    %327 = vector.extract_strided_slice %273 {offsets = [5, 0], sizes = [16, 16], strides = [1, 1]} : vector<22x16xf32> to vector<16x16xf32>
    %328 = vector.broadcast %325 : f32 to vector<16x16xf32>
    %329 = arith.mulf %327, %328 : vector<16x16xf32>
    %330 = vector.extract_strided_slice %274 {offsets = [5, 0], sizes = [16, 16], strides = [1, 1]} : vector<22x16xf32> to vector<16x16xf32>
    %331 = vector.broadcast %326 : f32 to vector<16x16xf32>
    %332 = arith.mulf %330, %331 : vector<16x16xf32>
    %333 = arith.addf %313, %329 : vector<16x16xf32>
    %334 = arith.addf %314, %332 : vector<16x16xf32>
    %c44 = arith.constant 44 : index
    %335 = memref.load %arg2[%c44] : memref<98xf32, #tpu.memory_space<smem>>
    %c93 = arith.constant 93 : index
    %336 = memref.load %arg2[%c93] : memref<98xf32, #tpu.memory_space<smem>>
    %337 = vector.extract_strided_slice %273 {offsets = [6, 0], sizes = [16, 16], strides = [1, 1]} : vector<22x16xf32> to vector<16x16xf32>
    %338 = vector.broadcast %335 : f32 to vector<16x16xf32>
    %339 = arith.mulf %337, %338 : vector<16x16xf32>
    %340 = vector.extract_strided_slice %274 {offsets = [6, 0], sizes = [16, 16], strides = [1, 1]} : vector<22x16xf32> to vector<16x16xf32>
    %341 = vector.broadcast %336 : f32 to vector<16x16xf32>
    %342 = arith.mulf %340, %341 : vector<16x16xf32>
    %343 = arith.addf %323, %339 : vector<16x16xf32>
    %344 = arith.addf %324, %342 : vector<16x16xf32>
    %345 = vector.extract_strided_slice %122 {offsets = [0, 3], sizes = [22, 16], strides = [1, 1]} : vector<22x22xf32> to vector<22x16xf32>
    %346 = vector.extract_strided_slice %124 {offsets = [0, 3], sizes = [22, 16], strides = [1, 1]} : vector<22x22xf32> to vector<22x16xf32>
    %c3_124 = arith.constant 3 : index
    %347 = memref.load %arg2[%c3_124] : memref<98xf32, #tpu.memory_space<smem>>
    %c52 = arith.constant 52 : index
    %348 = memref.load %arg2[%c52] : memref<98xf32, #tpu.memory_space<smem>>
    %349 = vector.extract_strided_slice %345 {offsets = [0, 0], sizes = [16, 16], strides = [1, 1]} : vector<22x16xf32> to vector<16x16xf32>
    %350 = vector.broadcast %347 : f32 to vector<16x16xf32>
    %351 = arith.mulf %349, %350 : vector<16x16xf32>
    %352 = vector.extract_strided_slice %346 {offsets = [0, 0], sizes = [16, 16], strides = [1, 1]} : vector<22x16xf32> to vector<16x16xf32>
    %353 = vector.broadcast %348 : f32 to vector<16x16xf32>
    %354 = arith.mulf %352, %353 : vector<16x16xf32>
    %355 = arith.addf %343, %351 : vector<16x16xf32>
    %356 = arith.addf %344, %354 : vector<16x16xf32>
    %c10 = arith.constant 10 : index
    %357 = memref.load %arg2[%c10] : memref<98xf32, #tpu.memory_space<smem>>
    %c59 = arith.constant 59 : index
    %358 = memref.load %arg2[%c59] : memref<98xf32, #tpu.memory_space<smem>>
    %359 = vector.extract_strided_slice %345 {offsets = [1, 0], sizes = [16, 16], strides = [1, 1]} : vector<22x16xf32> to vector<16x16xf32>
    %360 = vector.broadcast %357 : f32 to vector<16x16xf32>
    %361 = arith.mulf %359, %360 : vector<16x16xf32>
    %362 = vector.extract_strided_slice %346 {offsets = [1, 0], sizes = [16, 16], strides = [1, 1]} : vector<22x16xf32> to vector<16x16xf32>
    %363 = vector.broadcast %358 : f32 to vector<16x16xf32>
    %364 = arith.mulf %362, %363 : vector<16x16xf32>
    %365 = arith.addf %333, %361 : vector<16x16xf32>
    %366 = arith.addf %334, %364 : vector<16x16xf32>
    %c17_125 = arith.constant 17 : index
    %367 = memref.load %arg2[%c17_125] : memref<98xf32, #tpu.memory_space<smem>>
    %c66 = arith.constant 66 : index
    %368 = memref.load %arg2[%c66] : memref<98xf32, #tpu.memory_space<smem>>
    %369 = vector.extract_strided_slice %345 {offsets = [2, 0], sizes = [16, 16], strides = [1, 1]} : vector<22x16xf32> to vector<16x16xf32>
    %370 = vector.broadcast %367 : f32 to vector<16x16xf32>
    %371 = arith.mulf %369, %370 : vector<16x16xf32>
    %372 = vector.extract_strided_slice %346 {offsets = [2, 0], sizes = [16, 16], strides = [1, 1]} : vector<22x16xf32> to vector<16x16xf32>
    %373 = vector.broadcast %368 : f32 to vector<16x16xf32>
    %374 = arith.mulf %372, %373 : vector<16x16xf32>
    %375 = arith.addf %355, %371 : vector<16x16xf32>
    %376 = arith.addf %356, %374 : vector<16x16xf32>
    %c24 = arith.constant 24 : index
    %377 = memref.load %arg2[%c24] : memref<98xf32, #tpu.memory_space<smem>>
    %c73 = arith.constant 73 : index
    %378 = memref.load %arg2[%c73] : memref<98xf32, #tpu.memory_space<smem>>
    %379 = vector.extract_strided_slice %345 {offsets = [3, 0], sizes = [16, 16], strides = [1, 1]} : vector<22x16xf32> to vector<16x16xf32>
    %380 = vector.broadcast %377 : f32 to vector<16x16xf32>
    %381 = arith.mulf %379, %380 : vector<16x16xf32>
    %382 = vector.extract_strided_slice %346 {offsets = [3, 0], sizes = [16, 16], strides = [1, 1]} : vector<22x16xf32> to vector<16x16xf32>
    %383 = vector.broadcast %378 : f32 to vector<16x16xf32>
    %384 = arith.mulf %382, %383 : vector<16x16xf32>
    %385 = arith.addf %365, %381 : vector<16x16xf32>
    %386 = arith.addf %366, %384 : vector<16x16xf32>
    %c31 = arith.constant 31 : index
    %387 = memref.load %arg2[%c31] : memref<98xf32, #tpu.memory_space<smem>>
    %c80 = arith.constant 80 : index
    %388 = memref.load %arg2[%c80] : memref<98xf32, #tpu.memory_space<smem>>
    %389 = vector.extract_strided_slice %345 {offsets = [4, 0], sizes = [16, 16], strides = [1, 1]} : vector<22x16xf32> to vector<16x16xf32>
    %390 = vector.broadcast %387 : f32 to vector<16x16xf32>
    %391 = arith.mulf %389, %390 : vector<16x16xf32>
    %392 = vector.extract_strided_slice %346 {offsets = [4, 0], sizes = [16, 16], strides = [1, 1]} : vector<22x16xf32> to vector<16x16xf32>
    %393 = vector.broadcast %388 : f32 to vector<16x16xf32>
    %394 = arith.mulf %392, %393 : vector<16x16xf32>
    %395 = arith.addf %375, %391 : vector<16x16xf32>
    %396 = arith.addf %376, %394 : vector<16x16xf32>
    %c38 = arith.constant 38 : index
    %397 = memref.load %arg2[%c38] : memref<98xf32, #tpu.memory_space<smem>>
    %c87 = arith.constant 87 : index
    %398 = memref.load %arg2[%c87] : memref<98xf32, #tpu.memory_space<smem>>
    %399 = vector.extract_strided_slice %345 {offsets = [5, 0], sizes = [16, 16], strides = [1, 1]} : vector<22x16xf32> to vector<16x16xf32>
    %400 = vector.broadcast %397 : f32 to vector<16x16xf32>
    %401 = arith.mulf %399, %400 : vector<16x16xf32>
    %402 = vector.extract_strided_slice %346 {offsets = [5, 0], sizes = [16, 16], strides = [1, 1]} : vector<22x16xf32> to vector<16x16xf32>
    %403 = vector.broadcast %398 : f32 to vector<16x16xf32>
    %404 = arith.mulf %402, %403 : vector<16x16xf32>
    %405 = arith.addf %385, %401 : vector<16x16xf32>
    %406 = arith.addf %386, %404 : vector<16x16xf32>
    %c45 = arith.constant 45 : index
    %407 = memref.load %arg2[%c45] : memref<98xf32, #tpu.memory_space<smem>>
    %c94 = arith.constant 94 : index
    %408 = memref.load %arg2[%c94] : memref<98xf32, #tpu.memory_space<smem>>
    %409 = vector.extract_strided_slice %345 {offsets = [6, 0], sizes = [16, 16], strides = [1, 1]} : vector<22x16xf32> to vector<16x16xf32>
    %410 = vector.broadcast %407 : f32 to vector<16x16xf32>
    %411 = arith.mulf %409, %410 : vector<16x16xf32>
    %412 = vector.extract_strided_slice %346 {offsets = [6, 0], sizes = [16, 16], strides = [1, 1]} : vector<22x16xf32> to vector<16x16xf32>
    %413 = vector.broadcast %408 : f32 to vector<16x16xf32>
    %414 = arith.mulf %412, %413 : vector<16x16xf32>
    %415 = arith.addf %395, %411 : vector<16x16xf32>
    %416 = arith.addf %396, %414 : vector<16x16xf32>
    %417 = vector.extract_strided_slice %122 {offsets = [0, 4], sizes = [22, 16], strides = [1, 1]} : vector<22x22xf32> to vector<22x16xf32>
    %418 = vector.extract_strided_slice %124 {offsets = [0, 4], sizes = [22, 16], strides = [1, 1]} : vector<22x22xf32> to vector<22x16xf32>
    %c4_126 = arith.constant 4 : index
    %419 = memref.load %arg2[%c4_126] : memref<98xf32, #tpu.memory_space<smem>>
    %c53 = arith.constant 53 : index
    %420 = memref.load %arg2[%c53] : memref<98xf32, #tpu.memory_space<smem>>
    %421 = vector.extract_strided_slice %417 {offsets = [0, 0], sizes = [16, 16], strides = [1, 1]} : vector<22x16xf32> to vector<16x16xf32>
    %422 = vector.broadcast %419 : f32 to vector<16x16xf32>
    %423 = arith.mulf %421, %422 : vector<16x16xf32>
    %424 = vector.extract_strided_slice %418 {offsets = [0, 0], sizes = [16, 16], strides = [1, 1]} : vector<22x16xf32> to vector<16x16xf32>
    %425 = vector.broadcast %420 : f32 to vector<16x16xf32>
    %426 = arith.mulf %424, %425 : vector<16x16xf32>
    %427 = arith.addf %415, %423 : vector<16x16xf32>
    %428 = arith.addf %416, %426 : vector<16x16xf32>
    %c11 = arith.constant 11 : index
    %429 = memref.load %arg2[%c11] : memref<98xf32, #tpu.memory_space<smem>>
    %c60 = arith.constant 60 : index
    %430 = memref.load %arg2[%c60] : memref<98xf32, #tpu.memory_space<smem>>
    %431 = vector.extract_strided_slice %417 {offsets = [1, 0], sizes = [16, 16], strides = [1, 1]} : vector<22x16xf32> to vector<16x16xf32>
    %432 = vector.broadcast %429 : f32 to vector<16x16xf32>
    %433 = arith.mulf %431, %432 : vector<16x16xf32>
    %434 = vector.extract_strided_slice %418 {offsets = [1, 0], sizes = [16, 16], strides = [1, 1]} : vector<22x16xf32> to vector<16x16xf32>
    %435 = vector.broadcast %430 : f32 to vector<16x16xf32>
    %436 = arith.mulf %434, %435 : vector<16x16xf32>
    %437 = arith.addf %405, %433 : vector<16x16xf32>
    %438 = arith.addf %406, %436 : vector<16x16xf32>
    %c18 = arith.constant 18 : index
    %439 = memref.load %arg2[%c18] : memref<98xf32, #tpu.memory_space<smem>>
    %c67 = arith.constant 67 : index
    %440 = memref.load %arg2[%c67] : memref<98xf32, #tpu.memory_space<smem>>
    %441 = vector.extract_strided_slice %417 {offsets = [2, 0], sizes = [16, 16], strides = [1, 1]} : vector<22x16xf32> to vector<16x16xf32>
    %442 = vector.broadcast %439 : f32 to vector<16x16xf32>
    %443 = arith.mulf %441, %442 : vector<16x16xf32>
    %444 = vector.extract_strided_slice %418 {offsets = [2, 0], sizes = [16, 16], strides = [1, 1]} : vector<22x16xf32> to vector<16x16xf32>
    %445 = vector.broadcast %440 : f32 to vector<16x16xf32>
    %446 = arith.mulf %444, %445 : vector<16x16xf32>
    %447 = arith.addf %427, %443 : vector<16x16xf32>
    %448 = arith.addf %428, %446 : vector<16x16xf32>
    %c25 = arith.constant 25 : index
    %449 = memref.load %arg2[%c25] : memref<98xf32, #tpu.memory_space<smem>>
    %c74 = arith.constant 74 : index
    %450 = memref.load %arg2[%c74] : memref<98xf32, #tpu.memory_space<smem>>
    %451 = vector.extract_strided_slice %417 {offsets = [3, 0], sizes = [16, 16], strides = [1, 1]} : vector<22x16xf32> to vector<16x16xf32>
    %452 = vector.broadcast %449 : f32 to vector<16x16xf32>
    %453 = arith.mulf %451, %452 : vector<16x16xf32>
    %454 = vector.extract_strided_slice %418 {offsets = [3, 0], sizes = [16, 16], strides = [1, 1]} : vector<22x16xf32> to vector<16x16xf32>
    %455 = vector.broadcast %450 : f32 to vector<16x16xf32>
    %456 = arith.mulf %454, %455 : vector<16x16xf32>
    %457 = arith.addf %437, %453 : vector<16x16xf32>
    %458 = arith.addf %438, %456 : vector<16x16xf32>
    %c32 = arith.constant 32 : index
    %459 = memref.load %arg2[%c32] : memref<98xf32, #tpu.memory_space<smem>>
    %c81 = arith.constant 81 : index
    %460 = memref.load %arg2[%c81] : memref<98xf32, #tpu.memory_space<smem>>
    %461 = vector.extract_strided_slice %417 {offsets = [4, 0], sizes = [16, 16], strides = [1, 1]} : vector<22x16xf32> to vector<16x16xf32>
    %462 = vector.broadcast %459 : f32 to vector<16x16xf32>
    %463 = arith.mulf %461, %462 : vector<16x16xf32>
    %464 = vector.extract_strided_slice %418 {offsets = [4, 0], sizes = [16, 16], strides = [1, 1]} : vector<22x16xf32> to vector<16x16xf32>
    %465 = vector.broadcast %460 : f32 to vector<16x16xf32>
    %466 = arith.mulf %464, %465 : vector<16x16xf32>
    %467 = arith.addf %447, %463 : vector<16x16xf32>
    %468 = arith.addf %448, %466 : vector<16x16xf32>
    %c39 = arith.constant 39 : index
    %469 = memref.load %arg2[%c39] : memref<98xf32, #tpu.memory_space<smem>>
    %c88 = arith.constant 88 : index
    %470 = memref.load %arg2[%c88] : memref<98xf32, #tpu.memory_space<smem>>
    %471 = vector.extract_strided_slice %417 {offsets = [5, 0], sizes = [16, 16], strides = [1, 1]} : vector<22x16xf32> to vector<16x16xf32>
    %472 = vector.broadcast %469 : f32 to vector<16x16xf32>
    %473 = arith.mulf %471, %472 : vector<16x16xf32>
    %474 = vector.extract_strided_slice %418 {offsets = [5, 0], sizes = [16, 16], strides = [1, 1]} : vector<22x16xf32> to vector<16x16xf32>
    %475 = vector.broadcast %470 : f32 to vector<16x16xf32>
    %476 = arith.mulf %474, %475 : vector<16x16xf32>
    %477 = arith.addf %457, %473 : vector<16x16xf32>
    %478 = arith.addf %458, %476 : vector<16x16xf32>
    %c46 = arith.constant 46 : index
    %479 = memref.load %arg2[%c46] : memref<98xf32, #tpu.memory_space<smem>>
    %c95 = arith.constant 95 : index
    %480 = memref.load %arg2[%c95] : memref<98xf32, #tpu.memory_space<smem>>
    %481 = vector.extract_strided_slice %417 {offsets = [6, 0], sizes = [16, 16], strides = [1, 1]} : vector<22x16xf32> to vector<16x16xf32>
    %482 = vector.broadcast %479 : f32 to vector<16x16xf32>
    %483 = arith.mulf %481, %482 : vector<16x16xf32>
    %484 = vector.extract_strided_slice %418 {offsets = [6, 0], sizes = [16, 16], strides = [1, 1]} : vector<22x16xf32> to vector<16x16xf32>
    %485 = vector.broadcast %480 : f32 to vector<16x16xf32>
    %486 = arith.mulf %484, %485 : vector<16x16xf32>
    %487 = arith.addf %467, %483 : vector<16x16xf32>
    %488 = arith.addf %468, %486 : vector<16x16xf32>
    %489 = vector.extract_strided_slice %122 {offsets = [0, 5], sizes = [22, 16], strides = [1, 1]} : vector<22x22xf32> to vector<22x16xf32>
    %490 = vector.extract_strided_slice %124 {offsets = [0, 5], sizes = [22, 16], strides = [1, 1]} : vector<22x22xf32> to vector<22x16xf32>
    %c5_127 = arith.constant 5 : index
    %491 = memref.load %arg2[%c5_127] : memref<98xf32, #tpu.memory_space<smem>>
    %c54 = arith.constant 54 : index
    %492 = memref.load %arg2[%c54] : memref<98xf32, #tpu.memory_space<smem>>
    %493 = vector.extract_strided_slice %489 {offsets = [0, 0], sizes = [16, 16], strides = [1, 1]} : vector<22x16xf32> to vector<16x16xf32>
    %494 = vector.broadcast %491 : f32 to vector<16x16xf32>
    %495 = arith.mulf %493, %494 : vector<16x16xf32>
    %496 = vector.extract_strided_slice %490 {offsets = [0, 0], sizes = [16, 16], strides = [1, 1]} : vector<22x16xf32> to vector<16x16xf32>
    %497 = vector.broadcast %492 : f32 to vector<16x16xf32>
    %498 = arith.mulf %496, %497 : vector<16x16xf32>
    %499 = arith.addf %487, %495 : vector<16x16xf32>
    %500 = arith.addf %488, %498 : vector<16x16xf32>
    %c12 = arith.constant 12 : index
    %501 = memref.load %arg2[%c12] : memref<98xf32, #tpu.memory_space<smem>>
    %c61 = arith.constant 61 : index
    %502 = memref.load %arg2[%c61] : memref<98xf32, #tpu.memory_space<smem>>
    %503 = vector.extract_strided_slice %489 {offsets = [1, 0], sizes = [16, 16], strides = [1, 1]} : vector<22x16xf32> to vector<16x16xf32>
    %504 = vector.broadcast %501 : f32 to vector<16x16xf32>
    %505 = arith.mulf %503, %504 : vector<16x16xf32>
    %506 = vector.extract_strided_slice %490 {offsets = [1, 0], sizes = [16, 16], strides = [1, 1]} : vector<22x16xf32> to vector<16x16xf32>
    %507 = vector.broadcast %502 : f32 to vector<16x16xf32>
    %508 = arith.mulf %506, %507 : vector<16x16xf32>
    %509 = arith.addf %477, %505 : vector<16x16xf32>
    %510 = arith.addf %478, %508 : vector<16x16xf32>
    %c19_128 = arith.constant 19 : index
    %511 = memref.load %arg2[%c19_128] : memref<98xf32, #tpu.memory_space<smem>>
    %c68 = arith.constant 68 : index
    %512 = memref.load %arg2[%c68] : memref<98xf32, #tpu.memory_space<smem>>
    %513 = vector.extract_strided_slice %489 {offsets = [2, 0], sizes = [16, 16], strides = [1, 1]} : vector<22x16xf32> to vector<16x16xf32>
    %514 = vector.broadcast %511 : f32 to vector<16x16xf32>
    %515 = arith.mulf %513, %514 : vector<16x16xf32>
    %516 = vector.extract_strided_slice %490 {offsets = [2, 0], sizes = [16, 16], strides = [1, 1]} : vector<22x16xf32> to vector<16x16xf32>
    %517 = vector.broadcast %512 : f32 to vector<16x16xf32>
    %518 = arith.mulf %516, %517 : vector<16x16xf32>
    %519 = arith.addf %499, %515 : vector<16x16xf32>
    %520 = arith.addf %500, %518 : vector<16x16xf32>
    %c26 = arith.constant 26 : index
    %521 = memref.load %arg2[%c26] : memref<98xf32, #tpu.memory_space<smem>>
    %c75 = arith.constant 75 : index
    %522 = memref.load %arg2[%c75] : memref<98xf32, #tpu.memory_space<smem>>
    %523 = vector.extract_strided_slice %489 {offsets = [3, 0], sizes = [16, 16], strides = [1, 1]} : vector<22x16xf32> to vector<16x16xf32>
    %524 = vector.broadcast %521 : f32 to vector<16x16xf32>
    %525 = arith.mulf %523, %524 : vector<16x16xf32>
    %526 = vector.extract_strided_slice %490 {offsets = [3, 0], sizes = [16, 16], strides = [1, 1]} : vector<22x16xf32> to vector<16x16xf32>
    %527 = vector.broadcast %522 : f32 to vector<16x16xf32>
    %528 = arith.mulf %526, %527 : vector<16x16xf32>
    %529 = arith.addf %509, %525 : vector<16x16xf32>
    %530 = arith.addf %510, %528 : vector<16x16xf32>
    %c33 = arith.constant 33 : index
    %531 = memref.load %arg2[%c33] : memref<98xf32, #tpu.memory_space<smem>>
    %c82 = arith.constant 82 : index
    %532 = memref.load %arg2[%c82] : memref<98xf32, #tpu.memory_space<smem>>
    %533 = vector.extract_strided_slice %489 {offsets = [4, 0], sizes = [16, 16], strides = [1, 1]} : vector<22x16xf32> to vector<16x16xf32>
    %534 = vector.broadcast %531 : f32 to vector<16x16xf32>
    %535 = arith.mulf %533, %534 : vector<16x16xf32>
    %536 = vector.extract_strided_slice %490 {offsets = [4, 0], sizes = [16, 16], strides = [1, 1]} : vector<22x16xf32> to vector<16x16xf32>
    %537 = vector.broadcast %532 : f32 to vector<16x16xf32>
    %538 = arith.mulf %536, %537 : vector<16x16xf32>
    %539 = arith.addf %519, %535 : vector<16x16xf32>
    %540 = arith.addf %520, %538 : vector<16x16xf32>
    %c40 = arith.constant 40 : index
    %541 = memref.load %arg2[%c40] : memref<98xf32, #tpu.memory_space<smem>>
    %c89 = arith.constant 89 : index
    %542 = memref.load %arg2[%c89] : memref<98xf32, #tpu.memory_space<smem>>
    %543 = vector.extract_strided_slice %489 {offsets = [5, 0], sizes = [16, 16], strides = [1, 1]} : vector<22x16xf32> to vector<16x16xf32>
    %544 = vector.broadcast %541 : f32 to vector<16x16xf32>
    %545 = arith.mulf %543, %544 : vector<16x16xf32>
    %546 = vector.extract_strided_slice %490 {offsets = [5, 0], sizes = [16, 16], strides = [1, 1]} : vector<22x16xf32> to vector<16x16xf32>
    %547 = vector.broadcast %542 : f32 to vector<16x16xf32>
    %548 = arith.mulf %546, %547 : vector<16x16xf32>
    %549 = arith.addf %529, %545 : vector<16x16xf32>
    %550 = arith.addf %530, %548 : vector<16x16xf32>
    %c47 = arith.constant 47 : index
    %551 = memref.load %arg2[%c47] : memref<98xf32, #tpu.memory_space<smem>>
    %c96 = arith.constant 96 : index
    %552 = memref.load %arg2[%c96] : memref<98xf32, #tpu.memory_space<smem>>
    %553 = vector.extract_strided_slice %489 {offsets = [6, 0], sizes = [16, 16], strides = [1, 1]} : vector<22x16xf32> to vector<16x16xf32>
    %554 = vector.broadcast %551 : f32 to vector<16x16xf32>
    %555 = arith.mulf %553, %554 : vector<16x16xf32>
    %556 = vector.extract_strided_slice %490 {offsets = [6, 0], sizes = [16, 16], strides = [1, 1]} : vector<22x16xf32> to vector<16x16xf32>
    %557 = vector.broadcast %552 : f32 to vector<16x16xf32>
    %558 = arith.mulf %556, %557 : vector<16x16xf32>
    %559 = arith.addf %539, %555 : vector<16x16xf32>
    %560 = arith.addf %540, %558 : vector<16x16xf32>
    %561 = vector.extract_strided_slice %122 {offsets = [0, 6], sizes = [22, 16], strides = [1, 1]} : vector<22x22xf32> to vector<22x16xf32>
    %562 = vector.extract_strided_slice %124 {offsets = [0, 6], sizes = [22, 16], strides = [1, 1]} : vector<22x22xf32> to vector<22x16xf32>
    %c6_129 = arith.constant 6 : index
    %563 = memref.load %arg2[%c6_129] : memref<98xf32, #tpu.memory_space<smem>>
    %c55 = arith.constant 55 : index
    %564 = memref.load %arg2[%c55] : memref<98xf32, #tpu.memory_space<smem>>
    %565 = vector.extract_strided_slice %561 {offsets = [0, 0], sizes = [16, 16], strides = [1, 1]} : vector<22x16xf32> to vector<16x16xf32>
    %566 = vector.broadcast %563 : f32 to vector<16x16xf32>
    %567 = arith.mulf %565, %566 : vector<16x16xf32>
    %568 = vector.extract_strided_slice %562 {offsets = [0, 0], sizes = [16, 16], strides = [1, 1]} : vector<22x16xf32> to vector<16x16xf32>
    %569 = vector.broadcast %564 : f32 to vector<16x16xf32>
    %570 = arith.mulf %568, %569 : vector<16x16xf32>
    %571 = arith.addf %559, %567 : vector<16x16xf32>
    %572 = arith.addf %560, %570 : vector<16x16xf32>
    %c13 = arith.constant 13 : index
    %573 = memref.load %arg2[%c13] : memref<98xf32, #tpu.memory_space<smem>>
    %c62 = arith.constant 62 : index
    %574 = memref.load %arg2[%c62] : memref<98xf32, #tpu.memory_space<smem>>
    %575 = vector.extract_strided_slice %561 {offsets = [1, 0], sizes = [16, 16], strides = [1, 1]} : vector<22x16xf32> to vector<16x16xf32>
    %576 = vector.broadcast %573 : f32 to vector<16x16xf32>
    %577 = arith.mulf %575, %576 : vector<16x16xf32>
    %578 = vector.extract_strided_slice %562 {offsets = [1, 0], sizes = [16, 16], strides = [1, 1]} : vector<22x16xf32> to vector<16x16xf32>
    %579 = vector.broadcast %574 : f32 to vector<16x16xf32>
    %580 = arith.mulf %578, %579 : vector<16x16xf32>
    %581 = arith.addf %549, %577 : vector<16x16xf32>
    %582 = arith.addf %550, %580 : vector<16x16xf32>
    %c20_130 = arith.constant 20 : index
    %583 = memref.load %arg2[%c20_130] : memref<98xf32, #tpu.memory_space<smem>>
    %c69 = arith.constant 69 : index
    %584 = memref.load %arg2[%c69] : memref<98xf32, #tpu.memory_space<smem>>
    %585 = vector.extract_strided_slice %561 {offsets = [2, 0], sizes = [16, 16], strides = [1, 1]} : vector<22x16xf32> to vector<16x16xf32>
    %586 = vector.broadcast %583 : f32 to vector<16x16xf32>
    %587 = arith.mulf %585, %586 : vector<16x16xf32>
    %588 = vector.extract_strided_slice %562 {offsets = [2, 0], sizes = [16, 16], strides = [1, 1]} : vector<22x16xf32> to vector<16x16xf32>
    %589 = vector.broadcast %584 : f32 to vector<16x16xf32>
    %590 = arith.mulf %588, %589 : vector<16x16xf32>
    %591 = arith.addf %571, %587 : vector<16x16xf32>
    %592 = arith.addf %572, %590 : vector<16x16xf32>
    %c27 = arith.constant 27 : index
    %593 = memref.load %arg2[%c27] : memref<98xf32, #tpu.memory_space<smem>>
    %c76 = arith.constant 76 : index
    %594 = memref.load %arg2[%c76] : memref<98xf32, #tpu.memory_space<smem>>
    %595 = vector.extract_strided_slice %561 {offsets = [3, 0], sizes = [16, 16], strides = [1, 1]} : vector<22x16xf32> to vector<16x16xf32>
    %596 = vector.broadcast %593 : f32 to vector<16x16xf32>
    %597 = arith.mulf %595, %596 : vector<16x16xf32>
    %598 = vector.extract_strided_slice %562 {offsets = [3, 0], sizes = [16, 16], strides = [1, 1]} : vector<22x16xf32> to vector<16x16xf32>
    %599 = vector.broadcast %594 : f32 to vector<16x16xf32>
    %600 = arith.mulf %598, %599 : vector<16x16xf32>
    %601 = arith.addf %581, %597 : vector<16x16xf32>
    %602 = arith.addf %582, %600 : vector<16x16xf32>
    %c34 = arith.constant 34 : index
    %603 = memref.load %arg2[%c34] : memref<98xf32, #tpu.memory_space<smem>>
    %c83 = arith.constant 83 : index
    %604 = memref.load %arg2[%c83] : memref<98xf32, #tpu.memory_space<smem>>
    %605 = vector.extract_strided_slice %561 {offsets = [4, 0], sizes = [16, 16], strides = [1, 1]} : vector<22x16xf32> to vector<16x16xf32>
    %606 = vector.broadcast %603 : f32 to vector<16x16xf32>
    %607 = arith.mulf %605, %606 : vector<16x16xf32>
    %608 = vector.extract_strided_slice %562 {offsets = [4, 0], sizes = [16, 16], strides = [1, 1]} : vector<22x16xf32> to vector<16x16xf32>
    %609 = vector.broadcast %604 : f32 to vector<16x16xf32>
    %610 = arith.mulf %608, %609 : vector<16x16xf32>
    %611 = arith.addf %591, %607 : vector<16x16xf32>
    %612 = arith.addf %592, %610 : vector<16x16xf32>
    %c41 = arith.constant 41 : index
    %613 = memref.load %arg2[%c41] : memref<98xf32, #tpu.memory_space<smem>>
    %c90 = arith.constant 90 : index
    %614 = memref.load %arg2[%c90] : memref<98xf32, #tpu.memory_space<smem>>
    %615 = vector.extract_strided_slice %561 {offsets = [5, 0], sizes = [16, 16], strides = [1, 1]} : vector<22x16xf32> to vector<16x16xf32>
    %616 = vector.broadcast %613 : f32 to vector<16x16xf32>
    %617 = arith.mulf %615, %616 : vector<16x16xf32>
    %618 = vector.extract_strided_slice %562 {offsets = [5, 0], sizes = [16, 16], strides = [1, 1]} : vector<22x16xf32> to vector<16x16xf32>
    %619 = vector.broadcast %614 : f32 to vector<16x16xf32>
    %620 = arith.mulf %618, %619 : vector<16x16xf32>
    %621 = arith.addf %601, %617 : vector<16x16xf32>
    %622 = arith.addf %602, %620 : vector<16x16xf32>
    %c48 = arith.constant 48 : index
    %623 = memref.load %arg2[%c48] : memref<98xf32, #tpu.memory_space<smem>>
    %c97 = arith.constant 97 : index
    %624 = memref.load %arg2[%c97] : memref<98xf32, #tpu.memory_space<smem>>
    %625 = vector.extract_strided_slice %561 {offsets = [6, 0], sizes = [16, 16], strides = [1, 1]} : vector<22x16xf32> to vector<16x16xf32>
    %626 = vector.broadcast %623 : f32 to vector<16x16xf32>
    %627 = arith.mulf %625, %626 : vector<16x16xf32>
    %628 = vector.extract_strided_slice %562 {offsets = [6, 0], sizes = [16, 16], strides = [1, 1]} : vector<22x16xf32> to vector<16x16xf32>
    %629 = vector.broadcast %624 : f32 to vector<16x16xf32>
    %630 = arith.mulf %628, %629 : vector<16x16xf32>
    %631 = arith.addf %611, %627 : vector<16x16xf32>
    %632 = arith.addf %612, %630 : vector<16x16xf32>
    %633 = arith.addf %631, %621 : vector<16x16xf32>
    %634 = arith.addf %632, %622 : vector<16x16xf32>
    %635 = arith.addf %633, %634 : vector<16x16xf32>
    %636 = vector.broadcast %0 : f32 to vector<16x16xf32>
    %637 = arith.addf %635, %636 : vector<16x16xf32>
    %c0_131 = arith.constant 0 : index
    %c0_132 = arith.constant 0 : index
    %c0_133 = arith.constant 0 : index
    %c0_134 = arith.constant 0 : index
    %638 = vector.load %arg4[%c0_131, %c0_132, %c0_133, %c0_134] : memref<2x1x16x16xf32, #tpu.memory_space<vmem>>, vector<1x1x16x16xf32>
    %639 = vector.shape_cast %638 : vector<1x1x16x16xf32> to vector<16x16xf32>
    %640 = vector.shape_cast %637 : vector<16x16xf32> to vector<1x1x16x16xf32>
    tpu.vector_store %arg4[%c0_131, %c0_132, %c0_133, %c0_134], %640 {strides = array<i32>} : memref<2x1x16x16xf32, #tpu.memory_space<vmem>>, vector<1x1x16x16xf32>,
    %c1_135 = arith.constant 1 : index
    %c0_136 = arith.constant 0 : index
    %c0_137 = arith.constant 0 : index
    %c0_138 = arith.constant 0 : index
    %641 = vector.load %arg1[%c1_135, %c0_136, %c0_137, %c0_138] : memref<2x16x16x16xf32, #tpu.memory_space<vmem>>, vector<1x16x16x16xf32>
    %642 = vector.shape_cast %641 : vector<1x16x16x16xf32> to vector<16x16x16xf32>
    %cst_139 = arith.constant dense<0.000000e+00> : vector<16x16xf32>
    %643 = vector.multi_reduction <add>, %642, %cst_139 [0] : vector<16x16x16xf32> to vector<16x16xf32>
    %cst_140 = arith.constant 6.250000e-02 : f32
    %644 = vector.broadcast %cst_140 : f32 to vector<16x16xf32>
    %645 = arith.mulf %643, %644 : vector<16x16xf32>
    %cst_141 = arith.constant dense<0xFF800000> : vector<16x16xf32>
    %646 = vector.multi_reduction <maximumf>, %642, %cst_141 [0] : vector<16x16x16xf32> to vector<16x16xf32>
    %c0_142 = arith.constant 0 : index
    %c3_143 = arith.constant 3 : index
    %c3_144 = arith.constant 3 : index
    %647 = vector.load %arg5[%c0_142, %c3_143, %c3_144] : memref<2x22x22xf32, #tpu.memory_space<vmem>>, vector<1x16x16xf32>
    %648 = vector.shape_cast %647 : vector<1x16x16xf32> to vector<16x16xf32>
    %649 = vector.shape_cast %645 : vector<16x16xf32> to vector<1x16x16xf32>
    tpu.vector_store %arg5[%c0_142, %c3_143, %c3_144], %649 {strides = array<i32>} : memref<2x22x22xf32, #tpu.memory_space<vmem>>, vector<1x16x16xf32>,
    %650 = vector.extract_strided_slice %645 {offsets = [3, 0], sizes = [1, 16], strides = [1, 1]} : vector<16x16xf32> to vector<1x16xf32>
    %c0_145 = arith.constant 0 : index
    %c0_146 = arith.constant 0 : index
    %c3_147 = arith.constant 3 : index
    %651 = vector.load %arg5[%c0_145, %c0_146, %c3_147] : memref<2x22x22xf32, #tpu.memory_space<vmem>>, vector<1x1x16xf32>
    %652 = vector.shape_cast %651 : vector<1x1x16xf32> to vector<1x16xf32>
    %653 = vector.shape_cast %650 : vector<1x16xf32> to vector<1x1x16xf32>
    tpu.vector_store %arg5[%c0_145, %c0_146, %c3_147], %653 {strides = array<i32>} : memref<2x22x22xf32, #tpu.memory_space<vmem>>, vector<1x1x16xf32>,
    %654 = vector.extract_strided_slice %645 {offsets = [14, 0], sizes = [1, 16], strides = [1, 1]} : vector<16x16xf32> to vector<1x16xf32>
    %c0_148 = arith.constant 0 : index
    %c19_149 = arith.constant 19 : index
    %c3_150 = arith.constant 3 : index
    %655 = vector.load %arg5[%c0_148, %c19_149, %c3_150] : memref<2x22x22xf32, #tpu.memory_space<vmem>>, vector<1x1x16xf32>
    %656 = vector.shape_cast %655 : vector<1x1x16xf32> to vector<1x16xf32>
    %657 = vector.shape_cast %654 : vector<1x16xf32> to vector<1x1x16xf32>
    tpu.vector_store %arg5[%c0_148, %c19_149, %c3_150], %657 {strides = array<i32>} : memref<2x22x22xf32, #tpu.memory_space<vmem>>, vector<1x1x16xf32>,
    %658 = vector.extract_strided_slice %645 {offsets = [2, 0], sizes = [1, 16], strides = [1, 1]} : vector<16x16xf32> to vector<1x16xf32>
    %c0_151 = arith.constant 0 : index
    %c1_152 = arith.constant 1 : index
    %c3_153 = arith.constant 3 : index
    %659 = vector.load %arg5[%c0_151, %c1_152, %c3_153] : memref<2x22x22xf32, #tpu.memory_space<vmem>>, vector<1x1x16xf32>
    %660 = vector.shape_cast %659 : vector<1x1x16xf32> to vector<1x16xf32>
    %661 = vector.shape_cast %658 : vector<1x16xf32> to vector<1x1x16xf32>
    tpu.vector_store %arg5[%c0_151, %c1_152, %c3_153], %661 {strides = array<i32>} : memref<2x22x22xf32, #tpu.memory_space<vmem>>, vector<1x1x16xf32>,
    %662 = vector.extract_strided_slice %645 {offsets = [13, 0], sizes = [1, 16], strides = [1, 1]} : vector<16x16xf32> to vector<1x16xf32>
    %c0_154 = arith.constant 0 : index
    %c20_155 = arith.constant 20 : index
    %c3_156 = arith.constant 3 : index
    %663 = vector.load %arg5[%c0_154, %c20_155, %c3_156] : memref<2x22x22xf32, #tpu.memory_space<vmem>>, vector<1x1x16xf32>
    %664 = vector.shape_cast %663 : vector<1x1x16xf32> to vector<1x16xf32>
    %665 = vector.shape_cast %662 : vector<1x16xf32> to vector<1x1x16xf32>
    tpu.vector_store %arg5[%c0_154, %c20_155, %c3_156], %665 {strides = array<i32>} : memref<2x22x22xf32, #tpu.memory_space<vmem>>, vector<1x1x16xf32>,
    %666 = vector.extract_strided_slice %645 {offsets = [1, 0], sizes = [1, 16], strides = [1, 1]} : vector<16x16xf32> to vector<1x16xf32>
    %c0_157 = arith.constant 0 : index
    %c2_158 = arith.constant 2 : index
    %c3_159 = arith.constant 3 : index
    %667 = vector.load %arg5[%c0_157, %c2_158, %c3_159] : memref<2x22x22xf32, #tpu.memory_space<vmem>>, vector<1x1x16xf32>
    %668 = vector.shape_cast %667 : vector<1x1x16xf32> to vector<1x16xf32>
    %669 = vector.shape_cast %666 : vector<1x16xf32> to vector<1x1x16xf32>
    tpu.vector_store %arg5[%c0_157, %c2_158, %c3_159], %669 {strides = array<i32>} : memref<2x22x22xf32, #tpu.memory_space<vmem>>, vector<1x1x16xf32>,
    %670 = vector.extract_strided_slice %645 {offsets = [12, 0], sizes = [1, 16], strides = [1, 1]} : vector<16x16xf32> to vector<1x16xf32>
    %c0_160 = arith.constant 0 : index
    %c21_161 = arith.constant 21 : index
    %c3_162 = arith.constant 3 : index
    %671 = vector.load %arg5[%c0_160, %c21_161, %c3_162] : memref<2x22x22xf32, #tpu.memory_space<vmem>>, vector<1x1x16xf32>
    %672 = vector.shape_cast %671 : vector<1x1x16xf32> to vector<1x16xf32>
    %673 = vector.shape_cast %670 : vector<1x16xf32> to vector<1x1x16xf32>
    tpu.vector_store %arg5[%c0_160, %c21_161, %c3_162], %673 {strides = array<i32>} : memref<2x22x22xf32, #tpu.memory_space<vmem>>, vector<1x1x16xf32>,
    %c0_163 = arith.constant 0 : index
    %c0_164 = arith.constant 0 : index
    %c6_165 = arith.constant 6 : index
    %674 = vector.load %arg5[%c0_163, %c0_164, %c6_165] : memref<2x22x22xf32, #tpu.memory_space<vmem>>, vector<1x22x1xf32>
    %675 = vector.shape_cast %674 : vector<1x22x1xf32> to vector<22x1xf32>
    %c0_166 = arith.constant 0 : index
    %c0_167 = arith.constant 0 : index
    %c0_168 = arith.constant 0 : index
    %676 = vector.load %arg5[%c0_166, %c0_167, %c0_168] : memref<2x22x22xf32, #tpu.memory_space<vmem>>, vector<1x22x1xf32>
    %677 = vector.shape_cast %676 : vector<1x22x1xf32> to vector<22x1xf32>
    %678 = vector.shape_cast %675 : vector<22x1xf32> to vector<1x22x1xf32>
    tpu.vector_store %arg5[%c0_166, %c0_167, %c0_168], %678 {strides = array<i32>} : memref<2x22x22xf32, #tpu.memory_space<vmem>>, vector<1x22x1xf32>,
    %c0_169 = arith.constant 0 : index
    %c0_170 = arith.constant 0 : index
    %c17_171 = arith.constant 17 : index
    %679 = vector.load %arg5[%c0_169, %c0_170, %c17_171] : memref<2x22x22xf32, #tpu.memory_space<vmem>>, vector<1x22x1xf32>
    %680 = vector.shape_cast %679 : vector<1x22x1xf32> to vector<22x1xf32>
    %c0_172 = arith.constant 0 : index
    %c0_173 = arith.constant 0 : index
    %c19_174 = arith.constant 19 : index
    %681 = vector.load %arg5[%c0_172, %c0_173, %c19_174] : memref<2x22x22xf32, #tpu.memory_space<vmem>>, vector<1x22x1xf32>
    %682 = vector.shape_cast %681 : vector<1x22x1xf32> to vector<22x1xf32>
    %683 = vector.shape_cast %680 : vector<22x1xf32> to vector<1x22x1xf32>
    tpu.vector_store %arg5[%c0_172, %c0_173, %c19_174], %683 {strides = array<i32>} : memref<2x22x22xf32, #tpu.memory_space<vmem>>, vector<1x22x1xf32>,
    %c0_175 = arith.constant 0 : index
    %c0_176 = arith.constant 0 : index
    %c5_177 = arith.constant 5 : index
    %684 = vector.load %arg5[%c0_175, %c0_176, %c5_177] : memref<2x22x22xf32, #tpu.memory_space<vmem>>, vector<1x22x1xf32>
    %685 = vector.shape_cast %684 : vector<1x22x1xf32> to vector<22x1xf32>
    %c0_178 = arith.constant 0 : index
    %c0_179 = arith.constant 0 : index
    %c1_180 = arith.constant 1 : index
    %686 = vector.load %arg5[%c0_178, %c0_179, %c1_180] : memref<2x22x22xf32, #tpu.memory_space<vmem>>, vector<1x22x1xf32>
    %687 = vector.shape_cast %686 : vector<1x22x1xf32> to vector<22x1xf32>
    %688 = vector.shape_cast %685 : vector<22x1xf32> to vector<1x22x1xf32>
    tpu.vector_store %arg5[%c0_178, %c0_179, %c1_180], %688 {strides = array<i32>} : memref<2x22x22xf32, #tpu.memory_space<vmem>>, vector<1x22x1xf32>,
    %c0_181 = arith.constant 0 : index
    %c0_182 = arith.constant 0 : index
    %c16_183 = arith.constant 16 : index
    %689 = vector.load %arg5[%c0_181, %c0_182, %c16_183] : memref<2x22x22xf32, #tpu.memory_space<vmem>>, vector<1x22x1xf32>
    %690 = vector.shape_cast %689 : vector<1x22x1xf32> to vector<22x1xf32>
    %c0_184 = arith.constant 0 : index
    %c0_185 = arith.constant 0 : index
    %c20_186 = arith.constant 20 : index
    %691 = vector.load %arg5[%c0_184, %c0_185, %c20_186] : memref<2x22x22xf32, #tpu.memory_space<vmem>>, vector<1x22x1xf32>
    %692 = vector.shape_cast %691 : vector<1x22x1xf32> to vector<22x1xf32>
    %693 = vector.shape_cast %690 : vector<22x1xf32> to vector<1x22x1xf32>
    tpu.vector_store %arg5[%c0_184, %c0_185, %c20_186], %693 {strides = array<i32>} : memref<2x22x22xf32, #tpu.memory_space<vmem>>, vector<1x22x1xf32>,
    %c0_187 = arith.constant 0 : index
    %c0_188 = arith.constant 0 : index
    %c4_189 = arith.constant 4 : index
    %694 = vector.load %arg5[%c0_187, %c0_188, %c4_189] : memref<2x22x22xf32, #tpu.memory_space<vmem>>, vector<1x22x1xf32>
    %695 = vector.shape_cast %694 : vector<1x22x1xf32> to vector<22x1xf32>
    %c0_190 = arith.constant 0 : index
    %c0_191 = arith.constant 0 : index
    %c2_192 = arith.constant 2 : index
    %696 = vector.load %arg5[%c0_190, %c0_191, %c2_192] : memref<2x22x22xf32, #tpu.memory_space<vmem>>, vector<1x22x1xf32>
    %697 = vector.shape_cast %696 : vector<1x22x1xf32> to vector<22x1xf32>
    %698 = vector.shape_cast %695 : vector<22x1xf32> to vector<1x22x1xf32>
    tpu.vector_store %arg5[%c0_190, %c0_191, %c2_192], %698 {strides = array<i32>} : memref<2x22x22xf32, #tpu.memory_space<vmem>>, vector<1x22x1xf32>,
    %c0_193 = arith.constant 0 : index
    %c0_194 = arith.constant 0 : index
    %c15_195 = arith.constant 15 : index
    %699 = vector.load %arg5[%c0_193, %c0_194, %c15_195] : memref<2x22x22xf32, #tpu.memory_space<vmem>>, vector<1x22x1xf32>
    %700 = vector.shape_cast %699 : vector<1x22x1xf32> to vector<22x1xf32>
    %c0_196 = arith.constant 0 : index
    %c0_197 = arith.constant 0 : index
    %c21_198 = arith.constant 21 : index
    %701 = vector.load %arg5[%c0_196, %c0_197, %c21_198] : memref<2x22x22xf32, #tpu.memory_space<vmem>>, vector<1x22x1xf32>
    %702 = vector.shape_cast %701 : vector<1x22x1xf32> to vector<22x1xf32>
    %703 = vector.shape_cast %700 : vector<22x1xf32> to vector<1x22x1xf32>
    tpu.vector_store %arg5[%c0_196, %c0_197, %c21_198], %703 {strides = array<i32>} : memref<2x22x22xf32, #tpu.memory_space<vmem>>, vector<1x22x1xf32>,
    %c1_199 = arith.constant 1 : index
    %c3_200 = arith.constant 3 : index
    %c3_201 = arith.constant 3 : index
    %704 = vector.load %arg5[%c1_199, %c3_200, %c3_201] : memref<2x22x22xf32, #tpu.memory_space<vmem>>, vector<1x16x16xf32>
    %705 = vector.shape_cast %704 : vector<1x16x16xf32> to vector<16x16xf32>
    %706 = vector.shape_cast %646 : vector<16x16xf32> to vector<1x16x16xf32>
    tpu.vector_store %arg5[%c1_199, %c3_200, %c3_201], %706 {strides = array<i32>} : memref<2x22x22xf32, #tpu.memory_space<vmem>>, vector<1x16x16xf32>,
    %707 = vector.extract_strided_slice %646 {offsets = [3, 0], sizes = [1, 16], strides = [1, 1]} : vector<16x16xf32> to vector<1x16xf32>
    %c1_202 = arith.constant 1 : index
    %c0_203 = arith.constant 0 : index
    %c3_204 = arith.constant 3 : index
    %708 = vector.load %arg5[%c1_202, %c0_203, %c3_204] : memref<2x22x22xf32, #tpu.memory_space<vmem>>, vector<1x1x16xf32>
    %709 = vector.shape_cast %708 : vector<1x1x16xf32> to vector<1x16xf32>
    %710 = vector.shape_cast %707 : vector<1x16xf32> to vector<1x1x16xf32>
    tpu.vector_store %arg5[%c1_202, %c0_203, %c3_204], %710 {strides = array<i32>} : memref<2x22x22xf32, #tpu.memory_space<vmem>>, vector<1x1x16xf32>,
    %711 = vector.extract_strided_slice %646 {offsets = [14, 0], sizes = [1, 16], strides = [1, 1]} : vector<16x16xf32> to vector<1x16xf32>
    %c1_205 = arith.constant 1 : index
    %c19_206 = arith.constant 19 : index
    %c3_207 = arith.constant 3 : index
    %712 = vector.load %arg5[%c1_205, %c19_206, %c3_207] : memref<2x22x22xf32, #tpu.memory_space<vmem>>, vector<1x1x16xf32>
    %713 = vector.shape_cast %712 : vector<1x1x16xf32> to vector<1x16xf32>
    %714 = vector.shape_cast %711 : vector<1x16xf32> to vector<1x1x16xf32>
    tpu.vector_store %arg5[%c1_205, %c19_206, %c3_207], %714 {strides = array<i32>} : memref<2x22x22xf32, #tpu.memory_space<vmem>>, vector<1x1x16xf32>,
    %715 = vector.extract_strided_slice %646 {offsets = [2, 0], sizes = [1, 16], strides = [1, 1]} : vector<16x16xf32> to vector<1x16xf32>
    %c1_208 = arith.constant 1 : index
    %c1_209 = arith.constant 1 : index
    %c3_210 = arith.constant 3 : index
    %716 = vector.load %arg5[%c1_208, %c1_209, %c3_210] : memref<2x22x22xf32, #tpu.memory_space<vmem>>, vector<1x1x16xf32>
    %717 = vector.shape_cast %716 : vector<1x1x16xf32> to vector<1x16xf32>
    %718 = vector.shape_cast %715 : vector<1x16xf32> to vector<1x1x16xf32>
    tpu.vector_store %arg5[%c1_208, %c1_209, %c3_210], %718 {strides = array<i32>} : memref<2x22x22xf32, #tpu.memory_space<vmem>>, vector<1x1x16xf32>,
    %719 = vector.extract_strided_slice %646 {offsets = [13, 0], sizes = [1, 16], strides = [1, 1]} : vector<16x16xf32> to vector<1x16xf32>
    %c1_211 = arith.constant 1 : index
    %c20_212 = arith.constant 20 : index
    %c3_213 = arith.constant 3 : index
    %720 = vector.load %arg5[%c1_211, %c20_212, %c3_213] : memref<2x22x22xf32, #tpu.memory_space<vmem>>, vector<1x1x16xf32>
    %721 = vector.shape_cast %720 : vector<1x1x16xf32> to vector<1x16xf32>
    %722 = vector.shape_cast %719 : vector<1x16xf32> to vector<1x1x16xf32>
    tpu.vector_store %arg5[%c1_211, %c20_212, %c3_213], %722 {strides = array<i32>} : memref<2x22x22xf32, #tpu.memory_space<vmem>>, vector<1x1x16xf32>,
    %723 = vector.extract_strided_slice %646 {offsets = [1, 0], sizes = [1, 16], strides = [1, 1]} : vector<16x16xf32> to vector<1x16xf32>
    %c1_214 = arith.constant 1 : index
    %c2_215 = arith.constant 2 : index
    %c3_216 = arith.constant 3 : index
    %724 = vector.load %arg5[%c1_214, %c2_215, %c3_216] : memref<2x22x22xf32, #tpu.memory_space<vmem>>, vector<1x1x16xf32>
    %725 = vector.shape_cast %724 : vector<1x1x16xf32> to vector<1x16xf32>
    %726 = vector.shape_cast %723 : vector<1x16xf32> to vector<1x1x16xf32>
    tpu.vector_store %arg5[%c1_214, %c2_215, %c3_216], %726 {strides = array<i32>} : memref<2x22x22xf32, #tpu.memory_space<vmem>>, vector<1x1x16xf32>,
    %727 = vector.extract_strided_slice %646 {offsets = [12, 0], sizes = [1, 16], strides = [1, 1]} : vector<16x16xf32> to vector<1x16xf32>
    %c1_217 = arith.constant 1 : index
    %c21_218 = arith.constant 21 : index
    %c3_219 = arith.constant 3 : index
    %728 = vector.load %arg5[%c1_217, %c21_218, %c3_219] : memref<2x22x22xf32, #tpu.memory_space<vmem>>, vector<1x1x16xf32>
    %729 = vector.shape_cast %728 : vector<1x1x16xf32> to vector<1x16xf32>
    %730 = vector.shape_cast %727 : vector<1x16xf32> to vector<1x1x16xf32>
    tpu.vector_store %arg5[%c1_217, %c21_218, %c3_219], %730 {strides = array<i32>} : memref<2x22x22xf32, #tpu.memory_space<vmem>>, vector<1x1x16xf32>,
    %c1_220 = arith.constant 1 : index
    %c0_221 = arith.constant 0 : index
    %c6_222 = arith.constant 6 : index
    %731 = vector.load %arg5[%c1_220, %c0_221, %c6_222] : memref<2x22x22xf32, #tpu.memory_space<vmem>>, vector<1x22x1xf32>
    %732 = vector.shape_cast %731 : vector<1x22x1xf32> to vector<22x1xf32>
    %c1_223 = arith.constant 1 : index
    %c0_224 = arith.constant 0 : index
    %c0_225 = arith.constant 0 : index
    %733 = vector.load %arg5[%c1_223, %c0_224, %c0_225] : memref<2x22x22xf32, #tpu.memory_space<vmem>>, vector<1x22x1xf32>
    %734 = vector.shape_cast %733 : vector<1x22x1xf32> to vector<22x1xf32>
    %735 = vector.shape_cast %732 : vector<22x1xf32> to vector<1x22x1xf32>
    tpu.vector_store %arg5[%c1_223, %c0_224, %c0_225], %735 {strides = array<i32>} : memref<2x22x22xf32, #tpu.memory_space<vmem>>, vector<1x22x1xf32>,
    %c1_226 = arith.constant 1 : index
    %c0_227 = arith.constant 0 : index
    %c17_228 = arith.constant 17 : index
    %736 = vector.load %arg5[%c1_226, %c0_227, %c17_228] : memref<2x22x22xf32, #tpu.memory_space<vmem>>, vector<1x22x1xf32>
    %737 = vector.shape_cast %736 : vector<1x22x1xf32> to vector<22x1xf32>
    %c1_229 = arith.constant 1 : index
    %c0_230 = arith.constant 0 : index
    %c19_231 = arith.constant 19 : index
    %738 = vector.load %arg5[%c1_229, %c0_230, %c19_231] : memref<2x22x22xf32, #tpu.memory_space<vmem>>, vector<1x22x1xf32>
    %739 = vector.shape_cast %738 : vector<1x22x1xf32> to vector<22x1xf32>
    %740 = vector.shape_cast %737 : vector<22x1xf32> to vector<1x22x1xf32>
    tpu.vector_store %arg5[%c1_229, %c0_230, %c19_231], %740 {strides = array<i32>} : memref<2x22x22xf32, #tpu.memory_space<vmem>>, vector<1x22x1xf32>,
    %c1_232 = arith.constant 1 : index
    %c0_233 = arith.constant 0 : index
    %c5_234 = arith.constant 5 : index
    %741 = vector.load %arg5[%c1_232, %c0_233, %c5_234] : memref<2x22x22xf32, #tpu.memory_space<vmem>>, vector<1x22x1xf32>
    %742 = vector.shape_cast %741 : vector<1x22x1xf32> to vector<22x1xf32>
    %c1_235 = arith.constant 1 : index
    %c0_236 = arith.constant 0 : index
    %c1_237 = arith.constant 1 : index
    %743 = vector.load %arg5[%c1_235, %c0_236, %c1_237] : memref<2x22x22xf32, #tpu.memory_space<vmem>>, vector<1x22x1xf32>
    %744 = vector.shape_cast %743 : vector<1x22x1xf32> to vector<22x1xf32>
    %745 = vector.shape_cast %742 : vector<22x1xf32> to vector<1x22x1xf32>
    tpu.vector_store %arg5[%c1_235, %c0_236, %c1_237], %745 {strides = array<i32>} : memref<2x22x22xf32, #tpu.memory_space<vmem>>, vector<1x22x1xf32>,
    %c1_238 = arith.constant 1 : index
    %c0_239 = arith.constant 0 : index
    %c16_240 = arith.constant 16 : index
    %746 = vector.load %arg5[%c1_238, %c0_239, %c16_240] : memref<2x22x22xf32, #tpu.memory_space<vmem>>, vector<1x22x1xf32>
    %747 = vector.shape_cast %746 : vector<1x22x1xf32> to vector<22x1xf32>
    %c1_241 = arith.constant 1 : index
    %c0_242 = arith.constant 0 : index
    %c20_243 = arith.constant 20 : index
    %748 = vector.load %arg5[%c1_241, %c0_242, %c20_243] : memref<2x22x22xf32, #tpu.memory_space<vmem>>, vector<1x22x1xf32>
    %749 = vector.shape_cast %748 : vector<1x22x1xf32> to vector<22x1xf32>
    %750 = vector.shape_cast %747 : vector<22x1xf32> to vector<1x22x1xf32>
    tpu.vector_store %arg5[%c1_241, %c0_242, %c20_243], %750 {strides = array<i32>} : memref<2x22x22xf32, #tpu.memory_space<vmem>>, vector<1x22x1xf32>,
    %c1_244 = arith.constant 1 : index
    %c0_245 = arith.constant 0 : index
    %c4_246 = arith.constant 4 : index
    %751 = vector.load %arg5[%c1_244, %c0_245, %c4_246] : memref<2x22x22xf32, #tpu.memory_space<vmem>>, vector<1x22x1xf32>
    %752 = vector.shape_cast %751 : vector<1x22x1xf32> to vector<22x1xf32>
    %c1_247 = arith.constant 1 : index
    %c0_248 = arith.constant 0 : index
    %c2_249 = arith.constant 2 : index
    %753 = vector.load %arg5[%c1_247, %c0_248, %c2_249] : memref<2x22x22xf32, #tpu.memory_space<vmem>>, vector<1x22x1xf32>
    %754 = vector.shape_cast %753 : vector<1x22x1xf32> to vector<22x1xf32>
    %755 = vector.shape_cast %752 : vector<22x1xf32> to vector<1x22x1xf32>
    tpu.vector_store %arg5[%c1_247, %c0_248, %c2_249], %755 {strides = array<i32>} : memref<2x22x22xf32, #tpu.memory_space<vmem>>, vector<1x22x1xf32>,
    %c1_250 = arith.constant 1 : index
    %c0_251 = arith.constant 0 : index
    %c15_252 = arith.constant 15 : index
    %756 = vector.load %arg5[%c1_250, %c0_251, %c15_252] : memref<2x22x22xf32, #tpu.memory_space<vmem>>, vector<1x22x1xf32>
    %757 = vector.shape_cast %756 : vector<1x22x1xf32> to vector<22x1xf32>
    %c1_253 = arith.constant 1 : index
    %c0_254 = arith.constant 0 : index
    %c21_255 = arith.constant 21 : index
    %758 = vector.load %arg5[%c1_253, %c0_254, %c21_255] : memref<2x22x22xf32, #tpu.memory_space<vmem>>, vector<1x22x1xf32>
    %759 = vector.shape_cast %758 : vector<1x22x1xf32> to vector<22x1xf32>
    %760 = vector.shape_cast %757 : vector<22x1xf32> to vector<1x22x1xf32>
    tpu.vector_store %arg5[%c1_253, %c0_254, %c21_255], %760 {strides = array<i32>} : memref<2x22x22xf32, #tpu.memory_space<vmem>>, vector<1x22x1xf32>,
    %c0_256 = arith.constant 0 : index
    %c0_257 = arith.constant 0 : index
    %c0_258 = arith.constant 0 : index
    %761 = vector.load %arg5[%c0_256, %c0_257, %c0_258] : memref<2x22x22xf32, #tpu.memory_space<vmem>>, vector<1x22x22xf32>
    %762 = vector.shape_cast %761 : vector<1x22x22xf32> to vector<22x22xf32>
    %c1_259 = arith.constant 1 : index
    %c0_260 = arith.constant 0 : index
    %c0_261 = arith.constant 0 : index
    %763 = vector.load %arg5[%c1_259, %c0_260, %c0_261] : memref<2x22x22xf32, #tpu.memory_space<vmem>>, vector<1x22x22xf32>
    %764 = vector.shape_cast %763 : vector<1x22x22xf32> to vector<22x22xf32>
    %cst_262 = arith.constant 0.000000e+00 : f32
    %765 = vector.broadcast %cst_262 : f32 to vector<16x16xf32>
    %cst_263 = arith.constant 0.000000e+00 : f32
    %766 = vector.broadcast %cst_263 : f32 to vector<16x16xf32>
    %cst_264 = arith.constant 0.000000e+00 : f32
    %767 = vector.broadcast %cst_264 : f32 to vector<16x16xf32>
    %cst_265 = arith.constant 0.000000e+00 : f32
    %768 = vector.broadcast %cst_265 : f32 to vector<16x16xf32>
    %769 = vector.extract_strided_slice %762 {offsets = [0, 0], sizes = [22, 16], strides = [1, 1]} : vector<22x22xf32> to vector<22x16xf32>
    %770 = vector.extract_strided_slice %764 {offsets = [0, 0], sizes = [22, 16], strides = [1, 1]} : vector<22x22xf32> to vector<22x16xf32>
    %c0_266 = arith.constant 0 : index
    %771 = memref.load %arg2[%c0_266] : memref<98xf32, #tpu.memory_space<smem>>
    %c49_267 = arith.constant 49 : index
    %772 = memref.load %arg2[%c49_267] : memref<98xf32, #tpu.memory_space<smem>>
    %773 = vector.extract_strided_slice %769 {offsets = [0, 0], sizes = [16, 16], strides = [1, 1]} : vector<22x16xf32> to vector<16x16xf32>
    %774 = vector.broadcast %771 : f32 to vector<16x16xf32>
    %775 = arith.mulf %773, %774 : vector<16x16xf32>
    %776 = vector.extract_strided_slice %770 {offsets = [0, 0], sizes = [16, 16], strides = [1, 1]} : vector<22x16xf32> to vector<16x16xf32>
    %777 = vector.broadcast %772 : f32 to vector<16x16xf32>
    %778 = arith.mulf %776, %777 : vector<16x16xf32>
    %779 = arith.addf %765, %775 : vector<16x16xf32>
    %780 = arith.addf %767, %778 : vector<16x16xf32>
    %c7_268 = arith.constant 7 : index
    %781 = memref.load %arg2[%c7_268] : memref<98xf32, #tpu.memory_space<smem>>
    %c56_269 = arith.constant 56 : index
    %782 = memref.load %arg2[%c56_269] : memref<98xf32, #tpu.memory_space<smem>>
    %783 = vector.extract_strided_slice %769 {offsets = [1, 0], sizes = [16, 16], strides = [1, 1]} : vector<22x16xf32> to vector<16x16xf32>
    %784 = vector.broadcast %781 : f32 to vector<16x16xf32>
    %785 = arith.mulf %783, %784 : vector<16x16xf32>
    %786 = vector.extract_strided_slice %770 {offsets = [1, 0], sizes = [16, 16], strides = [1, 1]} : vector<22x16xf32> to vector<16x16xf32>
    %787 = vector.broadcast %782 : f32 to vector<16x16xf32>
    %788 = arith.mulf %786, %787 : vector<16x16xf32>
    %789 = arith.addf %766, %785 : vector<16x16xf32>
    %790 = arith.addf %768, %788 : vector<16x16xf32>
    %c14_270 = arith.constant 14 : index
    %791 = memref.load %arg2[%c14_270] : memref<98xf32, #tpu.memory_space<smem>>
    %c63_271 = arith.constant 63 : index
    %792 = memref.load %arg2[%c63_271] : memref<98xf32, #tpu.memory_space<smem>>
    %793 = vector.extract_strided_slice %769 {offsets = [2, 0], sizes = [16, 16], strides = [1, 1]} : vector<22x16xf32> to vector<16x16xf32>
    %794 = vector.broadcast %791 : f32 to vector<16x16xf32>
    %795 = arith.mulf %793, %794 : vector<16x16xf32>
    %796 = vector.extract_strided_slice %770 {offsets = [2, 0], sizes = [16, 16], strides = [1, 1]} : vector<22x16xf32> to vector<16x16xf32>
    %797 = vector.broadcast %792 : f32 to vector<16x16xf32>
    %798 = arith.mulf %796, %797 : vector<16x16xf32>
    %799 = arith.addf %779, %795 : vector<16x16xf32>
    %800 = arith.addf %780, %798 : vector<16x16xf32>
    %c21_272 = arith.constant 21 : index
    %801 = memref.load %arg2[%c21_272] : memref<98xf32, #tpu.memory_space<smem>>
    %c70_273 = arith.constant 70 : index
    %802 = memref.load %arg2[%c70_273] : memref<98xf32, #tpu.memory_space<smem>>
    %803 = vector.extract_strided_slice %769 {offsets = [3, 0], sizes = [16, 16], strides = [1, 1]} : vector<22x16xf32> to vector<16x16xf32>
    %804 = vector.broadcast %801 : f32 to vector<16x16xf32>
    %805 = arith.mulf %803, %804 : vector<16x16xf32>
    %806 = vector.extract_strided_slice %770 {offsets = [3, 0], sizes = [16, 16], strides = [1, 1]} : vector<22x16xf32> to vector<16x16xf32>
    %807 = vector.broadcast %802 : f32 to vector<16x16xf32>
    %808 = arith.mulf %806, %807 : vector<16x16xf32>
    %809 = arith.addf %789, %805 : vector<16x16xf32>
    %810 = arith.addf %790, %808 : vector<16x16xf32>
    %c28_274 = arith.constant 28 : index
    %811 = memref.load %arg2[%c28_274] : memref<98xf32, #tpu.memory_space<smem>>
    %c77_275 = arith.constant 77 : index
    %812 = memref.load %arg2[%c77_275] : memref<98xf32, #tpu.memory_space<smem>>
    %813 = vector.extract_strided_slice %769 {offsets = [4, 0], sizes = [16, 16], strides = [1, 1]} : vector<22x16xf32> to vector<16x16xf32>
    %814 = vector.broadcast %811 : f32 to vector<16x16xf32>
    %815 = arith.mulf %813, %814 : vector<16x16xf32>
    %816 = vector.extract_strided_slice %770 {offsets = [4, 0], sizes = [16, 16], strides = [1, 1]} : vector<22x16xf32> to vector<16x16xf32>
    %817 = vector.broadcast %812 : f32 to vector<16x16xf32>
    %818 = arith.mulf %816, %817 : vector<16x16xf32>
    %819 = arith.addf %799, %815 : vector<16x16xf32>
    %820 = arith.addf %800, %818 : vector<16x16xf32>
    %c35_276 = arith.constant 35 : index
    %821 = memref.load %arg2[%c35_276] : memref<98xf32, #tpu.memory_space<smem>>
    %c84_277 = arith.constant 84 : index
    %822 = memref.load %arg2[%c84_277] : memref<98xf32, #tpu.memory_space<smem>>
    %823 = vector.extract_strided_slice %769 {offsets = [5, 0], sizes = [16, 16], strides = [1, 1]} : vector<22x16xf32> to vector<16x16xf32>
    %824 = vector.broadcast %821 : f32 to vector<16x16xf32>
    %825 = arith.mulf %823, %824 : vector<16x16xf32>
    %826 = vector.extract_strided_slice %770 {offsets = [5, 0], sizes = [16, 16], strides = [1, 1]} : vector<22x16xf32> to vector<16x16xf32>
    %827 = vector.broadcast %822 : f32 to vector<16x16xf32>
    %828 = arith.mulf %826, %827 : vector<16x16xf32>
    %829 = arith.addf %809, %825 : vector<16x16xf32>
    %830 = arith.addf %810, %828 : vector<16x16xf32>
    %c42_278 = arith.constant 42 : index
    %831 = memref.load %arg2[%c42_278] : memref<98xf32, #tpu.memory_space<smem>>
    %c91_279 = arith.constant 91 : index
    %832 = memref.load %arg2[%c91_279] : memref<98xf32, #tpu.memory_space<smem>>
    %833 = vector.extract_strided_slice %769 {offsets = [6, 0], sizes = [16, 16], strides = [1, 1]} : vector<22x16xf32> to vector<16x16xf32>
    %834 = vector.broadcast %831 : f32 to vector<16x16xf32>
    %835 = arith.mulf %833, %834 : vector<16x16xf32>
    %836 = vector.extract_strided_slice %770 {offsets = [6, 0], sizes = [16, 16], strides = [1, 1]} : vector<22x16xf32> to vector<16x16xf32>
    %837 = vector.broadcast %832 : f32 to vector<16x16xf32>
    %838 = arith.mulf %836, %837 : vector<16x16xf32>
    %839 = arith.addf %819, %835 : vector<16x16xf32>
    %840 = arith.addf %820, %838 : vector<16x16xf32>
    %841 = vector.extract_strided_slice %762 {offsets = [0, 1], sizes = [22, 16], strides = [1, 1]} : vector<22x22xf32> to vector<22x16xf32>
    %842 = vector.extract_strided_slice %764 {offsets = [0, 1], sizes = [22, 16], strides = [1, 1]} : vector<22x22xf32> to vector<22x16xf32>
    %c1_280 = arith.constant 1 : index
    %843 = memref.load %arg2[%c1_280] : memref<98xf32, #tpu.memory_space<smem>>
    %c50_281 = arith.constant 50 : index
    %844 = memref.load %arg2[%c50_281] : memref<98xf32, #tpu.memory_space<smem>>
    %845 = vector.extract_strided_slice %841 {offsets = [0, 0], sizes = [16, 16], strides = [1, 1]} : vector<22x16xf32> to vector<16x16xf32>
    %846 = vector.broadcast %843 : f32 to vector<16x16xf32>
    %847 = arith.mulf %845, %846 : vector<16x16xf32>
    %848 = vector.extract_strided_slice %842 {offsets = [0, 0], sizes = [16, 16], strides = [1, 1]} : vector<22x16xf32> to vector<16x16xf32>
    %849 = vector.broadcast %844 : f32 to vector<16x16xf32>
    %850 = arith.mulf %848, %849 : vector<16x16xf32>
    %851 = arith.addf %839, %847 : vector<16x16xf32>
    %852 = arith.addf %840, %850 : vector<16x16xf32>
    %c8_282 = arith.constant 8 : index
    %853 = memref.load %arg2[%c8_282] : memref<98xf32, #tpu.memory_space<smem>>
    %c57_283 = arith.constant 57 : index
    %854 = memref.load %arg2[%c57_283] : memref<98xf32, #tpu.memory_space<smem>>
    %855 = vector.extract_strided_slice %841 {offsets = [1, 0], sizes = [16, 16], strides = [1, 1]} : vector<22x16xf32> to vector<16x16xf32>
    %856 = vector.broadcast %853 : f32 to vector<16x16xf32>
    %857 = arith.mulf %855, %856 : vector<16x16xf32>
    %858 = vector.extract_strided_slice %842 {offsets = [1, 0], sizes = [16, 16], strides = [1, 1]} : vector<22x16xf32> to vector<16x16xf32>
    %859 = vector.broadcast %854 : f32 to vector<16x16xf32>
    %860 = arith.mulf %858, %859 : vector<16x16xf32>
    %861 = arith.addf %829, %857 : vector<16x16xf32>
    %862 = arith.addf %830, %860 : vector<16x16xf32>
    %c15_284 = arith.constant 15 : index
    %863 = memref.load %arg2[%c15_284] : memref<98xf32, #tpu.memory_space<smem>>
    %c64_285 = arith.constant 64 : index
    %864 = memref.load %arg2[%c64_285] : memref<98xf32, #tpu.memory_space<smem>>
    %865 = vector.extract_strided_slice %841 {offsets = [2, 0], sizes = [16, 16], strides = [1, 1]} : vector<22x16xf32> to vector<16x16xf32>
    %866 = vector.broadcast %863 : f32 to vector<16x16xf32>
    %867 = arith.mulf %865, %866 : vector<16x16xf32>
    %868 = vector.extract_strided_slice %842 {offsets = [2, 0], sizes = [16, 16], strides = [1, 1]} : vector<22x16xf32> to vector<16x16xf32>
    %869 = vector.broadcast %864 : f32 to vector<16x16xf32>
    %870 = arith.mulf %868, %869 : vector<16x16xf32>
    %871 = arith.addf %851, %867 : vector<16x16xf32>
    %872 = arith.addf %852, %870 : vector<16x16xf32>
    %c22_286 = arith.constant 22 : index
    %873 = memref.load %arg2[%c22_286] : memref<98xf32, #tpu.memory_space<smem>>
    %c71_287 = arith.constant 71 : index
    %874 = memref.load %arg2[%c71_287] : memref<98xf32, #tpu.memory_space<smem>>
    %875 = vector.extract_strided_slice %841 {offsets = [3, 0], sizes = [16, 16], strides = [1, 1]} : vector<22x16xf32> to vector<16x16xf32>
    %876 = vector.broadcast %873 : f32 to vector<16x16xf32>
    %877 = arith.mulf %875, %876 : vector<16x16xf32>
    %878 = vector.extract_strided_slice %842 {offsets = [3, 0], sizes = [16, 16], strides = [1, 1]} : vector<22x16xf32> to vector<16x16xf32>
    %879 = vector.broadcast %874 : f32 to vector<16x16xf32>
    %880 = arith.mulf %878, %879 : vector<16x16xf32>
    %881 = arith.addf %861, %877 : vector<16x16xf32>
    %882 = arith.addf %862, %880 : vector<16x16xf32>
    %c29_288 = arith.constant 29 : index
    %883 = memref.load %arg2[%c29_288] : memref<98xf32, #tpu.memory_space<smem>>
    %c78_289 = arith.constant 78 : index
    %884 = memref.load %arg2[%c78_289] : memref<98xf32, #tpu.memory_space<smem>>
    %885 = vector.extract_strided_slice %841 {offsets = [4, 0], sizes = [16, 16], strides = [1, 1]} : vector<22x16xf32> to vector<16x16xf32>
    %886 = vector.broadcast %883 : f32 to vector<16x16xf32>
    %887 = arith.mulf %885, %886 : vector<16x16xf32>
    %888 = vector.extract_strided_slice %842 {offsets = [4, 0], sizes = [16, 16], strides = [1, 1]} : vector<22x16xf32> to vector<16x16xf32>
    %889 = vector.broadcast %884 : f32 to vector<16x16xf32>
    %890 = arith.mulf %888, %889 : vector<16x16xf32>
    %891 = arith.addf %871, %887 : vector<16x16xf32>
    %892 = arith.addf %872, %890 : vector<16x16xf32>
    %c36_290 = arith.constant 36 : index
    %893 = memref.load %arg2[%c36_290] : memref<98xf32, #tpu.memory_space<smem>>
    %c85_291 = arith.constant 85 : index
    %894 = memref.load %arg2[%c85_291] : memref<98xf32, #tpu.memory_space<smem>>
    %895 = vector.extract_strided_slice %841 {offsets = [5, 0], sizes = [16, 16], strides = [1, 1]} : vector<22x16xf32> to vector<16x16xf32>
    %896 = vector.broadcast %893 : f32 to vector<16x16xf32>
    %897 = arith.mulf %895, %896 : vector<16x16xf32>
    %898 = vector.extract_strided_slice %842 {offsets = [5, 0], sizes = [16, 16], strides = [1, 1]} : vector<22x16xf32> to vector<16x16xf32>
    %899 = vector.broadcast %894 : f32 to vector<16x16xf32>
    %900 = arith.mulf %898, %899 : vector<16x16xf32>
    %901 = arith.addf %881, %897 : vector<16x16xf32>
    %902 = arith.addf %882, %900 : vector<16x16xf32>
    %c43_292 = arith.constant 43 : index
    %903 = memref.load %arg2[%c43_292] : memref<98xf32, #tpu.memory_space<smem>>
    %c92_293 = arith.constant 92 : index
    %904 = memref.load %arg2[%c92_293] : memref<98xf32, #tpu.memory_space<smem>>
    %905 = vector.extract_strided_slice %841 {offsets = [6, 0], sizes = [16, 16], strides = [1, 1]} : vector<22x16xf32> to vector<16x16xf32>
    %906 = vector.broadcast %903 : f32 to vector<16x16xf32>
    %907 = arith.mulf %905, %906 : vector<16x16xf32>
    %908 = vector.extract_strided_slice %842 {offsets = [6, 0], sizes = [16, 16], strides = [1, 1]} : vector<22x16xf32> to vector<16x16xf32>
    %909 = vector.broadcast %904 : f32 to vector<16x16xf32>
    %910 = arith.mulf %908, %909 : vector<16x16xf32>
    %911 = arith.addf %891, %907 : vector<16x16xf32>
    %912 = arith.addf %892, %910 : vector<16x16xf32>
    %913 = vector.extract_strided_slice %762 {offsets = [0, 2], sizes = [22, 16], strides = [1, 1]} : vector<22x22xf32> to vector<22x16xf32>
    %914 = vector.extract_strided_slice %764 {offsets = [0, 2], sizes = [22, 16], strides = [1, 1]} : vector<22x22xf32> to vector<22x16xf32>
    %c2_294 = arith.constant 2 : index
    %915 = memref.load %arg2[%c2_294] : memref<98xf32, #tpu.memory_space<smem>>
    %c51_295 = arith.constant 51 : index
    %916 = memref.load %arg2[%c51_295] : memref<98xf32, #tpu.memory_space<smem>>
    %917 = vector.extract_strided_slice %913 {offsets = [0, 0], sizes = [16, 16], strides = [1, 1]} : vector<22x16xf32> to vector<16x16xf32>
    %918 = vector.broadcast %915 : f32 to vector<16x16xf32>
    %919 = arith.mulf %917, %918 : vector<16x16xf32>
    %920 = vector.extract_strided_slice %914 {offsets = [0, 0], sizes = [16, 16], strides = [1, 1]} : vector<22x16xf32> to vector<16x16xf32>
    %921 = vector.broadcast %916 : f32 to vector<16x16xf32>
    %922 = arith.mulf %920, %921 : vector<16x16xf32>
    %923 = arith.addf %911, %919 : vector<16x16xf32>
    %924 = arith.addf %912, %922 : vector<16x16xf32>
    %c9_296 = arith.constant 9 : index
    %925 = memref.load %arg2[%c9_296] : memref<98xf32, #tpu.memory_space<smem>>
    %c58_297 = arith.constant 58 : index
    %926 = memref.load %arg2[%c58_297] : memref<98xf32, #tpu.memory_space<smem>>
    %927 = vector.extract_strided_slice %913 {offsets = [1, 0], sizes = [16, 16], strides = [1, 1]} : vector<22x16xf32> to vector<16x16xf32>
    %928 = vector.broadcast %925 : f32 to vector<16x16xf32>
    %929 = arith.mulf %927, %928 : vector<16x16xf32>
    %930 = vector.extract_strided_slice %914 {offsets = [1, 0], sizes = [16, 16], strides = [1, 1]} : vector<22x16xf32> to vector<16x16xf32>
    %931 = vector.broadcast %926 : f32 to vector<16x16xf32>
    %932 = arith.mulf %930, %931 : vector<16x16xf32>
    %933 = arith.addf %901, %929 : vector<16x16xf32>
    %934 = arith.addf %902, %932 : vector<16x16xf32>
    %c16_298 = arith.constant 16 : index
    %935 = memref.load %arg2[%c16_298] : memref<98xf32, #tpu.memory_space<smem>>
    %c65_299 = arith.constant 65 : index
    %936 = memref.load %arg2[%c65_299] : memref<98xf32, #tpu.memory_space<smem>>
    %937 = vector.extract_strided_slice %913 {offsets = [2, 0], sizes = [16, 16], strides = [1, 1]} : vector<22x16xf32> to vector<16x16xf32>
    %938 = vector.broadcast %935 : f32 to vector<16x16xf32>
    %939 = arith.mulf %937, %938 : vector<16x16xf32>
    %940 = vector.extract_strided_slice %914 {offsets = [2, 0], sizes = [16, 16], strides = [1, 1]} : vector<22x16xf32> to vector<16x16xf32>
    %941 = vector.broadcast %936 : f32 to vector<16x16xf32>
    %942 = arith.mulf %940, %941 : vector<16x16xf32>
    %943 = arith.addf %923, %939 : vector<16x16xf32>
    %944 = arith.addf %924, %942 : vector<16x16xf32>
    %c23_300 = arith.constant 23 : index
    %945 = memref.load %arg2[%c23_300] : memref<98xf32, #tpu.memory_space<smem>>
    %c72_301 = arith.constant 72 : index
    %946 = memref.load %arg2[%c72_301] : memref<98xf32, #tpu.memory_space<smem>>
    %947 = vector.extract_strided_slice %913 {offsets = [3, 0], sizes = [16, 16], strides = [1, 1]} : vector<22x16xf32> to vector<16x16xf32>
    %948 = vector.broadcast %945 : f32 to vector<16x16xf32>
    %949 = arith.mulf %947, %948 : vector<16x16xf32>
    %950 = vector.extract_strided_slice %914 {offsets = [3, 0], sizes = [16, 16], strides = [1, 1]} : vector<22x16xf32> to vector<16x16xf32>
    %951 = vector.broadcast %946 : f32 to vector<16x16xf32>
    %952 = arith.mulf %950, %951 : vector<16x16xf32>
    %953 = arith.addf %933, %949 : vector<16x16xf32>
    %954 = arith.addf %934, %952 : vector<16x16xf32>
    %c30_302 = arith.constant 30 : index
    %955 = memref.load %arg2[%c30_302] : memref<98xf32, #tpu.memory_space<smem>>
    %c79_303 = arith.constant 79 : index
    %956 = memref.load %arg2[%c79_303] : memref<98xf32, #tpu.memory_space<smem>>
    %957 = vector.extract_strided_slice %913 {offsets = [4, 0], sizes = [16, 16], strides = [1, 1]} : vector<22x16xf32> to vector<16x16xf32>
    %958 = vector.broadcast %955 : f32 to vector<16x16xf32>
    %959 = arith.mulf %957, %958 : vector<16x16xf32>
    %960 = vector.extract_strided_slice %914 {offsets = [4, 0], sizes = [16, 16], strides = [1, 1]} : vector<22x16xf32> to vector<16x16xf32>
    %961 = vector.broadcast %956 : f32 to vector<16x16xf32>
    %962 = arith.mulf %960, %961 : vector<16x16xf32>
    %963 = arith.addf %943, %959 : vector<16x16xf32>
    %964 = arith.addf %944, %962 : vector<16x16xf32>
    %c37_304 = arith.constant 37 : index
    %965 = memref.load %arg2[%c37_304] : memref<98xf32, #tpu.memory_space<smem>>
    %c86_305 = arith.constant 86 : index
    %966 = memref.load %arg2[%c86_305] : memref<98xf32, #tpu.memory_space<smem>>
    %967 = vector.extract_strided_slice %913 {offsets = [5, 0], sizes = [16, 16], strides = [1, 1]} : vector<22x16xf32> to vector<16x16xf32>
    %968 = vector.broadcast %965 : f32 to vector<16x16xf32>
    %969 = arith.mulf %967, %968 : vector<16x16xf32>
    %970 = vector.extract_strided_slice %914 {offsets = [5, 0], sizes = [16, 16], strides = [1, 1]} : vector<22x16xf32> to vector<16x16xf32>
    %971 = vector.broadcast %966 : f32 to vector<16x16xf32>
    %972 = arith.mulf %970, %971 : vector<16x16xf32>
    %973 = arith.addf %953, %969 : vector<16x16xf32>
    %974 = arith.addf %954, %972 : vector<16x16xf32>
    %c44_306 = arith.constant 44 : index
    %975 = memref.load %arg2[%c44_306] : memref<98xf32, #tpu.memory_space<smem>>
    %c93_307 = arith.constant 93 : index
    %976 = memref.load %arg2[%c93_307] : memref<98xf32, #tpu.memory_space<smem>>
    %977 = vector.extract_strided_slice %913 {offsets = [6, 0], sizes = [16, 16], strides = [1, 1]} : vector<22x16xf32> to vector<16x16xf32>
    %978 = vector.broadcast %975 : f32 to vector<16x16xf32>
    %979 = arith.mulf %977, %978 : vector<16x16xf32>
    %980 = vector.extract_strided_slice %914 {offsets = [6, 0], sizes = [16, 16], strides = [1, 1]} : vector<22x16xf32> to vector<16x16xf32>
    %981 = vector.broadcast %976 : f32 to vector<16x16xf32>
    %982 = arith.mulf %980, %981 : vector<16x16xf32>
    %983 = arith.addf %963, %979 : vector<16x16xf32>
    %984 = arith.addf %964, %982 : vector<16x16xf32>
    %985 = vector.extract_strided_slice %762 {offsets = [0, 3], sizes = [22, 16], strides = [1, 1]} : vector<22x22xf32> to vector<22x16xf32>
    %986 = vector.extract_strided_slice %764 {offsets = [0, 3], sizes = [22, 16], strides = [1, 1]} : vector<22x22xf32> to vector<22x16xf32>
    %c3_308 = arith.constant 3 : index
    %987 = memref.load %arg2[%c3_308] : memref<98xf32, #tpu.memory_space<smem>>
    %c52_309 = arith.constant 52 : index
    %988 = memref.load %arg2[%c52_309] : memref<98xf32, #tpu.memory_space<smem>>
    %989 = vector.extract_strided_slice %985 {offsets = [0, 0], sizes = [16, 16], strides = [1, 1]} : vector<22x16xf32> to vector<16x16xf32>
    %990 = vector.broadcast %987 : f32 to vector<16x16xf32>
    %991 = arith.mulf %989, %990 : vector<16x16xf32>
    %992 = vector.extract_strided_slice %986 {offsets = [0, 0], sizes = [16, 16], strides = [1, 1]} : vector<22x16xf32> to vector<16x16xf32>
    %993 = vector.broadcast %988 : f32 to vector<16x16xf32>
    %994 = arith.mulf %992, %993 : vector<16x16xf32>
    %995 = arith.addf %983, %991 : vector<16x16xf32>
    %996 = arith.addf %984, %994 : vector<16x16xf32>
    %c10_310 = arith.constant 10 : index
    %997 = memref.load %arg2[%c10_310] : memref<98xf32, #tpu.memory_space<smem>>
    %c59_311 = arith.constant 59 : index
    %998 = memref.load %arg2[%c59_311] : memref<98xf32, #tpu.memory_space<smem>>
    %999 = vector.extract_strided_slice %985 {offsets = [1, 0], sizes = [16, 16], strides = [1, 1]} : vector<22x16xf32> to vector<16x16xf32>
    %1000 = vector.broadcast %997 : f32 to vector<16x16xf32>
    %1001 = arith.mulf %999, %1000 : vector<16x16xf32>
    %1002 = vector.extract_strided_slice %986 {offsets = [1, 0], sizes = [16, 16], strides = [1, 1]} : vector<22x16xf32> to vector<16x16xf32>
    %1003 = vector.broadcast %998 : f32 to vector<16x16xf32>
    %1004 = arith.mulf %1002, %1003 : vector<16x16xf32>
    %1005 = arith.addf %973, %1001 : vector<16x16xf32>
    %1006 = arith.addf %974, %1004 : vector<16x16xf32>
    %c17_312 = arith.constant 17 : index
    %1007 = memref.load %arg2[%c17_312] : memref<98xf32, #tpu.memory_space<smem>>
    %c66_313 = arith.constant 66 : index
    %1008 = memref.load %arg2[%c66_313] : memref<98xf32, #tpu.memory_space<smem>>
    %1009 = vector.extract_strided_slice %985 {offsets = [2, 0], sizes = [16, 16], strides = [1, 1]} : vector<22x16xf32> to vector<16x16xf32>
    %1010 = vector.broadcast %1007 : f32 to vector<16x16xf32>
    %1011 = arith.mulf %1009, %1010 : vector<16x16xf32>
    %1012 = vector.extract_strided_slice %986 {offsets = [2, 0], sizes = [16, 16], strides = [1, 1]} : vector<22x16xf32> to vector<16x16xf32>
    %1013 = vector.broadcast %1008 : f32 to vector<16x16xf32>
    %1014 = arith.mulf %1012, %1013 : vector<16x16xf32>
    %1015 = arith.addf %995, %1011 : vector<16x16xf32>
    %1016 = arith.addf %996, %1014 : vector<16x16xf32>
    %c24_314 = arith.constant 24 : index
    %1017 = memref.load %arg2[%c24_314] : memref<98xf32, #tpu.memory_space<smem>>
    %c73_315 = arith.constant 73 : index
    %1018 = memref.load %arg2[%c73_315] : memref<98xf32, #tpu.memory_space<smem>>
    %1019 = vector.extract_strided_slice %985 {offsets = [3, 0], sizes = [16, 16], strides = [1, 1]} : vector<22x16xf32> to vector<16x16xf32>
    %1020 = vector.broadcast %1017 : f32 to vector<16x16xf32>
    %1021 = arith.mulf %1019, %1020 : vector<16x16xf32>
    %1022 = vector.extract_strided_slice %986 {offsets = [3, 0], sizes = [16, 16], strides = [1, 1]} : vector<22x16xf32> to vector<16x16xf32>
    %1023 = vector.broadcast %1018 : f32 to vector<16x16xf32>
    %1024 = arith.mulf %1022, %1023 : vector<16x16xf32>
    %1025 = arith.addf %1005, %1021 : vector<16x16xf32>
    %1026 = arith.addf %1006, %1024 : vector<16x16xf32>
    %c31_316 = arith.constant 31 : index
    %1027 = memref.load %arg2[%c31_316] : memref<98xf32, #tpu.memory_space<smem>>
    %c80_317 = arith.constant 80 : index
    %1028 = memref.load %arg2[%c80_317] : memref<98xf32, #tpu.memory_space<smem>>
    %1029 = vector.extract_strided_slice %985 {offsets = [4, 0], sizes = [16, 16], strides = [1, 1]} : vector<22x16xf32> to vector<16x16xf32>
    %1030 = vector.broadcast %1027 : f32 to vector<16x16xf32>
    %1031 = arith.mulf %1029, %1030 : vector<16x16xf32>
    %1032 = vector.extract_strided_slice %986 {offsets = [4, 0], sizes = [16, 16], strides = [1, 1]} : vector<22x16xf32> to vector<16x16xf32>
    %1033 = vector.broadcast %1028 : f32 to vector<16x16xf32>
    %1034 = arith.mulf %1032, %1033 : vector<16x16xf32>
    %1035 = arith.addf %1015, %1031 : vector<16x16xf32>
    %1036 = arith.addf %1016, %1034 : vector<16x16xf32>
    %c38_318 = arith.constant 38 : index
    %1037 = memref.load %arg2[%c38_318] : memref<98xf32, #tpu.memory_space<smem>>
    %c87_319 = arith.constant 87 : index
    %1038 = memref.load %arg2[%c87_319] : memref<98xf32, #tpu.memory_space<smem>>
    %1039 = vector.extract_strided_slice %985 {offsets = [5, 0], sizes = [16, 16], strides = [1, 1]} : vector<22x16xf32> to vector<16x16xf32>
    %1040 = vector.broadcast %1037 : f32 to vector<16x16xf32>
    %1041 = arith.mulf %1039, %1040 : vector<16x16xf32>
    %1042 = vector.extract_strided_slice %986 {offsets = [5, 0], sizes = [16, 16], strides = [1, 1]} : vector<22x16xf32> to vector<16x16xf32>
    %1043 = vector.broadcast %1038 : f32 to vector<16x16xf32>
    %1044 = arith.mulf %1042, %1043 : vector<16x16xf32>
    %1045 = arith.addf %1025, %1041 : vector<16x16xf32>
    %1046 = arith.addf %1026, %1044 : vector<16x16xf32>
    %c45_320 = arith.constant 45 : index
    %1047 = memref.load %arg2[%c45_320] : memref<98xf32, #tpu.memory_space<smem>>
    %c94_321 = arith.constant 94 : index
    %1048 = memref.load %arg2[%c94_321] : memref<98xf32, #tpu.memory_space<smem>>
    %1049 = vector.extract_strided_slice %985 {offsets = [6, 0], sizes = [16, 16], strides = [1, 1]} : vector<22x16xf32> to vector<16x16xf32>
    %1050 = vector.broadcast %1047 : f32 to vector<16x16xf32>
    %1051 = arith.mulf %1049, %1050 : vector<16x16xf32>
    %1052 = vector.extract_strided_slice %986 {offsets = [6, 0], sizes = [16, 16], strides = [1, 1]} : vector<22x16xf32> to vector<16x16xf32>
    %1053 = vector.broadcast %1048 : f32 to vector<16x16xf32>
    %1054 = arith.mulf %1052, %1053 : vector<16x16xf32>
    %1055 = arith.addf %1035, %1051 : vector<16x16xf32>
    %1056 = arith.addf %1036, %1054 : vector<16x16xf32>
    %1057 = vector.extract_strided_slice %762 {offsets = [0, 4], sizes = [22, 16], strides = [1, 1]} : vector<22x22xf32> to vector<22x16xf32>
    %1058 = vector.extract_strided_slice %764 {offsets = [0, 4], sizes = [22, 16], strides = [1, 1]} : vector<22x22xf32> to vector<22x16xf32>
    %c4_322 = arith.constant 4 : index
    %1059 = memref.load %arg2[%c4_322] : memref<98xf32, #tpu.memory_space<smem>>
    %c53_323 = arith.constant 53 : index
    %1060 = memref.load %arg2[%c53_323] : memref<98xf32, #tpu.memory_space<smem>>
    %1061 = vector.extract_strided_slice %1057 {offsets = [0, 0], sizes = [16, 16], strides = [1, 1]} : vector<22x16xf32> to vector<16x16xf32>
    %1062 = vector.broadcast %1059 : f32 to vector<16x16xf32>
    %1063 = arith.mulf %1061, %1062 : vector<16x16xf32>
    %1064 = vector.extract_strided_slice %1058 {offsets = [0, 0], sizes = [16, 16], strides = [1, 1]} : vector<22x16xf32> to vector<16x16xf32>
    %1065 = vector.broadcast %1060 : f32 to vector<16x16xf32>
    %1066 = arith.mulf %1064, %1065 : vector<16x16xf32>
    %1067 = arith.addf %1055, %1063 : vector<16x16xf32>
    %1068 = arith.addf %1056, %1066 : vector<16x16xf32>
    %c11_324 = arith.constant 11 : index
    %1069 = memref.load %arg2[%c11_324] : memref<98xf32, #tpu.memory_space<smem>>
    %c60_325 = arith.constant 60 : index
    %1070 = memref.load %arg2[%c60_325] : memref<98xf32, #tpu.memory_space<smem>>
    %1071 = vector.extract_strided_slice %1057 {offsets = [1, 0], sizes = [16, 16], strides = [1, 1]} : vector<22x16xf32> to vector<16x16xf32>
    %1072 = vector.broadcast %1069 : f32 to vector<16x16xf32>
    %1073 = arith.mulf %1071, %1072 : vector<16x16xf32>
    %1074 = vector.extract_strided_slice %1058 {offsets = [1, 0], sizes = [16, 16], strides = [1, 1]} : vector<22x16xf32> to vector<16x16xf32>
    %1075 = vector.broadcast %1070 : f32 to vector<16x16xf32>
    %1076 = arith.mulf %1074, %1075 : vector<16x16xf32>
    %1077 = arith.addf %1045, %1073 : vector<16x16xf32>
    %1078 = arith.addf %1046, %1076 : vector<16x16xf32>
    %c18_326 = arith.constant 18 : index
    %1079 = memref.load %arg2[%c18_326] : memref<98xf32, #tpu.memory_space<smem>>
    %c67_327 = arith.constant 67 : index
    %1080 = memref.load %arg2[%c67_327] : memref<98xf32, #tpu.memory_space<smem>>
    %1081 = vector.extract_strided_slice %1057 {offsets = [2, 0], sizes = [16, 16], strides = [1, 1]} : vector<22x16xf32> to vector<16x16xf32>
    %1082 = vector.broadcast %1079 : f32 to vector<16x16xf32>
    %1083 = arith.mulf %1081, %1082 : vector<16x16xf32>
    %1084 = vector.extract_strided_slice %1058 {offsets = [2, 0], sizes = [16, 16], strides = [1, 1]} : vector<22x16xf32> to vector<16x16xf32>
    %1085 = vector.broadcast %1080 : f32 to vector<16x16xf32>
    %1086 = arith.mulf %1084, %1085 : vector<16x16xf32>
    %1087 = arith.addf %1067, %1083 : vector<16x16xf32>
    %1088 = arith.addf %1068, %1086 : vector<16x16xf32>
    %c25_328 = arith.constant 25 : index
    %1089 = memref.load %arg2[%c25_328] : memref<98xf32, #tpu.memory_space<smem>>
    %c74_329 = arith.constant 74 : index
    %1090 = memref.load %arg2[%c74_329] : memref<98xf32, #tpu.memory_space<smem>>
    %1091 = vector.extract_strided_slice %1057 {offsets = [3, 0], sizes = [16, 16], strides = [1, 1]} : vector<22x16xf32> to vector<16x16xf32>
    %1092 = vector.broadcast %1089 : f32 to vector<16x16xf32>
    %1093 = arith.mulf %1091, %1092 : vector<16x16xf32>
    %1094 = vector.extract_strided_slice %1058 {offsets = [3, 0], sizes = [16, 16], strides = [1, 1]} : vector<22x16xf32> to vector<16x16xf32>
    %1095 = vector.broadcast %1090 : f32 to vector<16x16xf32>
    %1096 = arith.mulf %1094, %1095 : vector<16x16xf32>
    %1097 = arith.addf %1077, %1093 : vector<16x16xf32>
    %1098 = arith.addf %1078, %1096 : vector<16x16xf32>
    %c32_330 = arith.constant 32 : index
    %1099 = memref.load %arg2[%c32_330] : memref<98xf32, #tpu.memory_space<smem>>
    %c81_331 = arith.constant 81 : index
    %1100 = memref.load %arg2[%c81_331] : memref<98xf32, #tpu.memory_space<smem>>
    %1101 = vector.extract_strided_slice %1057 {offsets = [4, 0], sizes = [16, 16], strides = [1, 1]} : vector<22x16xf32> to vector<16x16xf32>
    %1102 = vector.broadcast %1099 : f32 to vector<16x16xf32>
    %1103 = arith.mulf %1101, %1102 : vector<16x16xf32>
    %1104 = vector.extract_strided_slice %1058 {offsets = [4, 0], sizes = [16, 16], strides = [1, 1]} : vector<22x16xf32> to vector<16x16xf32>
    %1105 = vector.broadcast %1100 : f32 to vector<16x16xf32>
    %1106 = arith.mulf %1104, %1105 : vector<16x16xf32>
    %1107 = arith.addf %1087, %1103 : vector<16x16xf32>
    %1108 = arith.addf %1088, %1106 : vector<16x16xf32>
    %c39_332 = arith.constant 39 : index
    %1109 = memref.load %arg2[%c39_332] : memref<98xf32, #tpu.memory_space<smem>>
    %c88_333 = arith.constant 88 : index
    %1110 = memref.load %arg2[%c88_333] : memref<98xf32, #tpu.memory_space<smem>>
    %1111 = vector.extract_strided_slice %1057 {offsets = [5, 0], sizes = [16, 16], strides = [1, 1]} : vector<22x16xf32> to vector<16x16xf32>
    %1112 = vector.broadcast %1109 : f32 to vector<16x16xf32>
    %1113 = arith.mulf %1111, %1112 : vector<16x16xf32>
    %1114 = vector.extract_strided_slice %1058 {offsets = [5, 0], sizes = [16, 16], strides = [1, 1]} : vector<22x16xf32> to vector<16x16xf32>
    %1115 = vector.broadcast %1110 : f32 to vector<16x16xf32>
    %1116 = arith.mulf %1114, %1115 : vector<16x16xf32>
    %1117 = arith.addf %1097, %1113 : vector<16x16xf32>
    %1118 = arith.addf %1098, %1116 : vector<16x16xf32>
    %c46_334 = arith.constant 46 : index
    %1119 = memref.load %arg2[%c46_334] : memref<98xf32, #tpu.memory_space<smem>>
    %c95_335 = arith.constant 95 : index
    %1120 = memref.load %arg2[%c95_335] : memref<98xf32, #tpu.memory_space<smem>>
    %1121 = vector.extract_strided_slice %1057 {offsets = [6, 0], sizes = [16, 16], strides = [1, 1]} : vector<22x16xf32> to vector<16x16xf32>
    %1122 = vector.broadcast %1119 : f32 to vector<16x16xf32>
    %1123 = arith.mulf %1121, %1122 : vector<16x16xf32>
    %1124 = vector.extract_strided_slice %1058 {offsets = [6, 0], sizes = [16, 16], strides = [1, 1]} : vector<22x16xf32> to vector<16x16xf32>
    %1125 = vector.broadcast %1120 : f32 to vector<16x16xf32>
    %1126 = arith.mulf %1124, %1125 : vector<16x16xf32>
    %1127 = arith.addf %1107, %1123 : vector<16x16xf32>
    %1128 = arith.addf %1108, %1126 : vector<16x16xf32>
    %1129 = vector.extract_strided_slice %762 {offsets = [0, 5], sizes = [22, 16], strides = [1, 1]} : vector<22x22xf32> to vector<22x16xf32>
    %1130 = vector.extract_strided_slice %764 {offsets = [0, 5], sizes = [22, 16], strides = [1, 1]} : vector<22x22xf32> to vector<22x16xf32>
    %c5_336 = arith.constant 5 : index
    %1131 = memref.load %arg2[%c5_336] : memref<98xf32, #tpu.memory_space<smem>>
    %c54_337 = arith.constant 54 : index
    %1132 = memref.load %arg2[%c54_337] : memref<98xf32, #tpu.memory_space<smem>>
    %1133 = vector.extract_strided_slice %1129 {offsets = [0, 0], sizes = [16, 16], strides = [1, 1]} : vector<22x16xf32> to vector<16x16xf32>
    %1134 = vector.broadcast %1131 : f32 to vector<16x16xf32>
    %1135 = arith.mulf %1133, %1134 : vector<16x16xf32>
    %1136 = vector.extract_strided_slice %1130 {offsets = [0, 0], sizes = [16, 16], strides = [1, 1]} : vector<22x16xf32> to vector<16x16xf32>
    %1137 = vector.broadcast %1132 : f32 to vector<16x16xf32>
    %1138 = arith.mulf %1136, %1137 : vector<16x16xf32>
    %1139 = arith.addf %1127, %1135 : vector<16x16xf32>
    %1140 = arith.addf %1128, %1138 : vector<16x16xf32>
    %c12_338 = arith.constant 12 : index
    %1141 = memref.load %arg2[%c12_338] : memref<98xf32, #tpu.memory_space<smem>>
    %c61_339 = arith.constant 61 : index
    %1142 = memref.load %arg2[%c61_339] : memref<98xf32, #tpu.memory_space<smem>>
    %1143 = vector.extract_strided_slice %1129 {offsets = [1, 0], sizes = [16, 16], strides = [1, 1]} : vector<22x16xf32> to vector<16x16xf32>
    %1144 = vector.broadcast %1141 : f32 to vector<16x16xf32>
    %1145 = arith.mulf %1143, %1144 : vector<16x16xf32>
    %1146 = vector.extract_strided_slice %1130 {offsets = [1, 0], sizes = [16, 16], strides = [1, 1]} : vector<22x16xf32> to vector<16x16xf32>
    %1147 = vector.broadcast %1142 : f32 to vector<16x16xf32>
    %1148 = arith.mulf %1146, %1147 : vector<16x16xf32>
    %1149 = arith.addf %1117, %1145 : vector<16x16xf32>
    %1150 = arith.addf %1118, %1148 : vector<16x16xf32>
    %c19_340 = arith.constant 19 : index
    %1151 = memref.load %arg2[%c19_340] : memref<98xf32, #tpu.memory_space<smem>>
    %c68_341 = arith.constant 68 : index
    %1152 = memref.load %arg2[%c68_341] : memref<98xf32, #tpu.memory_space<smem>>
    %1153 = vector.extract_strided_slice %1129 {offsets = [2, 0], sizes = [16, 16], strides = [1, 1]} : vector<22x16xf32> to vector<16x16xf32>
    %1154 = vector.broadcast %1151 : f32 to vector<16x16xf32>
    %1155 = arith.mulf %1153, %1154 : vector<16x16xf32>
    %1156 = vector.extract_strided_slice %1130 {offsets = [2, 0], sizes = [16, 16], strides = [1, 1]} : vector<22x16xf32> to vector<16x16xf32>
    %1157 = vector.broadcast %1152 : f32 to vector<16x16xf32>
    %1158 = arith.mulf %1156, %1157 : vector<16x16xf32>
    %1159 = arith.addf %1139, %1155 : vector<16x16xf32>
    %1160 = arith.addf %1140, %1158 : vector<16x16xf32>
    %c26_342 = arith.constant 26 : index
    %1161 = memref.load %arg2[%c26_342] : memref<98xf32, #tpu.memory_space<smem>>
    %c75_343 = arith.constant 75 : index
    %1162 = memref.load %arg2[%c75_343] : memref<98xf32, #tpu.memory_space<smem>>
    %1163 = vector.extract_strided_slice %1129 {offsets = [3, 0], sizes = [16, 16], strides = [1, 1]} : vector<22x16xf32> to vector<16x16xf32>
    %1164 = vector.broadcast %1161 : f32 to vector<16x16xf32>
    %1165 = arith.mulf %1163, %1164 : vector<16x16xf32>
    %1166 = vector.extract_strided_slice %1130 {offsets = [3, 0], sizes = [16, 16], strides = [1, 1]} : vector<22x16xf32> to vector<16x16xf32>
    %1167 = vector.broadcast %1162 : f32 to vector<16x16xf32>
    %1168 = arith.mulf %1166, %1167 : vector<16x16xf32>
    %1169 = arith.addf %1149, %1165 : vector<16x16xf32>
    %1170 = arith.addf %1150, %1168 : vector<16x16xf32>
    %c33_344 = arith.constant 33 : index
    %1171 = memref.load %arg2[%c33_344] : memref<98xf32, #tpu.memory_space<smem>>
    %c82_345 = arith.constant 82 : index
    %1172 = memref.load %arg2[%c82_345] : memref<98xf32, #tpu.memory_space<smem>>
    %1173 = vector.extract_strided_slice %1129 {offsets = [4, 0], sizes = [16, 16], strides = [1, 1]} : vector<22x16xf32> to vector<16x16xf32>
    %1174 = vector.broadcast %1171 : f32 to vector<16x16xf32>
    %1175 = arith.mulf %1173, %1174 : vector<16x16xf32>
    %1176 = vector.extract_strided_slice %1130 {offsets = [4, 0], sizes = [16, 16], strides = [1, 1]} : vector<22x16xf32> to vector<16x16xf32>
    %1177 = vector.broadcast %1172 : f32 to vector<16x16xf32>
    %1178 = arith.mulf %1176, %1177 : vector<16x16xf32>
    %1179 = arith.addf %1159, %1175 : vector<16x16xf32>
    %1180 = arith.addf %1160, %1178 : vector<16x16xf32>
    %c40_346 = arith.constant 40 : index
    %1181 = memref.load %arg2[%c40_346] : memref<98xf32, #tpu.memory_space<smem>>
    %c89_347 = arith.constant 89 : index
    %1182 = memref.load %arg2[%c89_347] : memref<98xf32, #tpu.memory_space<smem>>
    %1183 = vector.extract_strided_slice %1129 {offsets = [5, 0], sizes = [16, 16], strides = [1, 1]} : vector<22x16xf32> to vector<16x16xf32>
    %1184 = vector.broadcast %1181 : f32 to vector<16x16xf32>
    %1185 = arith.mulf %1183, %1184 : vector<16x16xf32>
    %1186 = vector.extract_strided_slice %1130 {offsets = [5, 0], sizes = [16, 16], strides = [1, 1]} : vector<22x16xf32> to vector<16x16xf32>
    %1187 = vector.broadcast %1182 : f32 to vector<16x16xf32>
    %1188 = arith.mulf %1186, %1187 : vector<16x16xf32>
    %1189 = arith.addf %1169, %1185 : vector<16x16xf32>
    %1190 = arith.addf %1170, %1188 : vector<16x16xf32>
    %c47_348 = arith.constant 47 : index
    %1191 = memref.load %arg2[%c47_348] : memref<98xf32, #tpu.memory_space<smem>>
    %c96_349 = arith.constant 96 : index
    %1192 = memref.load %arg2[%c96_349] : memref<98xf32, #tpu.memory_space<smem>>
    %1193 = vector.extract_strided_slice %1129 {offsets = [6, 0], sizes = [16, 16], strides = [1, 1]} : vector<22x16xf32> to vector<16x16xf32>
    %1194 = vector.broadcast %1191 : f32 to vector<16x16xf32>
    %1195 = arith.mulf %1193, %1194 : vector<16x16xf32>
    %1196 = vector.extract_strided_slice %1130 {offsets = [6, 0], sizes = [16, 16], strides = [1, 1]} : vector<22x16xf32> to vector<16x16xf32>
    %1197 = vector.broadcast %1192 : f32 to vector<16x16xf32>
    %1198 = arith.mulf %1196, %1197 : vector<16x16xf32>
    %1199 = arith.addf %1179, %1195 : vector<16x16xf32>
    %1200 = arith.addf %1180, %1198 : vector<16x16xf32>
    %1201 = vector.extract_strided_slice %762 {offsets = [0, 6], sizes = [22, 16], strides = [1, 1]} : vector<22x22xf32> to vector<22x16xf32>
    %1202 = vector.extract_strided_slice %764 {offsets = [0, 6], sizes = [22, 16], strides = [1, 1]} : vector<22x22xf32> to vector<22x16xf32>
    %c6_350 = arith.constant 6 : index
    %1203 = memref.load %arg2[%c6_350] : memref<98xf32, #tpu.memory_space<smem>>
    %c55_351 = arith.constant 55 : index
    %1204 = memref.load %arg2[%c55_351] : memref<98xf32, #tpu.memory_space<smem>>
    %1205 = vector.extract_strided_slice %1201 {offsets = [0, 0], sizes = [16, 16], strides = [1, 1]} : vector<22x16xf32> to vector<16x16xf32>
    %1206 = vector.broadcast %1203 : f32 to vector<16x16xf32>
    %1207 = arith.mulf %1205, %1206 : vector<16x16xf32>
    %1208 = vector.extract_strided_slice %1202 {offsets = [0, 0], sizes = [16, 16], strides = [1, 1]} : vector<22x16xf32> to vector<16x16xf32>
    %1209 = vector.broadcast %1204 : f32 to vector<16x16xf32>
    %1210 = arith.mulf %1208, %1209 : vector<16x16xf32>
    %1211 = arith.addf %1199, %1207 : vector<16x16xf32>
    %1212 = arith.addf %1200, %1210 : vector<16x16xf32>
    %c13_352 = arith.constant 13 : index
    %1213 = memref.load %arg2[%c13_352] : memref<98xf32, #tpu.memory_space<smem>>
    %c62_353 = arith.constant 62 : index
    %1214 = memref.load %arg2[%c62_353] : memref<98xf32, #tpu.memory_space<smem>>
    %1215 = vector.extract_strided_slice %1201 {offsets = [1, 0], sizes = [16, 16], strides = [1, 1]} : vector<22x16xf32> to vector<16x16xf32>
    %1216 = vector.broadcast %1213 : f32 to vector<16x16xf32>
    %1217 = arith.mulf %1215, %1216 : vector<16x16xf32>
    %1218 = vector.extract_strided_slice %1202 {offsets = [1, 0], sizes = [16, 16], strides = [1, 1]} : vector<22x16xf32> to vector<16x16xf32>
    %1219 = vector.broadcast %1214 : f32 to vector<16x16xf32>
    %1220 = arith.mulf %1218, %1219 : vector<16x16xf32>
    %1221 = arith.addf %1189, %1217 : vector<16x16xf32>
    %1222 = arith.addf %1190, %1220 : vector<16x16xf32>
    %c20_354 = arith.constant 20 : index
    %1223 = memref.load %arg2[%c20_354] : memref<98xf32, #tpu.memory_space<smem>>
    %c69_355 = arith.constant 69 : index
    %1224 = memref.load %arg2[%c69_355] : memref<98xf32, #tpu.memory_space<smem>>
    %1225 = vector.extract_strided_slice %1201 {offsets = [2, 0], sizes = [16, 16], strides = [1, 1]} : vector<22x16xf32> to vector<16x16xf32>
    %1226 = vector.broadcast %1223 : f32 to vector<16x16xf32>
    %1227 = arith.mulf %1225, %1226 : vector<16x16xf32>
    %1228 = vector.extract_strided_slice %1202 {offsets = [2, 0], sizes = [16, 16], strides = [1, 1]} : vector<22x16xf32> to vector<16x16xf32>
    %1229 = vector.broadcast %1224 : f32 to vector<16x16xf32>
    %1230 = arith.mulf %1228, %1229 : vector<16x16xf32>
    %1231 = arith.addf %1211, %1227 : vector<16x16xf32>
    %1232 = arith.addf %1212, %1230 : vector<16x16xf32>
    %c27_356 = arith.constant 27 : index
    %1233 = memref.load %arg2[%c27_356] : memref<98xf32, #tpu.memory_space<smem>>
    %c76_357 = arith.constant 76 : index
    %1234 = memref.load %arg2[%c76_357] : memref<98xf32, #tpu.memory_space<smem>>
    %1235 = vector.extract_strided_slice %1201 {offsets = [3, 0], sizes = [16, 16], strides = [1, 1]} : vector<22x16xf32> to vector<16x16xf32>
    %1236 = vector.broadcast %1233 : f32 to vector<16x16xf32>
    %1237 = arith.mulf %1235, %1236 : vector<16x16xf32>
    %1238 = vector.extract_strided_slice %1202 {offsets = [3, 0], sizes = [16, 16], strides = [1, 1]} : vector<22x16xf32> to vector<16x16xf32>
    %1239 = vector.broadcast %1234 : f32 to vector<16x16xf32>
    %1240 = arith.mulf %1238, %1239 : vector<16x16xf32>
    %1241 = arith.addf %1221, %1237 : vector<16x16xf32>
    %1242 = arith.addf %1222, %1240 : vector<16x16xf32>
    %c34_358 = arith.constant 34 : index
    %1243 = memref.load %arg2[%c34_358] : memref<98xf32, #tpu.memory_space<smem>>
    %c83_359 = arith.constant 83 : index
    %1244 = memref.load %arg2[%c83_359] : memref<98xf32, #tpu.memory_space<smem>>
    %1245 = vector.extract_strided_slice %1201 {offsets = [4, 0], sizes = [16, 16], strides = [1, 1]} : vector<22x16xf32> to vector<16x16xf32>
    %1246 = vector.broadcast %1243 : f32 to vector<16x16xf32>
    %1247 = arith.mulf %1245, %1246 : vector<16x16xf32>
    %1248 = vector.extract_strided_slice %1202 {offsets = [4, 0], sizes = [16, 16], strides = [1, 1]} : vector<22x16xf32> to vector<16x16xf32>
    %1249 = vector.broadcast %1244 : f32 to vector<16x16xf32>
    %1250 = arith.mulf %1248, %1249 : vector<16x16xf32>
    %1251 = arith.addf %1231, %1247 : vector<16x16xf32>
    %1252 = arith.addf %1232, %1250 : vector<16x16xf32>
    %c41_360 = arith.constant 41 : index
    %1253 = memref.load %arg2[%c41_360] : memref<98xf32, #tpu.memory_space<smem>>
    %c90_361 = arith.constant 90 : index
    %1254 = memref.load %arg2[%c90_361] : memref<98xf32, #tpu.memory_space<smem>>
    %1255 = vector.extract_strided_slice %1201 {offsets = [5, 0], sizes = [16, 16], strides = [1, 1]} : vector<22x16xf32> to vector<16x16xf32>
    %1256 = vector.broadcast %1253 : f32 to vector<16x16xf32>
    %1257 = arith.mulf %1255, %1256 : vector<16x16xf32>
    %1258 = vector.extract_strided_slice %1202 {offsets = [5, 0], sizes = [16, 16], strides = [1, 1]} : vector<22x16xf32> to vector<16x16xf32>
    %1259 = vector.broadcast %1254 : f32 to vector<16x16xf32>
    %1260 = arith.mulf %1258, %1259 : vector<16x16xf32>
    %1261 = arith.addf %1241, %1257 : vector<16x16xf32>
    %1262 = arith.addf %1242, %1260 : vector<16x16xf32>
    %c48_362 = arith.constant 48 : index
    %1263 = memref.load %arg2[%c48_362] : memref<98xf32, #tpu.memory_space<smem>>
    %c97_363 = arith.constant 97 : index
    %1264 = memref.load %arg2[%c97_363] : memref<98xf32, #tpu.memory_space<smem>>
    %1265 = vector.extract_strided_slice %1201 {offsets = [6, 0], sizes = [16, 16], strides = [1, 1]} : vector<22x16xf32> to vector<16x16xf32>
    %1266 = vector.broadcast %1263 : f32 to vector<16x16xf32>
    %1267 = arith.mulf %1265, %1266 : vector<16x16xf32>
    %1268 = vector.extract_strided_slice %1202 {offsets = [6, 0], sizes = [16, 16], strides = [1, 1]} : vector<22x16xf32> to vector<16x16xf32>
    %1269 = vector.broadcast %1264 : f32 to vector<16x16xf32>
    %1270 = arith.mulf %1268, %1269 : vector<16x16xf32>
    %1271 = arith.addf %1251, %1267 : vector<16x16xf32>
    %1272 = arith.addf %1252, %1270 : vector<16x16xf32>
    %1273 = arith.addf %1271, %1261 : vector<16x16xf32>
    %1274 = arith.addf %1272, %1262 : vector<16x16xf32>
    %1275 = arith.addf %1273, %1274 : vector<16x16xf32>
    %1276 = vector.broadcast %0 : f32 to vector<16x16xf32>
    %1277 = arith.addf %1275, %1276 : vector<16x16xf32>
    %c1_364 = arith.constant 1 : index
    %c0_365 = arith.constant 0 : index
    %c0_366 = arith.constant 0 : index
    %c0_367 = arith.constant 0 : index
    %1278 = vector.load %arg4[%c1_364, %c0_365, %c0_366, %c0_367] : memref<2x1x16x16xf32, #tpu.memory_space<vmem>>, vector<1x1x16x16xf32>
    %1279 = vector.shape_cast %1278 : vector<1x1x16x16xf32> to vector<16x16xf32>
    %1280 = vector.shape_cast %1277 : vector<16x16xf32> to vector<1x1x16x16xf32>
    tpu.vector_store %arg4[%c1_364, %c0_365, %c0_366, %c0_367], %1280 {strides = array<i32>} : memref<2x1x16x16xf32, #tpu.memory_space<vmem>>, vector<1x1x16x16xf32>,
    return
  }
  func.func @transform_0(%arg0: i32) -> (i32, i32, i32, i32) {
    %c0_i32 = arith.constant 0 : i32
    %c0_i32_0 = arith.constant 0 : i32
    %c0_i32_1 = arith.constant 0 : i32
    %c0_i32_2 = arith.constant 0 : i32
    %c0_i32_3 = arith.constant 0 : i32
    return %c0_i32, %c0_i32_0, %c0_i32_1, %c0_i32_2 : i32, i32, i32, i32
  }
  func.func @transform_1(%arg0: i32) -> i32 {
    %c0_i32 = arith.constant 0 : i32
    %c0_i32_0 = arith.constant 0 : i32
    return %c0_i32 : i32
  }
  func.func @transform_2(%arg0: i32) -> i32 {
    %c0_i32 = arith.constant 0 : i32
    %c0_i32_0 = arith.constant 0 : i32
    return %c0_i32 : i32
  }
  func.func @transform_3(%arg0: i32) -> (i32, i32, i32, i32) {
    %c0_i32 = arith.constant 0 : i32
    %c0_i32_0 = arith.constant 0 : i32
    %c0_i32_1 = arith.constant 0 : i32
    %c0_i32_2 = arith.constant 0 : i32
    %c0_i32_3 = arith.constant 0 : i32
    return %c0_i32, %c0_i32_0, %c0_i32_1, %c0_i32_2 : i32, i32, i32, i32
  }
}

</mosaic_0001>

<llo_original>
// kernel: spatial_attention_forward.1
$region0: #{spatial_attention_forward.1}
  #allocation0 [shape = 'u32[]', space=smem, size = 0x4, offset = 0x4, fixed_abs, tag = 'smem constant byte address 0x4 - core index']
  #allocation1 [shape = 'u32[144,128]{1,0:T(1,128)}', space=vmem, size = 0x12000, scoped, tag = 'internal scratch']
  #allocation2 [shape = 'f32[2,22,22]{2,1,0:T(8,128)}', space=vmem, size = 0x6000, scoped, tag = 'scratch operand']
  #allocation3 [shape = 'f32[1]{0:T(128)S(6)}', space=smem, size = 0x200, scoped, tag = 'scoped memory for spatial_attention_forward.1']
  %s0 = inlined_call_operand.hbm [shape: f32[2,16,16,16], index: 0, kind: input, shape index: {}]
  %s1 = inlined_call_operand.vmem [shape: f32[98], index: 1, kind: input, shape index: {}]
  %s2 = inlined_call_operand.<no memory space> [shape: f32[1], index: 2, kind: input, shape index: {}]
  %s3 = inlined_call_operand.hbm [shape: f32[2,1,16,16], index: 3, kind: output, shape index: {}]
  %s4 = sld [smem:[#allocation0]]
  $region30: #{spatial_attention_forward.1} parent=0
    _
  %s6 = ssub.s32 1, %s4
  %s7 = scalar_select 0, %s6, %s4
  %8 = sst [smem:[#allocation3]] %s2
  $region1: #{spatial_attention_forward.1} parent=0
    #allocation4 [shape = 'u8[262144]{0}', space=vmem, size = 0x40000, scoped, tag = 'input window, operand 0, single buffered']
    #allocation5 [shape = 's32[1]{0}', space=sflag, size = 0x4, scoped, tag = 'scoped memory for spatial_attention_forward.1']
    #allocation6 [shape = 's32[1]{0}', space=sflag, size = 0x4, scoped, tag = 'scoped memory for spatial_attention_forward.1']
    #allocation7 [shape = 's32[1]{0}', space=sflag, size = 0x4, scoped, tag = 'scoped memory for spatial_attention_forward.1']
    #allocation8 [shape = 'u8[512]{0}', space=smem, size = 0x200, scoped, tag = 'input window, operand 1, single buffered']
    #allocation9 [shape = 'u8[16384]{0}', space=vmem, size = 0x4000, scoped, tag = 'output window, operand 0, single buffered']
    %9 = vsyncpa [#allocation5], 0
    %10 = vsyncpa [#allocation7], 0
    %11 = vsyncpa [#allocation6], 0
    // Predicated region
    $region2: #{spatial_attention_forward.1} parent=1 // pred_check
      _
    $region3: #{spatial_attention_forward.1} parent=1 // pred_check_branch
      %13 = sbr.rel (0) target = $region5
    $region4: #{spatial_attention_forward.1} parent=1 // pred_region
      %s15 = ssub.s32 8192, 8192
      %16 = vsyncadd [#allocation5], %s15
      %s17 = sshll.u32 [#allocation4], 4
      %s18 = int_to_ptr.vmem [resolvable:$true] %s17
      %23 = dma.hbm_to_vmem [thread:$0]  %s0, 8192, %s18, [#allocation5], 128, 128, 8
    $region5: #{spatial_attention_forward.1} parent=1 // pred_fallthru
      _
    // Predicated region
    $region6: #{spatial_attention_forward.1} parent=1 // pred_check
      _
    $region7: #{spatial_attention_forward.1} parent=1 // pred_check_branch
      %25 = sbr.rel (0) target = $region9
    $region8: #{spatial_attention_forward.1} parent=1 // pred_region
      %s27 = ssub.s32 16, 16
      %28 = vsyncadd [#allocation7], %s27
      %s30 = sshll.u32 %s1, 4
      %s31 = int_to_ptr.vmem [resolvable:$true] %s30
      %33 = dma.vmem_to_smem %s31, 16, [#allocation8], [#allocation7]
    $region9: #{spatial_attention_forward.1} parent=1 // pred_fallthru
      _
    // Predicated region
    $region10: #{spatial_attention_forward.1} parent=1 // pred_check
      _
    $region11: #{spatial_attention_forward.1} parent=1 // pred_check_branch
      %35 = sbr.rel (0) target = $region13
    $region12: #{spatial_attention_forward.1} parent=1 // pred_region
      _
    $region13: #{spatial_attention_forward.1} parent=1 // pred_fallthru
      _
    // Predicated region
    $region14: #{spatial_attention_forward.1} parent=1 // pred_check
      _
    $region15: #{spatial_attention_forward.1} parent=1 // pred_check_branch
      %37 = sbr.rel (0) target = $region17
    $region16: #{spatial_attention_forward.1} parent=1 // pred_region
      %38 = dma.done [#allocation5], 8192
    $region17: #{spatial_attention_forward.1} parent=1 // pred_fallthru
      _
    // Predicated region
    $region18: #{spatial_attention_forward.1} parent=1 // pred_check
      _
    $region19: #{spatial_attention_forward.1} parent=1 // pred_check_branch
      %40 = sbr.rel (0) target = $region21
    $region20: #{spatial_attention_forward.1} parent=1 // pred_region
      %41 = dma.done [#allocation7], 16
    $region21: #{spatial_attention_forward.1} parent=1 // pred_fallthru
      _
    %42 = sfence
    %s43 = sld [smem:[#allocation3]]
    %v44 = vld [vmem:[#allocation4] sm:$0xff]
    %v45 = vld [vmem:[#allocation4 + $0x8] sm:$0xff]
    %v46 = vld [vmem:[#allocation4 + $0x10] sm:$0xff]
    %v47 = vld [vmem:[#allocation4 + $0x18] sm:$0xff]
    %v48 = vld [vmem:[#allocation4 + $0x20] sm:$0xff]
    %v49 = vld [vmem:[#allocation4 + $0x28] sm:$0xff]
    %v50 = vld [vmem:[#allocation4 + $0x30] sm:$0xff]
    %v51 = vld [vmem:[#allocation4 + $0x38] sm:$0xff]
    %v52 = vld [vmem:[#allocation4 + $0x40] sm:$0xff]
    %v53 = vld [vmem:[#allocation4 + $0x48] sm:$0xff]
    %v54 = vld [vmem:[#allocation4 + $0x50] sm:$0xff]
    %v55 = vld [vmem:[#allocation4 + $0x58] sm:$0xff]
    %v56 = vld [vmem:[#allocation4 + $0x60] sm:$0xff]
    %v57 = vld [vmem:[#allocation4 + $0x68] sm:$0xff]
    %v58 = vld [vmem:[#allocation4 + $0x70] sm:$0xff]
    %v59 = vld [vmem:[#allocation4 + $0x78] sm:$0xff]
    %v60 = vld [vmem:[#allocation4 + $0x80] sm:$0xff]
    %v61 = vld [vmem:[#allocation4 + $0x88] sm:$0xff]
    %v62 = vld [vmem:[#allocation4 + $0x90] sm:$0xff]
    %v63 = vld [vmem:[#allocation4 + $0x98] sm:$0xff]
    %v64 = vld [vmem:[#allocation4 + $0xa0] sm:$0xff]
    %v65 = vld [vmem:[#allocation4 + $0xa8] sm:$0xff]
    %v66 = vld [vmem:[#allocation4 + $0xb0] sm:$0xff]
    %v67 = vld [vmem:[#allocation4 + $0xb8] sm:$0xff]
    %v68 = vld [vmem:[#allocation4 + $0xc0] sm:$0xff]
    %v69 = vld [vmem:[#allocation4 + $0xc8] sm:$0xff]
    %v70 = vld [vmem:[#allocation4 + $0xd0] sm:$0xff]
    %v71 = vld [vmem:[#allocation4 + $0xd8] sm:$0xff]
    %v72 = vld [vmem:[#allocation4 + $0xe0] sm:$0xff]
    %v73 = vld [vmem:[#allocation4 + $0xe8] sm:$0xff]
    %v74 = vld [vmem:[#allocation4 + $0xf0] sm:$0xff]
    %v75 = vld [vmem:[#allocation4 + $0xf8] sm:$0xff]
    %vm76 = vcmask 130048
    %v77 = vsel %vm76, %v44, 0.0
    %v78 = vsel %vm76, %v46, 0.0
    %v79 = vadd.f32 %v77, %v78
    %v80 = vsel %vm76, %v48, 0.0
    %v81 = vadd.f32 %v79, %v80
    %v82 = vsel %vm76, %v50, 0.0
    %v83 = vadd.f32 %v81, %v82
    %v84 = vsel %vm76, %v52, 0.0
    %v85 = vadd.f32 %v83, %v84
    %v86 = vsel %vm76, %v54, 0.0
    %v87 = vadd.f32 %v85, %v86
    %v88 = vsel %vm76, %v56, 0.0
    %v89 = vadd.f32 %v87, %v88
    %v90 = vsel %vm76, %v58, 0.0
    %v91 = vadd.f32 %v89, %v90
    %v92 = vsel %vm76, %v60, 0.0
    %v93 = vadd.f32 %v91, %v92
    %v94 = vsel %vm76, %v62, 0.0
    %v95 = vadd.f32 %v93, %v94
    %v96 = vsel %vm76, %v64, 0.0
    %v97 = vadd.f32 %v95, %v96
    %v98 = vsel %vm76, %v66, 0.0
    %v99 = vadd.f32 %v97, %v98
    %v100 = vsel %vm76, %v68, 0.0
    %v101 = vadd.f32 %v99, %v100
    %v102 = vsel %vm76, %v70, 0.0
    %v103 = vadd.f32 %v101, %v102
    %v104 = vsel %vm76, %v72, 0.0
    %v105 = vadd.f32 %v103, %v104
    %v106 = vsel %vm76, %v74, 0.0
    %v107 = vadd.f32 %v105, %v106
    %v108 = vsel %vm76, %v45, 0.0
    %v109 = vsel %vm76, %v47, 0.0
    %v110 = vadd.f32 %v108, %v109
    %v111 = vsel %vm76, %v49, 0.0
    %v112 = vadd.f32 %v110, %v111
    %v113 = vsel %vm76, %v51, 0.0
    %v114 = vadd.f32 %v112, %v113
    %v115 = vsel %vm76, %v53, 0.0
    %v116 = vadd.f32 %v114, %v115
    %v117 = vsel %vm76, %v55, 0.0
    %v118 = vadd.f32 %v116, %v117
    %v119 = vsel %vm76, %v57, 0.0
    %v120 = vadd.f32 %v118, %v119
    %v121 = vsel %vm76, %v59, 0.0
    %v122 = vadd.f32 %v120, %v121
    %v123 = vsel %vm76, %v61, 0.0
    %v124 = vadd.f32 %v122, %v123
    %v125 = vsel %vm76, %v63, 0.0
    %v126 = vadd.f32 %v124, %v125
    %v127 = vsel %vm76, %v65, 0.0
    %v128 = vadd.f32 %v126, %v127
    %v129 = vsel %vm76, %v67, 0.0
    %v130 = vadd.f32 %v128, %v129
    %v131 = vsel %vm76, %v69, 0.0
    %v132 = vadd.f32 %v130, %v131
    %v133 = vsel %vm76, %v71, 0.0
    %v134 = vadd.f32 %v132, %v133
    %v135 = vsel %vm76, %v73, 0.0
    %v136 = vadd.f32 %v134, %v135
    %v137 = vsel %vm76, %v75, 0.0
    %v138 = vadd.f32 %v136, %v137
    %v139 = vmul.f32 %v107, 0.0625
    %v140 = vmul.f32 %v138, 0.0625
    %v141 = vsel %vm76, %v44, -inf
    %v142 = vsel %vm76, %v46, -inf
    %v143 = vsel %vm76, %v48, -inf
    %v144 = vmax.f32 %v141, %v143
    %v145 = vsel %vm76, %v50, -inf
    %v146 = vmax.f32 %v142, %v145
    %v147 = vsel %vm76, %v52, -inf
    %v148 = vmax.f32 %v144, %v147
    %v149 = vsel %vm76, %v54, -inf
    %v150 = vmax.f32 %v146, %v149
    %v151 = vsel %vm76, %v56, -inf
    %v152 = vmax.f32 %v148, %v151
    %v153 = vsel %vm76, %v58, -inf
    %v154 = vmax.f32 %v150, %v153
    %v155 = vsel %vm76, %v60, -inf
    %v156 = vmax.f32 %v152, %v155
    %v157 = vsel %vm76, %v62, -inf
    %v158 = vmax.f32 %v154, %v157
    %v159 = vsel %vm76, %v64, -inf
    %v160 = vmax.f32 %v156, %v159
    %v161 = vsel %vm76, %v66, -inf
    %v162 = vmax.f32 %v158, %v161
    %v163 = vsel %vm76, %v68, -inf
    %v164 = vmax.f32 %v160, %v163
    %v165 = vsel %vm76, %v70, -inf
    %v166 = vmax.f32 %v162, %v165
    %v167 = vsel %vm76, %v72, -inf
    %v168 = vmax.f32 %v164, %v167
    %v169 = vsel %vm76, %v74, -inf
    %v170 = vmax.f32 %v166, %v169
    %v171 = vmax.f32 %v168, %v170
    %v172 = vsel %vm76, %v45, -inf
    %v173 = vsel %vm76, %v47, -inf
    %v174 = vsel %vm76, %v49, -inf
    %v175 = vmax.f32 %v172, %v174
    %v176 = vsel %vm76, %v51, -inf
    %v177 = vmax.f32 %v173, %v176
    %v178 = vsel %vm76, %v53, -inf
    %v179 = vmax.f32 %v175, %v178
    %v180 = vsel %vm76, %v55, -inf
    %v181 = vmax.f32 %v177, %v180
    %v182 = vsel %vm76, %v57, -inf
    %v183 = vmax.f32 %v179, %v182
    %v184 = vsel %vm76, %v59, -inf
    %v185 = vmax.f32 %v181, %v184
    %v186 = vsel %vm76, %v61, -inf
    %v187 = vmax.f32 %v183, %v186
    %v188 = vsel %vm76, %v63, -inf
    %v189 = vmax.f32 %v185, %v188
    %v190 = vsel %vm76, %v65, -inf
    %v191 = vmax.f32 %v187, %v190
    %v192 = vsel %vm76, %v67, -inf
    %v193 = vmax.f32 %v189, %v192
    %v194 = vsel %vm76, %v69, -inf
    %v195 = vmax.f32 %v191, %v194
    %v196 = vsel %vm76, %v71, -inf
    %v197 = vmax.f32 %v193, %v196
    %v198 = vsel %vm76, %v73, -inf
    %v199 = vmax.f32 %v195, %v198
    %v200 = vsel %vm76, %v75, -inf
    %v201 = vmax.f32 %v197, %v200
    %v202 = vmax.f32 %v199, %v201
    %205 = vrot.lane.b32.xlu0 %v139, 3
    %v206 = vpop.permute.xlu0 %205
    %207 = vrot.lane.b32.xlu0 %v140, 3
    %v208 = vpop.permute.xlu0 %207
    %vm211 = vcmask 154648
    %212 = vst.msk [vmem:[#allocation2 + $0x3] sm:$0xff] %vm211, %v206
    %213 = vst.msk [vmem:[#allocation2 + $0xb] sm:$0xff] %vm211, %v208
    %vm214 = vcmask 150555
    %215 = vst.msk [vmem:[#allocation2 - $0x3] sm:$0x8] %vm214, %v206
    %vm216 = vcmask 153630
    %217 = vst.msk [vmem:[#allocation2 + $0xd] sm:$0x40] %vm216, %v208
    %vm218 = vcmask 149530
    %219 = vst.msk [vmem:[#allocation2 - $0x1] sm:$0x4] %vm218, %v206
    %vm220 = vcmask 152605
    %221 = vst.msk [vmem:[#allocation2 + $0xf] sm:$0x20] %vm220, %v208
    %vm222 = vcmask 148505
    %223 = vst.msk [vmem:[#allocation2 + $0x1] sm:$0x2] %vm222, %v206
    %vm224 = vcmask 151580
    %225 = vst.msk [vmem:[#allocation2 + $0x11] sm:$0x10] %vm224, %v208
    %v226 = vld [vmem:[#allocation2] sm:$0xff]
    %v227 = vld [vmem:[#allocation2 + $0x8] sm:$0xff]
    %v228 = vld [vmem:[#allocation2 + $0x10] sm:$0x3f]
    %232 = vrot.lane.b32.xlu0 %v226, 122
    %v233 = vpop.permute.xlu0 %232
    %234 = vrot.lane.b32.xlu0 %v227, 122
    %v235 = vpop.permute.xlu0 %234
    %236 = vrot.lane.b32.xlu0 %v228, 122
    %v237 = vpop.permute.xlu0 %236
    %vm241 = vcmask 7168
    %242 = vst.msk [vmem:[#allocation2] sm:$0xff] %vm241, %v233
    %243 = vst.msk [vmem:[#allocation2 + $0x8] sm:$0xff] %vm241, %v235
    %vm244 = vcmask 5120
    %245 = vst.msk [vmem:[#allocation2 + $0x10] sm:$0x3f] %vm244, %v237
    %v246 = vld [vmem:[#allocation2] sm:$0xff]
    %v247 = vld [vmem:[#allocation2 + $0x8] sm:$0xff]
    %v248 = vld [vmem:[#allocation2 + $0x10] sm:$0x3f]
    %252 = vrot.lane.b32.xlu0 %v246, 2
    %v253 = vpop.permute.xlu0 %252
    %254 = vrot.lane.b32.xlu0 %v247, 2
    %v255 = vpop.permute.xlu0 %254
    %256 = vrot.lane.b32.xlu0 %v248, 2
    %v257 = vpop.permute.xlu0 %256
    %vm261 = vcmask 162968
    %262 = vst.msk [vmem:[#allocation2] sm:$0xff] %vm261, %v253
    %263 = vst.msk [vmem:[#allocation2 + $0x8] sm:$0xff] %vm261, %v255
    %vm264 = vcmask 160920
    %265 = vst.msk [vmem:[#allocation2 + $0x10] sm:$0x3f] %vm264, %v257
    %v266 = vld [vmem:[#allocation2] sm:$0xff]
    %v267 = vld [vmem:[#allocation2 + $0x8] sm:$0xff]
    %v268 = vld [vmem:[#allocation2 + $0x10] sm:$0x3f]
    %272 = vrot.lane.b32.xlu0 %v266, 124
    %v273 = vpop.permute.xlu0 %272
    %274 = vrot.lane.b32.xlu0 %v267, 124
    %v275 = vpop.permute.xlu0 %274
    %276 = vrot.lane.b32.xlu0 %v268, 124
    %v277 = vpop.permute.xlu0 %276
    %vm281 = vcmask 15368
    %282 = vst.msk [vmem:[#allocation2] sm:$0xff] %vm281, %v273
    %283 = vst.msk [vmem:[#allocation2 + $0x8] sm:$0xff] %vm281, %v275
    %vm284 = vcmask 13320
    %285 = vst.msk [vmem:[#allocation2 + $0x10] sm:$0x3f] %vm284, %v277
    %v286 = vld [vmem:[#allocation2] sm:$0xff]
    %v287 = vld [vmem:[#allocation2 + $0x8] sm:$0xff]
    %v288 = vld [vmem:[#allocation2 + $0x10] sm:$0x3f]
    %292 = vrot.lane.b32.xlu0 %v286, 4
    %v293 = vpop.permute.xlu0 %292
    %294 = vrot.lane.b32.xlu0 %v287, 4
    %v295 = vpop.permute.xlu0 %294
    %296 = vrot.lane.b32.xlu0 %v288, 4
    %v297 = vpop.permute.xlu0 %296
    %vm301 = vcmask 171168
    %302 = vst.msk [vmem:[#allocation2] sm:$0xff] %vm301, %v293
    %303 = vst.msk [vmem:[#allocation2 + $0x8] sm:$0xff] %vm301, %v295
    %vm304 = vcmask 169120
    %305 = vst.msk [vmem:[#allocation2 + $0x10] sm:$0x3f] %vm304, %v297
    %v306 = vld [vmem:[#allocation2] sm:$0xff]
    %v307 = vld [vmem:[#allocation2 + $0x8] sm:$0xff]
    %v308 = vld [vmem:[#allocation2 + $0x10] sm:$0x3f]
    %312 = vrot.lane.b32.xlu0 %v306, 126
    %v313 = vpop.permute.xlu0 %312
    %314 = vrot.lane.b32.xlu0 %v307, 126
    %v315 = vpop.permute.xlu0 %314
    %316 = vrot.lane.b32.xlu0 %v308, 126
    %v317 = vpop.permute.xlu0 %316
    %vm321 = vcmask 23568
    %322 = vst.msk [vmem:[#allocation2] sm:$0xff] %vm321, %v313
    %323 = vst.msk [vmem:[#allocation2 + $0x8] sm:$0xff] %vm321, %v315
    %vm324 = vcmask 21520
    %325 = vst.msk [vmem:[#allocation2 + $0x10] sm:$0x3f] %vm324, %v317
    %v326 = vld [vmem:[#allocation2] sm:$0xff]
    %v327 = vld [vmem:[#allocation2 + $0x8] sm:$0xff]
    %v328 = vld [vmem:[#allocation2 + $0x10] sm:$0x3f]
    %332 = vrot.lane.b32.xlu0 %v326, 6
    %v333 = vpop.permute.xlu0 %332
    %334 = vrot.lane.b32.xlu0 %v327, 6
    %v335 = vpop.permute.xlu0 %334
    %336 = vrot.lane.b32.xlu0 %v328, 6
    %v337 = vpop.permute.xlu0 %336
    %vm341 = vcmask 179368
    %342 = vst.msk [vmem:[#allocation2] sm:$0xff] %vm341, %v333
    %343 = vst.msk [vmem:[#allocation2 + $0x8] sm:$0xff] %vm341, %v335
    %vm344 = vcmask 177320
    %345 = vst.msk [vmem:[#allocation2 + $0x10] sm:$0x3f] %vm344, %v337
    %348 = vrot.lane.b32.xlu0 %v171, 3
    %v349 = vpop.permute.xlu0 %348
    %350 = vrot.lane.b32.xlu0 %v202, 3
    %v351 = vpop.permute.xlu0 %350
    %s354 = scalar_lea.vmem [#allocation2], 24
    %355 = vst.msk [vmem:[%s354 + $0x3] sm:$0xff] %vm211, %v349
    %356 = vst.msk [vmem:[%s354 + $0xb] sm:$0xff] %vm211, %v351
    %357 = vst.msk [vmem:[%s354 - $0x3] sm:$0x8] %vm214, %v349
    %358 = vst.msk [vmem:[%s354 + $0xd] sm:$0x40] %vm216, %v351
    %359 = vst.msk [vmem:[%s354 - $0x1] sm:$0x4] %vm218, %v349
    %360 = vst.msk [vmem:[%s354 + $0xf] sm:$0x20] %vm220, %v351
    %361 = vst.msk [vmem:[%s354 + $0x1] sm:$0x2] %vm222, %v349
    %362 = vst.msk [vmem:[%s354 + $0x11] sm:$0x10] %vm224, %v351
    %v363 = vld [vmem:[%s354] sm:$0xff]
    %v364 = vld [vmem:[%s354 + $0x8] sm:$0xff]
    %v365 = vld [vmem:[%s354 + $0x10] sm:$0x3f]
    %369 = vrot.lane.b32.xlu0 %v363, 122
    %v370 = vpop.permute.xlu0 %369
    %371 = vrot.lane.b32.xlu0 %v364, 122
    %v372 = vpop.permute.xlu0 %371
    %373 = vrot.lane.b32.xlu0 %v365, 122
    %v374 = vpop.permute.xlu0 %373
    %378 = vst.msk [vmem:[%s354] sm:$0xff] %vm241, %v370
    %379 = vst.msk [vmem:[%s354 + $0x8] sm:$0xff] %vm241, %v372
    %380 = vst.msk [vmem:[%s354 + $0x10] sm:$0x3f] %vm244, %v374
    %v381 = vld [vmem:[%s354] sm:$0xff]
    %v382 = vld [vmem:[%s354 + $0x8] sm:$0xff]
    %v383 = vld [vmem:[%s354 + $0x10] sm:$0x3f]
    %387 = vrot.lane.b32.xlu0 %v381, 2
    %v388 = vpop.permute.xlu0 %387
    %389 = vrot.lane.b32.xlu0 %v382, 2
    %v390 = vpop.permute.xlu0 %389
    %391 = vrot.lane.b32.xlu0 %v383, 2
    %v392 = vpop.permute.xlu0 %391
    %396 = vst.msk [vmem:[%s354] sm:$0xff] %vm261, %v388
    %397 = vst.msk [vmem:[%s354 + $0x8] sm:$0xff] %vm261, %v390
    %398 = vst.msk [vmem:[%s354 + $0x10] sm:$0x3f] %vm264, %v392
    %v399 = vld [vmem:[%s354] sm:$0xff]
    %v400 = vld [vmem:[%s354 + $0x8] sm:$0xff]
    %v401 = vld [vmem:[%s354 + $0x10] sm:$0x3f]
    %405 = vrot.lane.b32.xlu0 %v399, 124
    %v406 = vpop.permute.xlu0 %405
    %407 = vrot.lane.b32.xlu0 %v400, 124
    %v408 = vpop.permute.xlu0 %407
    %409 = vrot.lane.b32.xlu0 %v401, 124
    %v410 = vpop.permute.xlu0 %409
    %414 = vst.msk [vmem:[%s354] sm:$0xff] %vm281, %v406
    %415 = vst.msk [vmem:[%s354 + $0x8] sm:$0xff] %vm281, %v408
    %416 = vst.msk [vmem:[%s354 + $0x10] sm:$0x3f] %vm284, %v410
    %v417 = vld [vmem:[%s354] sm:$0xff]
    %v418 = vld [vmem:[%s354 + $0x8] sm:$0xff]
    %v419 = vld [vmem:[%s354 + $0x10] sm:$0x3f]
    %423 = vrot.lane.b32.xlu0 %v417, 4
    %v424 = vpop.permute.xlu0 %423
    %425 = vrot.lane.b32.xlu0 %v418, 4
    %v426 = vpop.permute.xlu0 %425
    %427 = vrot.lane.b32.xlu0 %v419, 4
    %v428 = vpop.permute.xlu0 %427
    %432 = vst.msk [vmem:[%s354] sm:$0xff] %vm301, %v424
    %433 = vst.msk [vmem:[%s354 + $0x8] sm:$0xff] %vm301, %v426
    %434 = vst.msk [vmem:[%s354 + $0x10] sm:$0x3f] %vm304, %v428
    %v435 = vld [vmem:[%s354] sm:$0xff]
    %v436 = vld [vmem:[%s354 + $0x8] sm:$0xff]
    %v437 = vld [vmem:[%s354 + $0x10] sm:$0x3f]
    %441 = vrot.lane.b32.xlu0 %v435, 126
    %v442 = vpop.permute.xlu0 %441
    %443 = vrot.lane.b32.xlu0 %v436, 126
    %v444 = vpop.permute.xlu0 %443
    %445 = vrot.lane.b32.xlu0 %v437, 126
    %v446 = vpop.permute.xlu0 %445
    %450 = vst.msk [vmem:[%s354] sm:$0xff] %vm321, %v442
    %451 = vst.msk [vmem:[%s354 + $0x8] sm:$0xff] %vm321, %v444
    %452 = vst.msk [vmem:[%s354 + $0x10] sm:$0x3f] %vm324, %v446
    %v453 = vld [vmem:[%s354] sm:$0xff]
    %v454 = vld [vmem:[%s354 + $0x8] sm:$0xff]
    %v455 = vld [vmem:[%s354 + $0x10] sm:$0x3f]
    %459 = vrot.lane.b32.xlu0 %v453, 6
    %v460 = vpop.permute.xlu0 %459
    %461 = vrot.lane.b32.xlu0 %v454, 6
    %v462 = vpop.permute.xlu0 %461
    %463 = vrot.lane.b32.xlu0 %v455, 6
    %v464 = vpop.permute.xlu0 %463
    %468 = vst.msk [vmem:[%s354] sm:$0xff] %vm341, %v460
    %469 = vst.msk [vmem:[%s354 + $0x8] sm:$0xff] %vm341, %v462
    %470 = vst.msk [vmem:[%s354 + $0x10] sm:$0x3f] %vm344, %v464
    %v471 = vld [vmem:[#allocation2] sm:$0xff]
    %v472 = vld [vmem:[#allocation2 + $0x8] sm:$0xff]
    %v473 = vld [vmem:[#allocation2 + $0x10] sm:$0x3f]
    %v474 = vld [vmem:[%s354] sm:$0xff]
    %v475 = vld [vmem:[%s354 + $0x8] sm:$0xff]
    %v476 = vld [vmem:[%s354 + $0x10] sm:$0x3f]
    %s477 = sld [smem:[#allocation8]]
    %s478 = sld [smem:[#allocation8 + $0x31]]
    %v479 = vstv %s477
    %v480 = vmul.f32 %v471, %v479
    %v481 = vmul.f32 %v472, %v479
    %v482 = vstv %s478
    %v483 = vmul.f32 %v474, %v482
    %v484 = vmul.f32 %v475, %v482
    %v485 = vadd.f32 %v480, 0.0
    %v486 = vadd.f32 %v481, 0.0
    %v487 = vadd.f32 %v483, 0.0
    %v488 = vadd.f32 %v484, 0.0
    %s489 = sld [smem:[#allocation8 + $0x7]]
    %s490 = sld [smem:[#allocation8 + $0x38]]
    %v491 = vstv %s489
    %v492 = vmul.f32 %v471, %v491
    %v493 = vmul.f32 %v472, %v491
    %v494 = vmul.f32 %v473, %v491
    %v495 = vstv %s490
    %v496 = vmul.f32 %v474, %v495
    %v497 = vmul.f32 %v475, %v495
    %v498 = vmul.f32 %v476, %v495
    %v499 = vadd.f32 %v492, 0.0
    %v500 = vadd.f32 %v493, 0.0
    %v501 = vadd.f32 %v494, 0.0
    %v502 = vadd.f32 %v496, 0.0
    %v503 = vadd.f32 %v497, 0.0
    %v504 = vadd.f32 %v498, 0.0
    %s505 = sld [smem:[#allocation8 + $0xe]]
    %s506 = sld [smem:[#allocation8 + $0x3f]]
    %v507 = vstv %s505
    %v508 = vmul.f32 %v471, %v507
    %v509 = vmul.f32 %v472, %v507
    %v510 = vmul.f32 %v473, %v507
    %v511 = vstv %s506
    %v512 = vmul.f32 %v474, %v511
    %v513 = vmul.f32 %v475, %v511
    %v514 = vmul.f32 %v476, %v511
    %vm518 = vcmask 1045504
    %v519 = vrot.slane %v508, 2
    %v520 = vrot.slane %v509, 2
    %v521 = vsel %vm518, %v519, %v520
    %v522 = vrot.slane %v510, 2
    %v523 = vsel %vm518, %v520, %v522
    %v526 = vadd.f32 %v485, %v521
    %v527 = vadd.f32 %v486, %v523
    %v531 = vrot.slane %v512, 2
    %v532 = vrot.slane %v513, 2
    %v533 = vsel %vm518, %v531, %v532
    %v534 = vrot.slane %v514, 2
    %v535 = vsel %vm518, %v532, %v534
    %v538 = vadd.f32 %v487, %v533
    %v539 = vadd.f32 %v488, %v535
    %s540 = sld [smem:[#allocation8 + $0x15]]
    %s541 = sld [smem:[#allocation8 + $0x46]]
    %v542 = vstv %s540
    %v543 = vmul.f32 %v471, %v542
    %v544 = vmul.f32 %v472, %v542
    %v545 = vmul.f32 %v473, %v542
    %v546 = vstv %s541
    %v547 = vmul.f32 %v474, %v546
    %v548 = vmul.f32 %v475, %v546
    %v549 = vmul.f32 %v476, %v546
    %v553 = vrot.slane %v543, 2
    %v554 = vrot.slane %v544, 2
    %v555 = vsel %vm518, %v553, %v554
    %v556 = vrot.slane %v545, 2
    %v557 = vsel %vm518, %v554, %v556
    %v561 = vadd.f32 %v499, %v555
    %v562 = vadd.f32 %v500, %v557
    %v563 = vadd.f32 %v501, %v556
    %v567 = vrot.slane %v547, 2
    %v568 = vrot.slane %v548, 2
    %v569 = vsel %vm518, %v567, %v568
    %v570 = vrot.slane %v549, 2
    %v571 = vsel %vm518, %v568, %v570
    %v575 = vadd.f32 %v502, %v569
    %v576 = vadd.f32 %v503, %v571
    %v577 = vadd.f32 %v504, %v570
    %s578 = sld [smem:[#allocation8 + $0x1c]]
    %s579 = sld [smem:[#allocation8 + $0x4d]]
    %v580 = vstv %s578
    %v581 = vmul.f32 %v471, %v580
    %v582 = vmul.f32 %v472, %v580
    %v583 = vmul.f32 %v473, %v580
    %v584 = vstv %s579
    %v585 = vmul.f32 %v474, %v584
    %v586 = vmul.f32 %v475, %v584
    %v587 = vmul.f32 %v476, %v584
    %vm591 = vcmask 1043456
    %v592 = vrot.slane %v581, 4
    %v593 = vrot.slane %v582, 4
    %v594 = vsel %vm591, %v592, %v593
    %v595 = vrot.slane %v583, 4
    %v596 = vsel %vm591, %v593, %v595
    %v599 = vadd.f32 %v526, %v594
    %v600 = vadd.f32 %v527, %v596
    %v604 = vrot.slane %v585, 4
    %v605 = vrot.slane %v586, 4
    %v606 = vsel %vm591, %v604, %v605
    %v607 = vrot.slane %v587, 4
    %v608 = vsel %vm591, %v605, %v607
    %v611 = vadd.f32 %v538, %v606
    %v612 = vadd.f32 %v539, %v608
    %s613 = sld [smem:[#allocation8 + $0x23]]
    %s614 = sld [smem:[#allocation8 + $0x54]]
    %v615 = vstv %s613
    %v616 = vmul.f32 %v471, %v615
    %v617 = vmul.f32 %v472, %v615
    %v618 = vmul.f32 %v473, %v615
    %v619 = vstv %s614
    %v620 = vmul.f32 %v474, %v619
    %v621 = vmul.f32 %v475, %v619
    %v622 = vmul.f32 %v476, %v619
    %v626 = vrot.slane %v616, 4
    %v627 = vrot.slane %v617, 4
    %v628 = vsel %vm591, %v626, %v627
    %v629 = vrot.slane %v618, 4
    %v630 = vsel %vm591, %v627, %v629
    %v634 = vadd.f32 %v561, %v628
    %v635 = vadd.f32 %v562, %v630
    %v636 = vadd.f32 %v563, %v629
    %v640 = vrot.slane %v620, 4
    %v641 = vrot.slane %v621, 4
    %v642 = vsel %vm591, %v640, %v641
    %v643 = vrot.slane %v622, 4
    %v644 = vsel %vm591, %v641, %v643
    %v648 = vadd.f32 %v575, %v642
    %v649 = vadd.f32 %v576, %v644
    %v650 = vadd.f32 %v577, %v643
    %s651 = sld [smem:[#allocation8 + $0x2a]]
    %s652 = sld [smem:[#allocation8 + $0x5b]]
    %v653 = vstv %s651
    %v654 = vmul.f32 %v471, %v653
    %v655 = vmul.f32 %v472, %v653
    %v656 = vmul.f32 %v473, %v653
    %v657 = vstv %s652
    %v658 = vmul.f32 %v474, %v657
    %v659 = vmul.f32 %v475, %v657
    %v660 = vmul.f32 %v476, %v657
    %vm664 = vcmask 1041408
    %v665 = vrot.slane %v654, 6
    %v666 = vrot.slane %v655, 6
    %v667 = vsel %vm664, %v665, %v666
    %v668 = vrot.slane %v656, 6
    %v669 = vsel %vm664, %v666, %v668
    %v672 = vadd.f32 %v599, %v667
    %v673 = vadd.f32 %v600, %v669
    %v677 = vrot.slane %v658, 6
    %v678 = vrot.slane %v659, 6
    %v679 = vsel %vm664, %v677, %v678
    %v680 = vrot.slane %v660, 6
    %v681 = vsel %vm664, %v678, %v680
    %v684 = vadd.f32 %v611, %v679
    %v685 = vadd.f32 %v612, %v681
    %s686 = sld [smem:[#allocation8 + $0x1]]
    %s687 = sld [smem:[#allocation8 + $0x32]]
    %v688 = vstv %s686
    %v689 = vmul.f32 %v471, %v688
    %v690 = vmul.f32 %v472, %v688
    %v691 = vstv %s687
    %v692 = vmul.f32 %v474, %v691
    %v693 = vmul.f32 %v475, %v691
    %696 = vrot.lane.b32.xlu0 %v689, 127
    %v697 = vpop.permute.xlu0 %696
    %698 = vrot.lane.b32.xlu0 %v690, 127
    %v699 = vpop.permute.xlu0 %698
    %v702 = vadd.f32 %v672, %v697
    %v703 = vadd.f32 %v673, %v699
    %706 = vrot.lane.b32.xlu0 %v692, 127
    %v707 = vpop.permute.xlu0 %706
    %708 = vrot.lane.b32.xlu0 %v693, 127
    %v709 = vpop.permute.xlu0 %708
    %v712 = vadd.f32 %v684, %v707
    %v713 = vadd.f32 %v685, %v709
    %s714 = sld [smem:[#allocation8 + $0x8]]
    %s715 = sld [smem:[#allocation8 + $0x39]]
    %v716 = vstv %s714
    %v717 = vmul.f32 %v471, %v716
    %v718 = vmul.f32 %v472, %v716
    %v719 = vmul.f32 %v473, %v716
    %v720 = vstv %s715
    %v721 = vmul.f32 %v474, %v720
    %v722 = vmul.f32 %v475, %v720
    %v723 = vmul.f32 %v476, %v720
    %727 = vrot.lane.b32.xlu0 %v717, 127
    %v728 = vpop.permute.xlu0 %727
    %729 = vrot.lane.b32.xlu0 %v718, 127
    %v730 = vpop.permute.xlu0 %729
    %731 = vrot.lane.b32.xlu0 %v719, 127
    %v732 = vpop.permute.xlu0 %731
    %v736 = vadd.f32 %v634, %v728
    %v737 = vadd.f32 %v635, %v730
    %v738 = vadd.f32 %v636, %v732
    %742 = vrot.lane.b32.xlu0 %v721, 127
    %v743 = vpop.permute.xlu0 %742
    %744 = vrot.lane.b32.xlu0 %v722, 127
    %v745 = vpop.permute.xlu0 %744
    %746 = vrot.lane.b32.xlu0 %v723, 127
    %v747 = vpop.permute.xlu0 %746
    %v751 = vadd.f32 %v648, %v743
    %v752 = vadd.f32 %v649, %v745
    %v753 = vadd.f32 %v650, %v747
    %s754 = sld [smem:[#allocation8 + $0xf]]
    %s755 = sld [smem:[#allocation8 + $0x40]]
    %v756 = vstv %s754
    %v757 = vmul.f32 %v471, %v756
    %v758 = vmul.f32 %v472, %v756
    %v759 = vmul.f32 %v473, %v756
    %v760 = vstv %s755
    %v761 = vmul.f32 %v474, %v760
    %v762 = vmul.f32 %v475, %v760
    %v763 = vmul.f32 %v476, %v760
    %v767 = vrot.slane %v757, 2
    %v768 = vrot.slane %v758, 2
    %v769 = vsel %vm518, %v767, %v768
    %v770 = vrot.slane %v759, 2
    %v771 = vsel %vm518, %v768, %v770
    %772 = vrot.lane.b32.xlu0 %v769, 127
    %v773 = vpop.permute.xlu0 %772
    %774 = vrot.lane.b32.xlu0 %v771, 127
    %v775 = vpop.permute.xlu0 %774
    %v778 = vadd.f32 %v702, %v773
    %v779 = vadd.f32 %v703, %v775
    %v783 = vrot.slane %v761, 2
    %v784 = vrot.slane %v762, 2
    %v785 = vsel %vm518, %v783, %v784
    %v786 = vrot.slane %v763, 2
    %v787 = vsel %vm518, %v784, %v786
    %788 = vrot.lane.b32.xlu0 %v785, 127
    %v789 = vpop.permute.xlu0 %788
    %790 = vrot.lane.b32.xlu0 %v787, 127
    %v791 = vpop.permute.xlu0 %790
    %v794 = vadd.f32 %v712, %v789
    %v795 = vadd.f32 %v713, %v791
    %s796 = sld [smem:[#allocation8 + $0x16]]
    %s797 = sld [smem:[#allocation8 + $0x47]]
    %v798 = vstv %s796
    %v799 = vmul.f32 %v471, %v798
    %v800 = vmul.f32 %v472, %v798
    %v801 = vmul.f32 %v473, %v798
    %v802 = vstv %s797
    %v803 = vmul.f32 %v474, %v802
    %v804 = vmul.f32 %v475, %v802
    %v805 = vmul.f32 %v476, %v802
    %v809 = vrot.slane %v799, 2
    %v810 = vrot.slane %v800, 2
    %v811 = vsel %vm518, %v809, %v810
    %v812 = vrot.slane %v801, 2
    %v813 = vsel %vm518, %v810, %v812
    %814 = vrot.lane.b32.xlu0 %v811, 127
    %v815 = vpop.permute.xlu0 %814
    %816 = vrot.lane.b32.xlu0 %v813, 127
    %v817 = vpop.permute.xlu0 %816
    %818 = vrot.lane.b32.xlu0 %v812, 127
    %v819 = vpop.permute.xlu0 %818
    %v823 = vadd.f32 %v736, %v815
    %v824 = vadd.f32 %v737, %v817
    %v825 = vadd.f32 %v738, %v819
    %v829 = vrot.slane %v803, 2
    %v830 = vrot.slane %v804, 2
    %v831 = vsel %vm518, %v829, %v830
    %v832 = vrot.slane %v805, 2
    %v833 = vsel %vm518, %v830, %v832
    %834 = vrot.lane.b32.xlu0 %v831, 127
    %v835 = vpop.permute.xlu0 %834
    %836 = vrot.lane.b32.xlu0 %v833, 127
    %v837 = vpop.permute.xlu0 %836
    %838 = vrot.lane.b32.xlu0 %v832, 127
    %v839 = vpop.permute.xlu0 %838
    %v843 = vadd.f32 %v751, %v835
    %v844 = vadd.f32 %v752, %v837
    %v845 = vadd.f32 %v753, %v839
    %s846 = sld [smem:[#allocation8 + $0x1d]]
    %s847 = sld [smem:[#allocation8 + $0x4e]]
    %v848 = vstv %s846
    %v849 = vmul.f32 %v471, %v848
    %v850 = vmul.f32 %v472, %v848
    %v851 = vmul.f32 %v473, %v848
    %v852 = vstv %s847
    %v853 = vmul.f32 %v474, %v852
    %v854 = vmul.f32 %v475, %v852
    %v855 = vmul.f32 %v476, %v852
    %v859 = vrot.slane %v849, 4
    %v860 = vrot.slane %v850, 4
    %v861 = vsel %vm591, %v859, %v860
    %v862 = vrot.slane %v851, 4
    %v863 = vsel %vm591, %v860, %v862
    %864 = vrot.lane.b32.xlu0 %v861, 127
    %v865 = vpop.permute.xlu0 %864
    %866 = vrot.lane.b32.xlu0 %v863, 127
    %v867 = vpop.permute.xlu0 %866
    %v870 = vadd.f32 %v778, %v865
    %v871 = vadd.f32 %v779, %v867
    %v875 = vrot.slane %v853, 4
    %v876 = vrot.slane %v854, 4
    %v877 = vsel %vm591, %v875, %v876
    %v878 = vrot.slane %v855, 4
    %v879 = vsel %vm591, %v876, %v878
    %880 = vrot.lane.b32.xlu0 %v877, 127
    %v881 = vpop.permute.xlu0 %880
    %882 = vrot.lane.b32.xlu0 %v879, 127
    %v883 = vpop.permute.xlu0 %882
    %v886 = vadd.f32 %v794, %v881
    %v887 = vadd.f32 %v795, %v883
    %s888 = sld [smem:[#allocation8 + $0x24]]
    %s889 = sld [smem:[#allocation8 + $0x55]]
    %v890 = vstv %s888
    %v891 = vmul.f32 %v471, %v890
    %v892 = vmul.f32 %v472, %v890
    %v893 = vmul.f32 %v473, %v890
    %v894 = vstv %s889
    %v895 = vmul.f32 %v474, %v894
    %v896 = vmul.f32 %v475, %v894
    %v897 = vmul.f32 %v476, %v894
    %v901 = vrot.slane %v891, 4
    %v902 = vrot.slane %v892, 4
    %v903 = vsel %vm591, %v901, %v902
    %v904 = vrot.slane %v893, 4
    %v905 = vsel %vm591, %v902, %v904
    %906 = vrot.lane.b32.xlu0 %v903, 127
    %v907 = vpop.permute.xlu0 %906
    %908 = vrot.lane.b32.xlu0 %v905, 127
    %v909 = vpop.permute.xlu0 %908
    %910 = vrot.lane.b32.xlu0 %v904, 127
    %v911 = vpop.permute.xlu0 %910
    %v915 = vadd.f32 %v823, %v907
    %v916 = vadd.f32 %v824, %v909
    %v917 = vadd.f32 %v825, %v911
    %v921 = vrot.slane %v895, 4
    %v922 = vrot.slane %v896, 4
    %v923 = vsel %vm591, %v921, %v922
    %v924 = vrot.slane %v897, 4
    %v925 = vsel %vm591, %v922, %v924
    %926 = vrot.lane.b32.xlu0 %v923, 127
    %v927 = vpop.permute.xlu0 %926
    %928 = vrot.lane.b32.xlu0 %v925, 127
    %v929 = vpop.permute.xlu0 %928
    %930 = vrot.lane.b32.xlu0 %v924, 127
    %v931 = vpop.permute.xlu0 %930
    %v935 = vadd.f32 %v843, %v927
    %v936 = vadd.f32 %v844, %v929
    %v937 = vadd.f32 %v845, %v931
    %s938 = sld [smem:[#allocation8 + $0x2b]]
    %s939 = sld [smem:[#allocation8 + $0x5c]]
    %v940 = vstv %s938
    %v941 = vmul.f32 %v471, %v940
    %v942 = vmul.f32 %v472, %v940
    %v943 = vmul.f32 %v473, %v940
    %v944 = vstv %s939
    %v945 = vmul.f32 %v474, %v944
    %v946 = vmul.f32 %v475, %v944
    %v947 = vmul.f32 %v476, %v944
    %v951 = vrot.slane %v941, 6
    %v952 = vrot.slane %v942, 6
    %v953 = vsel %vm664, %v951, %v952
    %v954 = vrot.slane %v943, 6
    %v955 = vsel %vm664, %v952, %v954
    %956 = vrot.lane.b32.xlu0 %v953, 127
    %v957 = vpop.permute.xlu0 %956
    %958 = vrot.lane.b32.xlu0 %v955, 127
    %v959 = vpop.permute.xlu0 %958
    %v962 = vadd.f32 %v870, %v957
    %v963 = vadd.f32 %v871, %v959
    %v967 = vrot.slane %v945, 6
    %v968 = vrot.slane %v946, 6
    %v969 = vsel %vm664, %v967, %v968
    %v970 = vrot.slane %v947, 6
    %v971 = vsel %vm664, %v968, %v970
    %972 = vrot.lane.b32.xlu0 %v969, 127
    %v973 = vpop.permute.xlu0 %972
    %974 = vrot.lane.b32.xlu0 %v971, 127
    %v975 = vpop.permute.xlu0 %974
    %v978 = vadd.f32 %v886, %v973
    %v979 = vadd.f32 %v887, %v975
    %s980 = sld [smem:[#allocation8 + $0x2]]
    %s981 = sld [smem:[#allocation8 + $0x33]]
    %v982 = vstv %s980
    %v983 = vmul.f32 %v471, %v982
    %v984 = vmul.f32 %v472, %v982
    %v985 = vstv %s981
    %v986 = vmul.f32 %v474, %v985
    %v987 = vmul.f32 %v475, %v985
    %990 = vrot.lane.b32.xlu0 %v983, 126
    %v991 = vpop.permute.xlu0 %990
    %992 = vrot.lane.b32.xlu0 %v984, 126
    %v993 = vpop.permute.xlu0 %992
    %v996 = vadd.f32 %v962, %v991
    %v997 = vadd.f32 %v963, %v993
    %1000 = vrot.lane.b32.xlu0 %v986, 126
    %v1001 = vpop.permute.xlu0 %1000
    %1002 = vrot.lane.b32.xlu0 %v987, 126
    %v1003 = vpop.permute.xlu0 %1002
    %v1006 = vadd.f32 %v978, %v1001
    %v1007 = vadd.f32 %v979, %v1003
    %s1008 = sld [smem:[#allocation8 + $0x9]]
    %s1009 = sld [smem:[#allocation8 + $0x3a]]
    %v1010 = vstv %s1008
    %v1011 = vmul.f32 %v471, %v1010
    %v1012 = vmul.f32 %v472, %v1010
    %v1013 = vmul.f32 %v473, %v1010
    %v1014 = vstv %s1009
    %v1015 = vmul.f32 %v474, %v1014
    %v1016 = vmul.f32 %v475, %v1014
    %v1017 = vmul.f32 %v476, %v1014
    %1021 = vrot.lane.b32.xlu0 %v1011, 126
    %v1022 = vpop.permute.xlu0 %1021
    %1023 = vrot.lane.b32.xlu0 %v1012, 126
    %v1024 = vpop.permute.xlu0 %1023
    %1025 = vrot.lane.b32.xlu0 %v1013, 126
    %v1026 = vpop.permute.xlu0 %1025
    %v1030 = vadd.f32 %v915, %v1022
    %v1031 = vadd.f32 %v916, %v1024
    %v1032 = vadd.f32 %v917, %v1026
    %1036 = vrot.lane.b32.xlu0 %v1015, 126
    %v1037 = vpop.permute.xlu0 %1036
    %1038 = vrot.lane.b32.xlu0 %v1016, 126
    %v1039 = vpop.permute.xlu0 %1038
    %1040 = vrot.lane.b32.xlu0 %v1017, 126
    %v1041 = vpop.permute.xlu0 %1040
    %v1045 = vadd.f32 %v935, %v1037
    %v1046 = vadd.f32 %v936, %v1039
    %v1047 = vadd.f32 %v937, %v1041
    %s1048 = sld [smem:[#allocation8 + $0x10]]
    %s1049 = sld [smem:[#allocation8 + $0x41]]
    %v1050 = vstv %s1048
    %v1051 = vmul.f32 %v471, %v1050
    %v1052 = vmul.f32 %v472, %v1050
    %v1053 = vmul.f32 %v473, %v1050
    %v1054 = vstv %s1049
    %v1055 = vmul.f32 %v474, %v1054
    %v1056 = vmul.f32 %v475, %v1054
    %v1057 = vmul.f32 %v476, %v1054
    %v1061 = vrot.slane %v1051, 2
    %v1062 = vrot.slane %v1052, 2
    %v1063 = vsel %vm518, %v1061, %v1062
    %v1064 = vrot.slane %v1053, 2
    %v1065 = vsel %vm518, %v1062, %v1064
    %1066 = vrot.lane.b32.xlu0 %v1063, 126
    %v1067 = vpop.permute.xlu0 %1066
    %1068 = vrot.lane.b32.xlu0 %v1065, 126
    %v1069 = vpop.permute.xlu0 %1068
    %v1072 = vadd.f32 %v996, %v1067
    %v1073 = vadd.f32 %v997, %v1069
    %v1077 = vrot.slane %v1055, 2
    %v1078 = vrot.slane %v1056, 2
    %v1079 = vsel %vm518, %v1077, %v1078
    %v1080 = vrot.slane %v1057, 2
    %v1081 = vsel %vm518, %v1078, %v1080
    %1082 = vrot.lane.b32.xlu0 %v1079, 126
    %v1083 = vpop.permute.xlu0 %1082
    %1084 = vrot.lane.b32.xlu0 %v1081, 126
    %v1085 = vpop.permute.xlu0 %1084
    %v1088 = vadd.f32 %v1006, %v1083
    %v1089 = vadd.f32 %v1007, %v1085
    %s1090 = sld [smem:[#allocation8 + $0x17]]
    %s1091 = sld [smem:[#allocation8 + $0x48]]
    %v1092 = vstv %s1090
    %v1093 = vmul.f32 %v471, %v1092
    %v1094 = vmul.f32 %v472, %v1092
    %v1095 = vmul.f32 %v473, %v1092
    %v1096 = vstv %s1091
    %v1097 = vmul.f32 %v474, %v1096
    %v1098 = vmul.f32 %v475, %v1096
    %v1099 = vmul.f32 %v476, %v1096
    %v1103 = vrot.slane %v1093, 2
    %v1104 = vrot.slane %v1094, 2
    %v1105 = vsel %vm518, %v1103, %v1104
    %v1106 = vrot.slane %v1095, 2
    %v1107 = vsel %vm518, %v1104, %v1106
    %1108 = vrot.lane.b32.xlu0 %v1105, 126
    %v1109 = vpop.permute.xlu0 %1108
    %1110 = vrot.lane.b32.xlu0 %v1107, 126
    %v1111 = vpop.permute.xlu0 %1110
    %1112 = vrot.lane.b32.xlu0 %v1106, 126
    %v1113 = vpop.permute.xlu0 %1112
    %v1117 = vadd.f32 %v1030, %v1109
    %v1118 = vadd.f32 %v1031, %v1111
    %v1119 = vadd.f32 %v1032, %v1113
    %v1123 = vrot.slane %v1097, 2
    %v1124 = vrot.slane %v1098, 2
    %v1125 = vsel %vm518, %v1123, %v1124
    %v1126 = vrot.slane %v1099, 2
    %v1127 = vsel %vm518, %v1124, %v1126
    %1128 = vrot.lane.b32.xlu0 %v1125, 126
    %v1129 = vpop.permute.xlu0 %1128
    %1130 = vrot.lane.b32.xlu0 %v1127, 126
    %v1131 = vpop.permute.xlu0 %1130
    %1132 = vrot.lane.b32.xlu0 %v1126, 126
    %v1133 = vpop.permute.xlu0 %1132
    %v1137 = vadd.f32 %v1045, %v1129
    %v1138 = vadd.f32 %v1046, %v1131
    %v1139 = vadd.f32 %v1047, %v1133
    %s1140 = sld [smem:[#allocation8 + $0x1e]]
    %s1141 = sld [smem:[#allocation8 + $0x4f]]
    %v1142 = vstv %s1140
    %v1143 = vmul.f32 %v471, %v1142
    %v1144 = vmul.f32 %v472, %v1142
    %v1145 = vmul.f32 %v473, %v1142
    %v1146 = vstv %s1141
    %v1147 = vmul.f32 %v474, %v1146
    %v1148 = vmul.f32 %v475, %v1146
    %v1149 = vmul.f32 %v476, %v1146
    %v1153 = vrot.slane %v1143, 4
    %v1154 = vrot.slane %v1144, 4
    %v1155 = vsel %vm591, %v1153, %v1154
    %v1156 = vrot.slane %v1145, 4
    %v1157 = vsel %vm591, %v1154, %v1156
    %1158 = vrot.lane.b32.xlu0 %v1155, 126
    %v1159 = vpop.permute.xlu0 %1158
    %1160 = vrot.lane.b32.xlu0 %v1157, 126
    %v1161 = vpop.permute.xlu0 %1160
    %v1164 = vadd.f32 %v1072, %v1159
    %v1165 = vadd.f32 %v1073, %v1161
    %v1169 = vrot.slane %v1147, 4
    %v1170 = vrot.slane %v1148, 4
    %v1171 = vsel %vm591, %v1169, %v1170
    %v1172 = vrot.slane %v1149, 4
    %v1173 = vsel %vm591, %v1170, %v1172
    %1174 = vrot.lane.b32.xlu0 %v1171, 126
    %v1175 = vpop.permute.xlu0 %1174
    %1176 = vrot.lane.b32.xlu0 %v1173, 126
    %v1177 = vpop.permute.xlu0 %1176
    %v1180 = vadd.f32 %v1088, %v1175
    %v1181 = vadd.f32 %v1089, %v1177
    %s1182 = sld [smem:[#allocation8 + $0x25]]
    %s1183 = sld [smem:[#allocation8 + $0x56]]
    %v1184 = vstv %s1182
    %v1185 = vmul.f32 %v471, %v1184
    %v1186 = vmul.f32 %v472, %v1184
    %v1187 = vmul.f32 %v473, %v1184
    %v1188 = vstv %s1183
    %v1189 = vmul.f32 %v474, %v1188
    %v1190 = vmul.f32 %v475, %v1188
    %v1191 = vmul.f32 %v476, %v1188
    %v1195 = vrot.slane %v1185, 4
    %v1196 = vrot.slane %v1186, 4
    %v1197 = vsel %vm591, %v1195, %v1196
    %v1198 = vrot.slane %v1187, 4
    %v1199 = vsel %vm591, %v1196, %v1198
    %1200 = vrot.lane.b32.xlu0 %v1197, 126
    %v1201 = vpop.permute.xlu0 %1200
    %1202 = vrot.lane.b32.xlu0 %v1199, 126
    %v1203 = vpop.permute.xlu0 %1202
    %1204 = vrot.lane.b32.xlu0 %v1198, 126
    %v1205 = vpop.permute.xlu0 %1204
    %v1209 = vadd.f32 %v1117, %v1201
    %v1210 = vadd.f32 %v1118, %v1203
    %v1211 = vadd.f32 %v1119, %v1205
    %v1215 = vrot.slane %v1189, 4
    %v1216 = vrot.slane %v1190, 4
    %v1217 = vsel %vm591, %v1215, %v1216
    %v1218 = vrot.slane %v1191, 4
    %v1219 = vsel %vm591, %v1216, %v1218
    %1220 = vrot.lane.b32.xlu0 %v1217, 126
    %v1221 = vpop.permute.xlu0 %1220
    %1222 = vrot.lane.b32.xlu0 %v1219, 126
    %v1223 = vpop.permute.xlu0 %1222
    %1224 = vrot.lane.b32.xlu0 %v1218, 126
    %v1225 = vpop.permute.xlu0 %1224
    %v1229 = vadd.f32 %v1137, %v1221
    %v1230 = vadd.f32 %v1138, %v1223
    %v1231 = vadd.f32 %v1139, %v1225
    %s1232 = sld [smem:[#allocation8 + $0x2c]]
    %s1233 = sld [smem:[#allocation8 + $0x5d]]
    %v1234 = vstv %s1232
    %v1235 = vmul.f32 %v471, %v1234
    %v1236 = vmul.f32 %v472, %v1234
    %v1237 = vmul.f32 %v473, %v1234
    %v1238 = vstv %s1233
    %v1239 = vmul.f32 %v474, %v1238
    %v1240 = vmul.f32 %v475, %v1238
    %v1241 = vmul.f32 %v476, %v1238
    %v1245 = vrot.slane %v1235, 6
    %v1246 = vrot.slane %v1236, 6
    %v1247 = vsel %vm664, %v1245, %v1246
    %v1248 = vrot.slane %v1237, 6
    %v1249 = vsel %vm664, %v1246, %v1248
    %1250 = vrot.lane.b32.xlu0 %v1247, 126
    %v1251 = vpop.permute.xlu0 %1250
    %1252 = vrot.lane.b32.xlu0 %v1249, 126
    %v1253 = vpop.permute.xlu0 %1252
    %v1256 = vadd.f32 %v1164, %v1251
    %v1257 = vadd.f32 %v1165, %v1253
    %v1261 = vrot.slane %v1239, 6
    %v1262 = vrot.slane %v1240, 6
    %v1263 = vsel %vm664, %v1261, %v1262
    %v1264 = vrot.slane %v1241, 6
    %v1265 = vsel %vm664, %v1262, %v1264
    %1266 = vrot.lane.b32.xlu0 %v1263, 126
    %v1267 = vpop.permute.xlu0 %1266
    %1268 = vrot.lane.b32.xlu0 %v1265, 126
    %v1269 = vpop.permute.xlu0 %1268
    %v1272 = vadd.f32 %v1180, %v1267
    %v1273 = vadd.f32 %v1181, %v1269
    %s1274 = sld [smem:[#allocation8 + $0x3]]
    %s1275 = sld [smem:[#allocation8 + $0x34]]
    %v1276 = vstv %s1274
    %v1277 = vmul.f32 %v471, %v1276
    %v1278 = vmul.f32 %v472, %v1276
    %v1279 = vstv %s1275
    %v1280 = vmul.f32 %v474, %v1279
    %v1281 = vmul.f32 %v475, %v1279
    %1284 = vrot.lane.b32.xlu0 %v1277, 125
    %v1285 = vpop.permute.xlu0 %1284
    %1286 = vrot.lane.b32.xlu0 %v1278, 125
    %v1287 = vpop.permute.xlu0 %1286
    %v1290 = vadd.f32 %v1256, %v1285
    %v1291 = vadd.f32 %v1257, %v1287
    %1294 = vrot.lane.b32.xlu0 %v1280, 125
    %v1295 = vpop.permute.xlu0 %1294
    %1296 = vrot.lane.b32.xlu0 %v1281, 125
    %v1297 = vpop.permute.xlu0 %1296
    %v1300 = vadd.f32 %v1272, %v1295
    %v1301 = vadd.f32 %v1273, %v1297
    %s1302 = sld [smem:[#allocation8 + $0xa]]
    %s1303 = sld [smem:[#allocation8 + $0x3b]]
    %v1304 = vstv %s1302
    %v1305 = vmul.f32 %v471, %v1304
    %v1306 = vmul.f32 %v472, %v1304
    %v1307 = vmul.f32 %v473, %v1304
    %v1308 = vstv %s1303
    %v1309 = vmul.f32 %v474, %v1308
    %v1310 = vmul.f32 %v475, %v1308
    %v1311 = vmul.f32 %v476, %v1308
    %1315 = vrot.lane.b32.xlu0 %v1305, 125
    %v1316 = vpop.permute.xlu0 %1315
    %1317 = vrot.lane.b32.xlu0 %v1306, 125
    %v1318 = vpop.permute.xlu0 %1317
    %1319 = vrot.lane.b32.xlu0 %v1307, 125
    %v1320 = vpop.permute.xlu0 %1319
    %v1324 = vadd.f32 %v1209, %v1316
    %v1325 = vadd.f32 %v1210, %v1318
    %v1326 = vadd.f32 %v1211, %v1320
    %1330 = vrot.lane.b32.xlu0 %v1309, 125
    %v1331 = vpop.permute.xlu0 %1330
    %1332 = vrot.lane.b32.xlu0 %v1310, 125
    %v1333 = vpop.permute.xlu0 %1332
    %1334 = vrot.lane.b32.xlu0 %v1311, 125
    %v1335 = vpop.permute.xlu0 %1334
    %v1339 = vadd.f32 %v1229, %v1331
    %v1340 = vadd.f32 %v1230, %v1333
    %v1341 = vadd.f32 %v1231, %v1335
    %s1342 = sld [smem:[#allocation8 + $0x11]]
    %s1343 = sld [smem:[#allocation8 + $0x42]]
    %v1344 = vstv %s1342
    %v1345 = vmul.f32 %v471, %v1344
    %v1346 = vmul.f32 %v472, %v1344
    %v1347 = vmul.f32 %v473, %v1344
    %v1348 = vstv %s1343
    %v1349 = vmul.f32 %v474, %v1348
    %v1350 = vmul.f32 %v475, %v1348
    %v1351 = vmul.f32 %v476, %v1348
    %v1355 = vrot.slane %v1345, 2
    %v1356 = vrot.slane %v1346, 2
    %v1357 = vsel %vm518, %v1355, %v1356
    %v1358 = vrot.slane %v1347, 2
    %v1359 = vsel %vm518, %v1356, %v1358
    %1360 = vrot.lane.b32.xlu0 %v1357, 125
    %v1361 = vpop.permute.xlu0 %1360
    %1362 = vrot.lane.b32.xlu0 %v1359, 125
    %v1363 = vpop.permute.xlu0 %1362
    %v1366 = vadd.f32 %v1290, %v1361
    %v1367 = vadd.f32 %v1291, %v1363
    %v1371 = vrot.slane %v1349, 2
    %v1372 = vrot.slane %v1350, 2
    %v1373 = vsel %vm518, %v1371, %v1372
    %v1374 = vrot.slane %v1351, 2
    %v1375 = vsel %vm518, %v1372, %v1374
    %1376 = vrot.lane.b32.xlu0 %v1373, 125
    %v1377 = vpop.permute.xlu0 %1376
    %1378 = vrot.lane.b32.xlu0 %v1375, 125
    %v1379 = vpop.permute.xlu0 %1378
    %v1382 = vadd.f32 %v1300, %v1377
    %v1383 = vadd.f32 %v1301, %v1379
    %s1384 = sld [smem:[#allocation8 + $0x18]]
    %s1385 = sld [smem:[#allocation8 + $0x49]]
    %v1386 = vstv %s1384
    %v1387 = vmul.f32 %v471, %v1386
    %v1388 = vmul.f32 %v472, %v1386
    %v1389 = vmul.f32 %v473, %v1386
    %v1390 = vstv %s1385
    %v1391 = vmul.f32 %v474, %v1390
    %v1392 = vmul.f32 %v475, %v1390
    %v1393 = vmul.f32 %v476, %v1390
    %v1397 = vrot.slane %v1387, 2
    %v1398 = vrot.slane %v1388, 2
    %v1399 = vsel %vm518, %v1397, %v1398
    %v1400 = vrot.slane %v1389, 2
    %v1401 = vsel %vm518, %v1398, %v1400
    %1402 = vrot.lane.b32.xlu0 %v1399, 125
    %v1403 = vpop.permute.xlu0 %1402
    %1404 = vrot.lane.b32.xlu0 %v1401, 125
    %v1405 = vpop.permute.xlu0 %1404
    %1406 = vrot.lane.b32.xlu0 %v1400, 125
    %v1407 = vpop.permute.xlu0 %1406
    %v1411 = vadd.f32 %v1324, %v1403
    %v1412 = vadd.f32 %v1325, %v1405
    %v1413 = vadd.f32 %v1326, %v1407
    %v1417 = vrot.slane %v1391, 2
    %v1418 = vrot.slane %v1392, 2
    %v1419 = vsel %vm518, %v1417, %v1418
    %v1420 = vrot.slane %v1393, 2
    %v1421 = vsel %vm518, %v1418, %v1420
    %1422 = vrot.lane.b32.xlu0 %v1419, 125
    %v1423 = vpop.permute.xlu0 %1422
    %1424 = vrot.lane.b32.xlu0 %v1421, 125
    %v1425 = vpop.permute.xlu0 %1424
    %1426 = vrot.lane.b32.xlu0 %v1420, 125
    %v1427 = vpop.permute.xlu0 %1426
    %v1431 = vadd.f32 %v1339, %v1423
    %v1432 = vadd.f32 %v1340, %v1425
    %v1433 = vadd.f32 %v1341, %v1427
    %s1434 = sld [smem:[#allocation8 + $0x1f]]
    %s1435 = sld [smem:[#allocation8 + $0x50]]
    %v1436 = vstv %s1434
    %v1437 = vmul.f32 %v471, %v1436
    %v1438 = vmul.f32 %v472, %v1436
    %v1439 = vmul.f32 %v473, %v1436
    %v1440 = vstv %s1435
    %v1441 = vmul.f32 %v474, %v1440
    %v1442 = vmul.f32 %v475, %v1440
    %v1443 = vmul.f32 %v476, %v1440
    %v1447 = vrot.slane %v1437, 4
    %v1448 = vrot.slane %v1438, 4
    %v1449 = vsel %vm591, %v1447, %v1448
    %v1450 = vrot.slane %v1439, 4
    %v1451 = vsel %vm591, %v1448, %v1450
    %1452 = vrot.lane.b32.xlu0 %v1449, 125
    %v1453 = vpop.permute.xlu0 %1452
    %1454 = vrot.lane.b32.xlu0 %v1451, 125
    %v1455 = vpop.permute.xlu0 %1454
    %v1458 = vadd.f32 %v1366, %v1453
    %v1459 = vadd.f32 %v1367, %v1455
    %v1463 = vrot.slane %v1441, 4
    %v1464 = vrot.slane %v1442, 4
    %v1465 = vsel %vm591, %v1463, %v1464
    %v1466 = vrot.slane %v1443, 4
    %v1467 = vsel %vm591, %v1464, %v1466
    %1468 = vrot.lane.b32.xlu0 %v1465, 125
    %v1469 = vpop.permute.xlu0 %1468
    %1470 = vrot.lane.b32.xlu0 %v1467, 125
    %v1471 = vpop.permute.xlu0 %1470
    %v1474 = vadd.f32 %v1382, %v1469
    %v1475 = vadd.f32 %v1383, %v1471
    %s1476 = sld [smem:[#allocation8 + $0x26]]
    %s1477 = sld [smem:[#allocation8 + $0x57]]
    %v1478 = vstv %s1476
    %v1479 = vmul.f32 %v471, %v1478
    %v1480 = vmul.f32 %v472, %v1478
    %v1481 = vmul.f32 %v473, %v1478
    %v1482 = vstv %s1477
    %v1483 = vmul.f32 %v474, %v1482
    %v1484 = vmul.f32 %v475, %v1482
    %v1485 = vmul.f32 %v476, %v1482
    %v1489 = vrot.slane %v1479, 4
    %v1490 = vrot.slane %v1480, 4
    %v1491 = vsel %vm591, %v1489, %v1490
    %v1492 = vrot.slane %v1481, 4
    %v1493 = vsel %vm591, %v1490, %v1492
    %1494 = vrot.lane.b32.xlu0 %v1491, 125
    %v1495 = vpop.permute.xlu0 %1494
    %1496 = vrot.lane.b32.xlu0 %v1493, 125
    %v1497 = vpop.permute.xlu0 %1496
    %1498 = vrot.lane.b32.xlu0 %v1492, 125
    %v1499 = vpop.permute.xlu0 %1498
    %v1503 = vadd.f32 %v1411, %v1495
    %v1504 = vadd.f32 %v1412, %v1497
    %v1505 = vadd.f32 %v1413, %v1499
    %v1509 = vrot.slane %v1483, 4
    %v1510 = vrot.slane %v1484, 4
    %v1511 = vsel %vm591, %v1509, %v1510
    %v1512 = vrot.slane %v1485, 4
    %v1513 = vsel %vm591, %v1510, %v1512
    %1514 = vrot.lane.b32.xlu0 %v1511, 125
    %v1515 = vpop.permute.xlu0 %1514
    %1516 = vrot.lane.b32.xlu0 %v1513, 125
    %v1517 = vpop.permute.xlu0 %1516
    %1518 = vrot.lane.b32.xlu0 %v1512, 125
    %v1519 = vpop.permute.xlu0 %1518
    %v1523 = vadd.f32 %v1431, %v1515
    %v1524 = vadd.f32 %v1432, %v1517
    %v1525 = vadd.f32 %v1433, %v1519
    %s1526 = sld [smem:[#allocation8 + $0x2d]]
    %s1527 = sld [smem:[#allocation8 + $0x5e]]
    %v1528 = vstv %s1526
    %v1529 = vmul.f32 %v471, %v1528
    %v1530 = vmul.f32 %v472, %v1528
    %v1531 = vmul.f32 %v473, %v1528
    %v1532 = vstv %s1527
    %v1533 = vmul.f32 %v474, %v1532
    %v1534 = vmul.f32 %v475, %v1532
    %v1535 = vmul.f32 %v476, %v1532
    %v1539 = vrot.slane %v1529, 6
    %v1540 = vrot.slane %v1530, 6
    %v1541 = vsel %vm664, %v1539, %v1540
    %v1542 = vrot.slane %v1531, 6
    %v1543 = vsel %vm664, %v1540, %v1542
    %1544 = vrot.lane.b32.xlu0 %v1541, 125
    %v1545 = vpop.permute.xlu0 %1544
    %1546 = vrot.lane.b32.xlu0 %v1543, 125
    %v1547 = vpop.permute.xlu0 %1546
    %v1550 = vadd.f32 %v1458, %v1545
    %v1551 = vadd.f32 %v1459, %v1547
    %v1555 = vrot.slane %v1533, 6
    %v1556 = vrot.slane %v1534, 6
    %v1557 = vsel %vm664, %v1555, %v1556
    %v1558 = vrot.slane %v1535, 6
    %v1559 = vsel %vm664, %v1556, %v1558
    %1560 = vrot.lane.b32.xlu0 %v1557, 125
    %v1561 = vpop.permute.xlu0 %1560
    %1562 = vrot.lane.b32.xlu0 %v1559, 125
    %v1563 = vpop.permute.xlu0 %1562
    %v1566 = vadd.f32 %v1474, %v1561
    %v1567 = vadd.f32 %v1475, %v1563
    %s1568 = sld [smem:[#allocation8 + $0x4]]
    %s1569 = sld [smem:[#allocation8 + $0x35]]
    %v1570 = vstv %s1568
    %v1571 = vmul.f32 %v471, %v1570
    %v1572 = vmul.f32 %v472, %v1570
    %v1573 = vstv %s1569
    %v1574 = vmul.f32 %v474, %v1573
    %v1575 = vmul.f32 %v475, %v1573
    %1578 = vrot.lane.b32.xlu0 %v1571, 124
    %v1579 = vpop.permute.xlu0 %1578
    %1580 = vrot.lane.b32.xlu0 %v1572, 124
    %v1581 = vpop.permute.xlu0 %1580
    %v1584 = vadd.f32 %v1550, %v1579
    %v1585 = vadd.f32 %v1551, %v1581
    %1588 = vrot.lane.b32.xlu0 %v1574, 124
    %v1589 = vpop.permute.xlu0 %1588
    %1590 = vrot.lane.b32.xlu0 %v1575, 124
    %v1591 = vpop.permute.xlu0 %1590
    %v1594 = vadd.f32 %v1566, %v1589
    %v1595 = vadd.f32 %v1567, %v1591
    %s1596 = sld [smem:[#allocation8 + $0xb]]
    %s1597 = sld [smem:[#allocation8 + $0x3c]]
    %v1598 = vstv %s1596
    %v1599 = vmul.f32 %v471, %v1598
    %v1600 = vmul.f32 %v472, %v1598
    %v1601 = vmul.f32 %v473, %v1598
    %v1602 = vstv %s1597
    %v1603 = vmul.f32 %v474, %v1602
    %v1604 = vmul.f32 %v475, %v1602
    %v1605 = vmul.f32 %v476, %v1602
    %1609 = vrot.lane.b32.xlu0 %v1599, 124
    %v1610 = vpop.permute.xlu0 %1609
    %1611 = vrot.lane.b32.xlu0 %v1600, 124
    %v1612 = vpop.permute.xlu0 %1611
    %1613 = vrot.lane.b32.xlu0 %v1601, 124
    %v1614 = vpop.permute.xlu0 %1613
    %v1618 = vadd.f32 %v1503, %v1610
    %v1619 = vadd.f32 %v1504, %v1612
    %v1620 = vadd.f32 %v1505, %v1614
    %1624 = vrot.lane.b32.xlu0 %v1603, 124
    %v1625 = vpop.permute.xlu0 %1624
    %1626 = vrot.lane.b32.xlu0 %v1604, 124
    %v1627 = vpop.permute.xlu0 %1626
    %1628 = vrot.lane.b32.xlu0 %v1605, 124
    %v1629 = vpop.permute.xlu0 %1628
    %v1633 = vadd.f32 %v1523, %v1625
    %v1634 = vadd.f32 %v1524, %v1627
    %v1635 = vadd.f32 %v1525, %v1629
    %s1636 = sld [smem:[#allocation8 + $0x12]]
    %s1637 = sld [smem:[#allocation8 + $0x43]]
    %v1638 = vstv %s1636
    %v1639 = vmul.f32 %v471, %v1638
    %v1640 = vmul.f32 %v472, %v1638
    %v1641 = vmul.f32 %v473, %v1638
    %v1642 = vstv %s1637
    %v1643 = vmul.f32 %v474, %v1642
    %v1644 = vmul.f32 %v475, %v1642
    %v1645 = vmul.f32 %v476, %v1642
    %v1649 = vrot.slane %v1639, 2
    %v1650 = vrot.slane %v1640, 2
    %v1651 = vsel %vm518, %v1649, %v1650
    %v1652 = vrot.slane %v1641, 2
    %v1653 = vsel %vm518, %v1650, %v1652
    %1654 = vrot.lane.b32.xlu0 %v1651, 124
    %v1655 = vpop.permute.xlu0 %1654
    %1656 = vrot.lane.b32.xlu0 %v1653, 124
    %v1657 = vpop.permute.xlu0 %1656
    %v1660 = vadd.f32 %v1584, %v1655
    %v1661 = vadd.f32 %v1585, %v1657
    %v1665 = vrot.slane %v1643, 2
    %v1666 = vrot.slane %v1644, 2
    %v1667 = vsel %vm518, %v1665, %v1666
    %v1668 = vrot.slane %v1645, 2
    %v1669 = vsel %vm518, %v1666, %v1668
    %1670 = vrot.lane.b32.xlu0 %v1667, 124
    %v1671 = vpop.permute.xlu0 %1670
    %1672 = vrot.lane.b32.xlu0 %v1669, 124
    %v1673 = vpop.permute.xlu0 %1672
    %v1676 = vadd.f32 %v1594, %v1671
    %v1677 = vadd.f32 %v1595, %v1673
    %s1678 = sld [smem:[#allocation8 + $0x19]]
    %s1679 = sld [smem:[#allocation8 + $0x4a]]
    %v1680 = vstv %s1678
    %v1681 = vmul.f32 %v471, %v1680
    %v1682 = vmul.f32 %v472, %v1680
    %v1683 = vmul.f32 %v473, %v1680
    %v1684 = vstv %s1679
    %v1685 = vmul.f32 %v474, %v1684
    %v1686 = vmul.f32 %v475, %v1684
    %v1687 = vmul.f32 %v476, %v1684
    %v1691 = vrot.slane %v1681, 2
    %v1692 = vrot.slane %v1682, 2
    %v1693 = vsel %vm518, %v1691, %v1692
    %v1694 = vrot.slane %v1683, 2
    %v1695 = vsel %vm518, %v1692, %v1694
    %1696 = vrot.lane.b32.xlu0 %v1693, 124
    %v1697 = vpop.permute.xlu0 %1696
    %1698 = vrot.lane.b32.xlu0 %v1695, 124
    %v1699 = vpop.permute.xlu0 %1698
    %1700 = vrot.lane.b32.xlu0 %v1694, 124
    %v1701 = vpop.permute.xlu0 %1700
    %v1705 = vadd.f32 %v1618, %v1697
    %v1706 = vadd.f32 %v1619, %v1699
    %v1707 = vadd.f32 %v1620, %v1701
    %v1711 = vrot.slane %v1685, 2
    %v1712 = vrot.slane %v1686, 2
    %v1713 = vsel %vm518, %v1711, %v1712
    %v1714 = vrot.slane %v1687, 2
    %v1715 = vsel %vm518, %v1712, %v1714
    %1716 = vrot.lane.b32.xlu0 %v1713, 124
    %v1717 = vpop.permute.xlu0 %1716
    %1718 = vrot.lane.b32.xlu0 %v1715, 124
    %v1719 = vpop.permute.xlu0 %1718
    %1720 = vrot.lane.b32.xlu0 %v1714, 124
    %v1721 = vpop.permute.xlu0 %1720
    %v1725 = vadd.f32 %v1633, %v1717
    %v1726 = vadd.f32 %v1634, %v1719
    %v1727 = vadd.f32 %v1635, %v1721
    %s1728 = sld [smem:[#allocation8 + $0x20]]
    %s1729 = sld [smem:[#allocation8 + $0x51]]
    %v1730 = vstv %s1728
    %v1731 = vmul.f32 %v471, %v1730
    %v1732 = vmul.f32 %v472, %v1730
    %v1733 = vmul.f32 %v473, %v1730
    %v1734 = vstv %s1729
    %v1735 = vmul.f32 %v474, %v1734
    %v1736 = vmul.f32 %v475, %v1734
    %v1737 = vmul.f32 %v476, %v1734
    %v1741 = vrot.slane %v1731, 4
    %v1742 = vrot.slane %v1732, 4
    %v1743 = vsel %vm591, %v1741, %v1742
    %v1744 = vrot.slane %v1733, 4
    %v1745 = vsel %vm591, %v1742, %v1744
    %1746 = vrot.lane.b32.xlu0 %v1743, 124
    %v1747 = vpop.permute.xlu0 %1746
    %1748 = vrot.lane.b32.xlu0 %v1745, 124
    %v1749 = vpop.permute.xlu0 %1748
    %v1752 = vadd.f32 %v1660, %v1747
    %v1753 = vadd.f32 %v1661, %v1749
    %v1757 = vrot.slane %v1735, 4
    %v1758 = vrot.slane %v1736, 4
    %v1759 = vsel %vm591, %v1757, %v1758
    %v1760 = vrot.slane %v1737, 4
    %v1761 = vsel %vm591, %v1758, %v1760
    %1762 = vrot.lane.b32.xlu0 %v1759, 124
    %v1763 = vpop.permute.xlu0 %1762
    %1764 = vrot.lane.b32.xlu0 %v1761, 124
    %v1765 = vpop.permute.xlu0 %1764
    %v1768 = vadd.f32 %v1676, %v1763
    %v1769 = vadd.f32 %v1677, %v1765
    %s1770 = sld [smem:[#allocation8 + $0x27]]
    %s1771 = sld [smem:[#allocation8 + $0x58]]
    %v1772 = vstv %s1770
    %v1773 = vmul.f32 %v471, %v1772
    %v1774 = vmul.f32 %v472, %v1772
    %v1775 = vmul.f32 %v473, %v1772
    %v1776 = vstv %s1771
    %v1777 = vmul.f32 %v474, %v1776
    %v1778 = vmul.f32 %v475, %v1776
    %v1779 = vmul.f32 %v476, %v1776
    %v1783 = vrot.slane %v1773, 4
    %v1784 = vrot.slane %v1774, 4
    %v1785 = vsel %vm591, %v1783, %v1784
    %v1786 = vrot.slane %v1775, 4
    %v1787 = vsel %vm591, %v1784, %v1786
    %1788 = vrot.lane.b32.xlu0 %v1785, 124
    %v1789 = vpop.permute.xlu0 %1788
    %1790 = vrot.lane.b32.xlu0 %v1787, 124
    %v1791 = vpop.permute.xlu0 %1790
    %1792 = vrot.lane.b32.xlu0 %v1786, 124
    %v1793 = vpop.permute.xlu0 %1792
    %v1797 = vadd.f32 %v1705, %v1789
    %v1798 = vadd.f32 %v1706, %v1791
    %v1799 = vadd.f32 %v1707, %v1793
    %v1803 = vrot.slane %v1777, 4
    %v1804 = vrot.slane %v1778, 4
    %v1805 = vsel %vm591, %v1803, %v1804
    %v1806 = vrot.slane %v1779, 4
    %v1807 = vsel %vm591, %v1804, %v1806
    %1808 = vrot.lane.b32.xlu0 %v1805, 124
    %v1809 = vpop.permute.xlu0 %1808
    %1810 = vrot.lane.b32.xlu0 %v1807, 124
    %v1811 = vpop.permute.xlu0 %1810
    %1812 = vrot.lane.b32.xlu0 %v1806, 124
    %v1813 = vpop.permute.xlu0 %1812
    %v1817 = vadd.f32 %v1725, %v1809
    %v1818 = vadd.f32 %v1726, %v1811
    %v1819 = vadd.f32 %v1727, %v1813
    %s1820 = sld [smem:[#allocation8 + $0x2e]]
    %s1821 = sld [smem:[#allocation8 + $0x5f]]
    %v1822 = vstv %s1820
    %v1823 = vmul.f32 %v471, %v1822
    %v1824 = vmul.f32 %v472, %v1822
    %v1825 = vmul.f32 %v473, %v1822
    %v1826 = vstv %s1821
    %v1827 = vmul.f32 %v474, %v1826
    %v1828 = vmul.f32 %v475, %v1826
    %v1829 = vmul.f32 %v476, %v1826
    %v1833 = vrot.slane %v1823, 6
    %v1834 = vrot.slane %v1824, 6
    %v1835 = vsel %vm664, %v1833, %v1834
    %v1836 = vrot.slane %v1825, 6
    %v1837 = vsel %vm664, %v1834, %v1836
    %1838 = vrot.lane.b32.xlu0 %v1835, 124
    %v1839 = vpop.permute.xlu0 %1838
    %1840 = vrot.lane.b32.xlu0 %v1837, 124
    %v1841 = vpop.permute.xlu0 %1840
    %v1844 = vadd.f32 %v1752, %v1839
    %v1845 = vadd.f32 %v1753, %v1841
    %v1849 = vrot.slane %v1827, 6
    %v1850 = vrot.slane %v1828, 6
    %v1851 = vsel %vm664, %v1849, %v1850
    %v1852 = vrot.slane %v1829, 6
    %v1853 = vsel %vm664, %v1850, %v1852
    %1854 = vrot.lane.b32.xlu0 %v1851, 124
    %v1855 = vpop.permute.xlu0 %1854
    %1856 = vrot.lane.b32.xlu0 %v1853, 124
    %v1857 = vpop.permute.xlu0 %1856
    %v1860 = vadd.f32 %v1768, %v1855
    %v1861 = vadd.f32 %v1769, %v1857
    %s1862 = sld [smem:[#allocation8 + $0x5]]
    %s1863 = sld [smem:[#allocation8 + $0x36]]
    %v1864 = vstv %s1862
    %v1865 = vmul.f32 %v471, %v1864
    %v1866 = vmul.f32 %v472, %v1864
    %v1867 = vstv %s1863
    %v1868 = vmul.f32 %v474, %v1867
    %v1869 = vmul.f32 %v475, %v1867
    %1872 = vrot.lane.b32.xlu0 %v1865, 123
    %v1873 = vpop.permute.xlu0 %1872
    %1874 = vrot.lane.b32.xlu0 %v1866, 123
    %v1875 = vpop.permute.xlu0 %1874
    %v1878 = vadd.f32 %v1844, %v1873
    %v1879 = vadd.f32 %v1845, %v1875
    %1882 = vrot.lane.b32.xlu0 %v1868, 123
    %v1883 = vpop.permute.xlu0 %1882
    %1884 = vrot.lane.b32.xlu0 %v1869, 123
    %v1885 = vpop.permute.xlu0 %1884
    %v1888 = vadd.f32 %v1860, %v1883
    %v1889 = vadd.f32 %v1861, %v1885
    %s1890 = sld [smem:[#allocation8 + $0xc]]
    %s1891 = sld [smem:[#allocation8 + $0x3d]]
    %v1892 = vstv %s1890
    %v1893 = vmul.f32 %v471, %v1892
    %v1894 = vmul.f32 %v472, %v1892
    %v1895 = vmul.f32 %v473, %v1892
    %v1896 = vstv %s1891
    %v1897 = vmul.f32 %v474, %v1896
    %v1898 = vmul.f32 %v475, %v1896
    %v1899 = vmul.f32 %v476, %v1896
    %1903 = vrot.lane.b32.xlu0 %v1893, 123
    %v1904 = vpop.permute.xlu0 %1903
    %1905 = vrot.lane.b32.xlu0 %v1894, 123
    %v1906 = vpop.permute.xlu0 %1905
    %1907 = vrot.lane.b32.xlu0 %v1895, 123
    %v1908 = vpop.permute.xlu0 %1907
    %v1912 = vadd.f32 %v1797, %v1904
    %v1913 = vadd.f32 %v1798, %v1906
    %v1914 = vadd.f32 %v1799, %v1908
    %1918 = vrot.lane.b32.xlu0 %v1897, 123
    %v1919 = vpop.permute.xlu0 %1918
    %1920 = vrot.lane.b32.xlu0 %v1898, 123
    %v1921 = vpop.permute.xlu0 %1920
    %1922 = vrot.lane.b32.xlu0 %v1899, 123
    %v1923 = vpop.permute.xlu0 %1922
    %v1927 = vadd.f32 %v1817, %v1919
    %v1928 = vadd.f32 %v1818, %v1921
    %v1929 = vadd.f32 %v1819, %v1923
    %s1930 = sld [smem:[#allocation8 + $0x13]]
    %s1931 = sld [smem:[#allocation8 + $0x44]]
    %v1932 = vstv %s1930
    %v1933 = vmul.f32 %v471, %v1932
    %v1934 = vmul.f32 %v472, %v1932
    %v1935 = vmul.f32 %v473, %v1932
    %v1936 = vstv %s1931
    %v1937 = vmul.f32 %v474, %v1936
    %v1938 = vmul.f32 %v475, %v1936
    %v1939 = vmul.f32 %v476, %v1936
    %v1943 = vrot.slane %v1933, 2
    %v1944 = vrot.slane %v1934, 2
    %v1945 = vsel %vm518, %v1943, %v1944
    %v1946 = vrot.slane %v1935, 2
    %v1947 = vsel %vm518, %v1944, %v1946
    %1948 = vrot.lane.b32.xlu0 %v1945, 123
    %v1949 = vpop.permute.xlu0 %1948
    %1950 = vrot.lane.b32.xlu0 %v1947, 123
    %v1951 = vpop.permute.xlu0 %1950
    %v1954 = vadd.f32 %v1878, %v1949
    %v1955 = vadd.f32 %v1879, %v1951
    %v1959 = vrot.slane %v1937, 2
    %v1960 = vrot.slane %v1938, 2
    %v1961 = vsel %vm518, %v1959, %v1960
    %v1962 = vrot.slane %v1939, 2
    %v1963 = vsel %vm518, %v1960, %v1962
    %1964 = vrot.lane.b32.xlu0 %v1961, 123
    %v1965 = vpop.permute.xlu0 %1964
    %1966 = vrot.lane.b32.xlu0 %v1963, 123
    %v1967 = vpop.permute.xlu0 %1966
    %v1970 = vadd.f32 %v1888, %v1965
    %v1971 = vadd.f32 %v1889, %v1967
    %s1972 = sld [smem:[#allocation8 + $0x1a]]
    %s1973 = sld [smem:[#allocation8 + $0x4b]]
    %v1974 = vstv %s1972
    %v1975 = vmul.f32 %v471, %v1974
    %v1976 = vmul.f32 %v472, %v1974
    %v1977 = vmul.f32 %v473, %v1974
    %v1978 = vstv %s1973
    %v1979 = vmul.f32 %v474, %v1978
    %v1980 = vmul.f32 %v475, %v1978
    %v1981 = vmul.f32 %v476, %v1978
    %v1985 = vrot.slane %v1975, 2
    %v1986 = vrot.slane %v1976, 2
    %v1987 = vsel %vm518, %v1985, %v1986
    %v1988 = vrot.slane %v1977, 2
    %v1989 = vsel %vm518, %v1986, %v1988
    %1990 = vrot.lane.b32.xlu0 %v1987, 123
    %v1991 = vpop.permute.xlu0 %1990
    %1992 = vrot.lane.b32.xlu0 %v1989, 123
    %v1993 = vpop.permute.xlu0 %1992
    %1994 = vrot.lane.b32.xlu0 %v1988, 123
    %v1995 = vpop.permute.xlu0 %1994
    %v1999 = vadd.f32 %v1912, %v1991
    %v2000 = vadd.f32 %v1913, %v1993
    %v2001 = vadd.f32 %v1914, %v1995
    %v2005 = vrot.slane %v1979, 2
    %v2006 = vrot.slane %v1980, 2
    %v2007 = vsel %vm518, %v2005, %v2006
    %v2008 = vrot.slane %v1981, 2
    %v2009 = vsel %vm518, %v2006, %v2008
    %2010 = vrot.lane.b32.xlu0 %v2007, 123
    %v2011 = vpop.permute.xlu0 %2010
    %2012 = vrot.lane.b32.xlu0 %v2009, 123
    %v2013 = vpop.permute.xlu0 %2012
    %2014 = vrot.lane.b32.xlu0 %v2008, 123
    %v2015 = vpop.permute.xlu0 %2014
    %v2019 = vadd.f32 %v1927, %v2011
    %v2020 = vadd.f32 %v1928, %v2013
    %v2021 = vadd.f32 %v1929, %v2015
    %s2022 = sld [smem:[#allocation8 + $0x21]]
    %s2023 = sld [smem:[#allocation8 + $0x52]]
    %v2024 = vstv %s2022
    %v2025 = vmul.f32 %v471, %v2024
    %v2026 = vmul.f32 %v472, %v2024
    %v2027 = vmul.f32 %v473, %v2024
    %v2028 = vstv %s2023
    %v2029 = vmul.f32 %v474, %v2028
    %v2030 = vmul.f32 %v475, %v2028
    %v2031 = vmul.f32 %v476, %v2028
    %v2035 = vrot.slane %v2025, 4
    %v2036 = vrot.slane %v2026, 4
    %v2037 = vsel %vm591, %v2035, %v2036
    %v2038 = vrot.slane %v2027, 4
    %v2039 = vsel %vm591, %v2036, %v2038
    %2040 = vrot.lane.b32.xlu0 %v2037, 123
    %v2041 = vpop.permute.xlu0 %2040
    %2042 = vrot.lane.b32.xlu0 %v2039, 123
    %v2043 = vpop.permute.xlu0 %2042
    %v2046 = vadd.f32 %v1954, %v2041
    %v2047 = vadd.f32 %v1955, %v2043
    %v2051 = vrot.slane %v2029, 4
    %v2052 = vrot.slane %v2030, 4
    %v2053 = vsel %vm591, %v2051, %v2052
    %v2054 = vrot.slane %v2031, 4
    %v2055 = vsel %vm591, %v2052, %v2054
    %2056 = vrot.lane.b32.xlu0 %v2053, 123
    %v2057 = vpop.permute.xlu0 %2056
    %2058 = vrot.lane.b32.xlu0 %v2055, 123
    %v2059 = vpop.permute.xlu0 %2058
    %v2062 = vadd.f32 %v1970, %v2057
    %v2063 = vadd.f32 %v1971, %v2059
    %s2064 = sld [smem:[#allocation8 + $0x28]]
    %s2065 = sld [smem:[#allocation8 + $0x59]]
    %v2066 = vstv %s2064
    %v2067 = vmul.f32 %v471, %v2066
    %v2068 = vmul.f32 %v472, %v2066
    %v2069 = vmul.f32 %v473, %v2066
    %v2070 = vstv %s2065
    %v2071 = vmul.f32 %v474, %v2070
    %v2072 = vmul.f32 %v475, %v2070
    %v2073 = vmul.f32 %v476, %v2070
    %v2077 = vrot.slane %v2067, 4
    %v2078 = vrot.slane %v2068, 4
    %v2079 = vsel %vm591, %v2077, %v2078
    %v2080 = vrot.slane %v2069, 4
    %v2081 = vsel %vm591, %v2078, %v2080
    %2082 = vrot.lane.b32.xlu0 %v2079, 123
    %v2083 = vpop.permute.xlu0 %2082
    %2084 = vrot.lane.b32.xlu0 %v2081, 123
    %v2085 = vpop.permute.xlu0 %2084
    %2086 = vrot.lane.b32.xlu0 %v2080, 123
    %v2087 = vpop.permute.xlu0 %2086
    %v2091 = vadd.f32 %v1999, %v2083
    %v2092 = vadd.f32 %v2000, %v2085
    %v2093 = vadd.f32 %v2001, %v2087
    %v2097 = vrot.slane %v2071, 4
    %v2098 = vrot.slane %v2072, 4
    %v2099 = vsel %vm591, %v2097, %v2098
    %v2100 = vrot.slane %v2073, 4
    %v2101 = vsel %vm591, %v2098, %v2100
    %2102 = vrot.lane.b32.xlu0 %v2099, 123
    %v2103 = vpop.permute.xlu0 %2102
    %2104 = vrot.lane.b32.xlu0 %v2101, 123
    %v2105 = vpop.permute.xlu0 %2104
    %2106 = vrot.lane.b32.xlu0 %v2100, 123
    %v2107 = vpop.permute.xlu0 %2106
    %v2111 = vadd.f32 %v2019, %v2103
    %v2112 = vadd.f32 %v2020, %v2105
    %v2113 = vadd.f32 %v2021, %v2107
    %s2114 = sld [smem:[#allocation8 + $0x2f]]
    %s2115 = sld [smem:[#allocation8 + $0x60]]
    %v2116 = vstv %s2114
    %v2117 = vmul.f32 %v471, %v2116
    %v2118 = vmul.f32 %v472, %v2116
    %v2119 = vmul.f32 %v473, %v2116
    %v2120 = vstv %s2115
    %v2121 = vmul.f32 %v474, %v2120
    %v2122 = vmul.f32 %v475, %v2120
    %v2123 = vmul.f32 %v476, %v2120
    %v2127 = vrot.slane %v2117, 6
    %v2128 = vrot.slane %v2118, 6
    %v2129 = vsel %vm664, %v2127, %v2128
    %v2130 = vrot.slane %v2119, 6
    %v2131 = vsel %vm664, %v2128, %v2130
    %2132 = vrot.lane.b32.xlu0 %v2129, 123
    %v2133 = vpop.permute.xlu0 %2132
    %2134 = vrot.lane.b32.xlu0 %v2131, 123
    %v2135 = vpop.permute.xlu0 %2134
    %v2138 = vadd.f32 %v2046, %v2133
    %v2139 = vadd.f32 %v2047, %v2135
    %v2143 = vrot.slane %v2121, 6
    %v2144 = vrot.slane %v2122, 6
    %v2145 = vsel %vm664, %v2143, %v2144
    %v2146 = vrot.slane %v2123, 6
    %v2147 = vsel %vm664, %v2144, %v2146
    %2148 = vrot.lane.b32.xlu0 %v2145, 123
    %v2149 = vpop.permute.xlu0 %2148
    %2150 = vrot.lane.b32.xlu0 %v2147, 123
    %v2151 = vpop.permute.xlu0 %2150
    %v2154 = vadd.f32 %v2062, %v2149
    %v2155 = vadd.f32 %v2063, %v2151
    %s2156 = sld [smem:[#allocation8 + $0x6]]
    %s2157 = sld [smem:[#allocation8 + $0x37]]
    %v2158 = vstv %s2156
    %v2159 = vmul.f32 %v471, %v2158
    %v2160 = vmul.f32 %v472, %v2158
    %v2161 = vstv %s2157
    %v2162 = vmul.f32 %v474, %v2161
    %v2163 = vmul.f32 %v475, %v2161
    %2166 = vrot.lane.b32.xlu0 %v2159, 122
    %v2167 = vpop.permute.xlu0 %2166
    %2168 = vrot.lane.b32.xlu0 %v2160, 122
    %v2169 = vpop.permute.xlu0 %2168
    %v2172 = vadd.f32 %v2138, %v2167
    %v2173 = vadd.f32 %v2139, %v2169
    %2176 = vrot.lane.b32.xlu0 %v2162, 122
    %v2177 = vpop.permute.xlu0 %2176
    %2178 = vrot.lane.b32.xlu0 %v2163, 122
    %v2179 = vpop.permute.xlu0 %2178
    %v2182 = vadd.f32 %v2154, %v2177
    %v2183 = vadd.f32 %v2155, %v2179
    %s2184 = sld [smem:[#allocation8 + $0xd]]
    %s2185 = sld [smem:[#allocation8 + $0x3e]]
    %v2186 = vstv %s2184
    %v2187 = vmul.f32 %v471, %v2186
    %v2188 = vmul.f32 %v472, %v2186
    %v2189 = vmul.f32 %v473, %v2186
    %v2190 = vstv %s2185
    %v2191 = vmul.f32 %v474, %v2190
    %v2192 = vmul.f32 %v475, %v2190
    %v2193 = vmul.f32 %v476, %v2190
    %2197 = vrot.lane.b32.xlu0 %v2187, 122
    %v2198 = vpop.permute.xlu0 %2197
    %2199 = vrot.lane.b32.xlu0 %v2188, 122
    %v2200 = vpop.permute.xlu0 %2199
    %2201 = vrot.lane.b32.xlu0 %v2189, 122
    %v2202 = vpop.permute.xlu0 %2201
    %v2206 = vadd.f32 %v2091, %v2198
    %v2207 = vadd.f32 %v2092, %v2200
    %v2208 = vadd.f32 %v2093, %v2202
    %2212 = vrot.lane.b32.xlu0 %v2191, 122
    %v2213 = vpop.permute.xlu0 %2212
    %2214 = vrot.lane.b32.xlu0 %v2192, 122
    %v2215 = vpop.permute.xlu0 %2214
    %2216 = vrot.lane.b32.xlu0 %v2193, 122
    %v2217 = vpop.permute.xlu0 %2216
    %v2221 = vadd.f32 %v2111, %v2213
    %v2222 = vadd.f32 %v2112, %v2215
    %v2223 = vadd.f32 %v2113, %v2217
    %s2224 = sld [smem:[#allocation8 + $0x14]]
    %s2225 = sld [smem:[#allocation8 + $0x45]]
    %v2226 = vstv %s2224
    %v2227 = vmul.f32 %v471, %v2226
    %v2228 = vmul.f32 %v472, %v2226
    %v2229 = vmul.f32 %v473, %v2226
    %v2230 = vstv %s2225
    %v2231 = vmul.f32 %v474, %v2230
    %v2232 = vmul.f32 %v475, %v2230
    %v2233 = vmul.f32 %v476, %v2230
    %v2237 = vrot.slane %v2227, 2
    %v2238 = vrot.slane %v2228, 2
    %v2239 = vsel %vm518, %v2237, %v2238
    %v2240 = vrot.slane %v2229, 2
    %v2241 = vsel %vm518, %v2238, %v2240
    %2242 = vrot.lane.b32.xlu0 %v2239, 122
    %v2243 = vpop.permute.xlu0 %2242
    %2244 = vrot.lane.b32.xlu0 %v2241, 122
    %v2245 = vpop.permute.xlu0 %2244
    %v2248 = vadd.f32 %v2172, %v2243
    %v2249 = vadd.f32 %v2173, %v2245
    %v2253 = vrot.slane %v2231, 2
    %v2254 = vrot.slane %v2232, 2
    %v2255 = vsel %vm518, %v2253, %v2254
    %v2256 = vrot.slane %v2233, 2
    %v2257 = vsel %vm518, %v2254, %v2256
    %2258 = vrot.lane.b32.xlu0 %v2255, 122
    %v2259 = vpop.permute.xlu0 %2258
    %2260 = vrot.lane.b32.xlu0 %v2257, 122
    %v2261 = vpop.permute.xlu0 %2260
    %v2264 = vadd.f32 %v2182, %v2259
    %v2265 = vadd.f32 %v2183, %v2261
    %s2266 = sld [smem:[#allocation8 + $0x1b]]
    %s2267 = sld [smem:[#allocation8 + $0x4c]]
    %v2268 = vstv %s2266
    %v2269 = vmul.f32 %v471, %v2268
    %v2270 = vmul.f32 %v472, %v2268
    %v2271 = vmul.f32 %v473, %v2268
    %v2272 = vstv %s2267
    %v2273 = vmul.f32 %v474, %v2272
    %v2274 = vmul.f32 %v475, %v2272
    %v2275 = vmul.f32 %v476, %v2272
    %v2279 = vrot.slane %v2269, 2
    %v2280 = vrot.slane %v2270, 2
    %v2281 = vsel %vm518, %v2279, %v2280
    %v2282 = vrot.slane %v2271, 2
    %v2283 = vsel %vm518, %v2280, %v2282
    %2284 = vrot.lane.b32.xlu0 %v2281, 122
    %v2285 = vpop.permute.xlu0 %2284
    %2286 = vrot.lane.b32.xlu0 %v2283, 122
    %v2287 = vpop.permute.xlu0 %2286
    %2288 = vrot.lane.b32.xlu0 %v2282, 122
    %v2289 = vpop.permute.xlu0 %2288
    %v2293 = vadd.f32 %v2206, %v2285
    %v2294 = vadd.f32 %v2207, %v2287
    %v2295 = vadd.f32 %v2208, %v2289
    %v2299 = vrot.slane %v2273, 2
    %v2300 = vrot.slane %v2274, 2
    %v2301 = vsel %vm518, %v2299, %v2300
    %v2302 = vrot.slane %v2275, 2
    %v2303 = vsel %vm518, %v2300, %v2302
    %2304 = vrot.lane.b32.xlu0 %v2301, 122
    %v2305 = vpop.permute.xlu0 %2304
    %2306 = vrot.lane.b32.xlu0 %v2303, 122
    %v2307 = vpop.permute.xlu0 %2306
    %2308 = vrot.lane.b32.xlu0 %v2302, 122
    %v2309 = vpop.permute.xlu0 %2308
    %v2313 = vadd.f32 %v2221, %v2305
    %v2314 = vadd.f32 %v2222, %v2307
    %v2315 = vadd.f32 %v2223, %v2309
    %s2316 = sld [smem:[#allocation8 + $0x22]]
    %s2317 = sld [smem:[#allocation8 + $0x53]]
    %v2318 = vstv %s2316
    %v2319 = vmul.f32 %v471, %v2318
    %v2320 = vmul.f32 %v472, %v2318
    %v2321 = vmul.f32 %v473, %v2318
    %v2322 = vstv %s2317
    %v2323 = vmul.f32 %v474, %v2322
    %v2324 = vmul.f32 %v475, %v2322
    %v2325 = vmul.f32 %v476, %v2322
    %v2329 = vrot.slane %v2319, 4
    %v2330 = vrot.slane %v2320, 4
    %v2331 = vsel %vm591, %v2329, %v2330
    %v2332 = vrot.slane %v2321, 4
    %v2333 = vsel %vm591, %v2330, %v2332
    %2334 = vrot.lane.b32.xlu0 %v2331, 122
    %v2335 = vpop.permute.xlu0 %2334
    %2336 = vrot.lane.b32.xlu0 %v2333, 122
    %v2337 = vpop.permute.xlu0 %2336
    %v2340 = vadd.f32 %v2248, %v2335
    %v2341 = vadd.f32 %v2249, %v2337
    %v2345 = vrot.slane %v2323, 4
    %v2346 = vrot.slane %v2324, 4
    %v2347 = vsel %vm591, %v2345, %v2346
    %v2348 = vrot.slane %v2325, 4
    %v2349 = vsel %vm591, %v2346, %v2348
    %2350 = vrot.lane.b32.xlu0 %v2347, 122
    %v2351 = vpop.permute.xlu0 %2350
    %2352 = vrot.lane.b32.xlu0 %v2349, 122
    %v2353 = vpop.permute.xlu0 %2352
    %v2356 = vadd.f32 %v2264, %v2351
    %v2357 = vadd.f32 %v2265, %v2353
    %s2358 = sld [smem:[#allocation8 + $0x29]]
    %s2359 = sld [smem:[#allocation8 + $0x5a]]
    %v2360 = vstv %s2358
    %v2361 = vmul.f32 %v471, %v2360
    %v2362 = vmul.f32 %v472, %v2360
    %v2363 = vmul.f32 %v473, %v2360
    %v2364 = vstv %s2359
    %v2365 = vmul.f32 %v474, %v2364
    %v2366 = vmul.f32 %v475, %v2364
    %v2367 = vmul.f32 %v476, %v2364
    %v2371 = vrot.slane %v2361, 4
    %v2372 = vrot.slane %v2362, 4
    %v2373 = vsel %vm591, %v2371, %v2372
    %v2374 = vrot.slane %v2363, 4
    %v2375 = vsel %vm591, %v2372, %v2374
    %2376 = vrot.lane.b32.xlu0 %v2373, 122
    %v2377 = vpop.permute.xlu0 %2376
    %2378 = vrot.lane.b32.xlu0 %v2375, 122
    %v2379 = vpop.permute.xlu0 %2378
    %2380 = vrot.lane.b32.xlu0 %v2374, 122
    %v2381 = vpop.permute.xlu0 %2380
    %v2385 = vadd.f32 %v2293, %v2377
    %v2386 = vadd.f32 %v2294, %v2379
    %v2387 = vadd.f32 %v2295, %v2381
    %v2391 = vrot.slane %v2365, 4
    %v2392 = vrot.slane %v2366, 4
    %v2393 = vsel %vm591, %v2391, %v2392
    %v2394 = vrot.slane %v2367, 4
    %v2395 = vsel %vm591, %v2392, %v2394
    %2396 = vrot.lane.b32.xlu0 %v2393, 122
    %v2397 = vpop.permute.xlu0 %2396
    %2398 = vrot.lane.b32.xlu0 %v2395, 122
    %v2399 = vpop.permute.xlu0 %2398
    %2400 = vrot.lane.b32.xlu0 %v2394, 122
    %v2401 = vpop.permute.xlu0 %2400
    %v2405 = vadd.f32 %v2313, %v2397
    %v2406 = vadd.f32 %v2314, %v2399
    %v2407 = vadd.f32 %v2315, %v2401
    %s2408 = sld [smem:[#allocation8 + $0x30]]
    %s2409 = sld [smem:[#allocation8 + $0x61]]
    %v2410 = vstv %s2408
    %v2411 = vmul.f32 %v471, %v2410
    %v2412 = vmul.f32 %v472, %v2410
    %v2413 = vmul.f32 %v473, %v2410
    %v2414 = vstv %s2409
    %v2415 = vmul.f32 %v474, %v2414
    %v2416 = vmul.f32 %v475, %v2414
    %v2417 = vmul.f32 %v476, %v2414
    %v2421 = vrot.slane %v2411, 6
    %v2422 = vrot.slane %v2412, 6
    %v2423 = vsel %vm664, %v2421, %v2422
    %v2424 = vrot.slane %v2413, 6
    %v2425 = vsel %vm664, %v2422, %v2424
    %2426 = vrot.lane.b32.xlu0 %v2423, 122
    %v2427 = vpop.permute.xlu0 %2426
    %2428 = vrot.lane.b32.xlu0 %v2425, 122
    %v2429 = vpop.permute.xlu0 %2428
    %v2432 = vadd.f32 %v2340, %v2427
    %v2433 = vadd.f32 %v2341, %v2429
    %v2437 = vrot.slane %v2415, 6
    %v2438 = vrot.slane %v2416, 6
    %v2439 = vsel %vm664, %v2437, %v2438
    %v2440 = vrot.slane %v2417, 6
    %v2441 = vsel %vm664, %v2438, %v2440
    %2442 = vrot.lane.b32.xlu0 %v2439, 122
    %v2443 = vpop.permute.xlu0 %2442
    %2444 = vrot.lane.b32.xlu0 %v2441, 122
    %v2445 = vpop.permute.xlu0 %2444
    %v2448 = vadd.f32 %v2356, %v2443
    %v2449 = vadd.f32 %v2357, %v2445
    %vm2453 = vcmask 1046528
    %v2454 = vrot.slane %v2385, 1
    %v2455 = vrot.slane %v2386, 1
    %v2456 = vsel %vm2453, %v2454, %v2455
    %v2457 = vrot.slane %v2387, 1
    %v2458 = vsel %vm2453, %v2455, %v2457
    %v2461 = vadd.f32 %v2432, %v2456
    %v2462 = vadd.f32 %v2433, %v2458
    %v2466 = vrot.slane %v2405, 1
    %v2467 = vrot.slane %v2406, 1
    %v2468 = vsel %vm2453, %v2466, %v2467
    %v2469 = vrot.slane %v2407, 1
    %v2470 = vsel %vm2453, %v2467, %v2469
    %v2473 = vadd.f32 %v2448, %v2468
    %v2474 = vadd.f32 %v2449, %v2470
    %v2475 = vadd.f32 %v2461, %v2473
    %v2476 = vadd.f32 %v2462, %v2474
    %v2477 = vstv %s43
    %v2478 = vadd.f32 %v2475, %v2477
    %v2479 = vadd.f32 %v2476, %v2477
    %2480 = vst.msk [vmem:[#allocation9] sm:$0xff] %vm76, %v2478
    %2481 = vst.msk [vmem:[#allocation9 + $0x8] sm:$0xff] %vm76, %v2479
    %s2482 = scalar_lea.vmem [#allocation4], 256
    %v2483 = vld [vmem:[%s2482] sm:$0xff]
    %v2484 = vld [vmem:[%s2482 + $0x8] sm:$0xff]
    %v2485 = vld [vmem:[%s2482 + $0x10] sm:$0xff]
    %v2486 = vld [vmem:[%s2482 + $0x18] sm:$0xff]
    %v2487 = vld [vmem:[%s2482 + $0x20] sm:$0xff]
    %v2488 = vld [vmem:[%s2482 + $0x28] sm:$0xff]
    %v2489 = vld [vmem:[%s2482 + $0x30] sm:$0xff]
    %v2490 = vld [vmem:[%s2482 + $0x38] sm:$0xff]
    %v2491 = vld [vmem:[%s2482 + $0x40] sm:$0xff]
    %v2492 = vld [vmem:[%s2482 + $0x48] sm:$0xff]
    %v2493 = vld [vmem:[%s2482 + $0x50] sm:$0xff]
    %v2494 = vld [vmem:[%s2482 + $0x58] sm:$0xff]
    %v2495 = vld [vmem:[%s2482 + $0x60] sm:$0xff]
    %v2496 = vld [vmem:[%s2482 + $0x68] sm:$0xff]
    %v2497 = vld [vmem:[%s2482 + $0x70] sm:$0xff]
    %v2498 = vld [vmem:[%s2482 + $0x78] sm:$0xff]
    %v2499 = vld [vmem:[%s2482 + $0x80] sm:$0xff]
    %v2500 = vld [vmem:[%s2482 + $0x88] sm:$0xff]
    %v2501 = vld [vmem:[%s2482 + $0x90] sm:$0xff]
    %v2502 = vld [vmem:[%s2482 + $0x98] sm:$0xff]
    %v2503 = vld [vmem:[%s2482 + $0xa0] sm:$0xff]
    %v2504 = vld [vmem:[%s2482 + $0xa8] sm:$0xff]
    %v2505 = vld [vmem:[%s2482 + $0xb0] sm:$0xff]
    %v2506 = vld [vmem:[%s2482 + $0xb8] sm:$0xff]
    %v2507 = vld [vmem:[%s2482 + $0xc0] sm:$0xff]
    %v2508 = vld [vmem:[%s2482 + $0xc8] sm:$0xff]
    %v2509 = vld [vmem:[%s2482 + $0xd0] sm:$0xff]
    %v2510 = vld [vmem:[%s2482 + $0xd8] sm:$0xff]
    %v2511 = vld [vmem:[%s2482 + $0xe0] sm:$0xff]
    %v2512 = vld [vmem:[%s2482 + $0xe8] sm:$0xff]
    %v2513 = vld [vmem:[%s2482 + $0xf0] sm:$0xff]
    %v2514 = vld [vmem:[%s2482 + $0xf8] sm:$0xff]
    %v2515 = vsel %vm76, %v2483, 0.0
    %v2516 = vsel %vm76, %v2485, 0.0
    %v2517 = vadd.f32 %v2515, %v2516
    %v2518 = vsel %vm76, %v2487, 0.0
    %v2519 = vadd.f32 %v2517, %v2518
    %v2520 = vsel %vm76, %v2489, 0.0
    %v2521 = vadd.f32 %v2519, %v2520
    %v2522 = vsel %vm76, %v2491, 0.0
    %v2523 = vadd.f32 %v2521, %v2522
    %v2524 = vsel %vm76, %v2493, 0.0
    %v2525 = vadd.f32 %v2523, %v2524
    %v2526 = vsel %vm76, %v2495, 0.0
    %v2527 = vadd.f32 %v2525, %v2526
    %v2528 = vsel %vm76, %v2497, 0.0
    %v2529 = vadd.f32 %v2527, %v2528
    %v2530 = vsel %vm76, %v2499, 0.0
    %v2531 = vadd.f32 %v2529, %v2530
    %v2532 = vsel %vm76, %v2501, 0.0
    %v2533 = vadd.f32 %v2531, %v2532
    %v2534 = vsel %vm76, %v2503, 0.0
    %v2535 = vadd.f32 %v2533, %v2534
    %v2536 = vsel %vm76, %v2505, 0.0
    %v2537 = vadd.f32 %v2535, %v2536
    %v2538 = vsel %vm76, %v2507, 0.0
    %v2539 = vadd.f32 %v2537, %v2538
    %v2540 = vsel %vm76, %v2509, 0.0
    %v2541 = vadd.f32 %v2539, %v2540
    %v2542 = vsel %vm76, %v2511, 0.0
    %v2543 = vadd.f32 %v2541, %v2542
    %v2544 = vsel %vm76, %v2513, 0.0
    %v2545 = vadd.f32 %v2543, %v2544
    %v2546 = vsel %vm76, %v2484, 0.0
    %v2547 = vsel %vm76, %v2486, 0.0
    %v2548 = vadd.f32 %v2546, %v2547
    %v2549 = vsel %vm76, %v2488, 0.0
    %v2550 = vadd.f32 %v2548, %v2549
    %v2551 = vsel %vm76, %v2490, 0.0
    %v2552 = vadd.f32 %v2550, %v2551
    %v2553 = vsel %vm76, %v2492, 0.0
    %v2554 = vadd.f32 %v2552, %v2553
    %v2555 = vsel %vm76, %v2494, 0.0
    %v2556 = vadd.f32 %v2554, %v2555
    %v2557 = vsel %vm76, %v2496, 0.0
    %v2558 = vadd.f32 %v2556, %v2557
    %v2559 = vsel %vm76, %v2498, 0.0
    %v2560 = vadd.f32 %v2558, %v2559
    %v2561 = vsel %vm76, %v2500, 0.0
    %v2562 = vadd.f32 %v2560, %v2561
    %v2563 = vsel %vm76, %v2502, 0.0
    %v2564 = vadd.f32 %v2562, %v2563
    %v2565 = vsel %vm76, %v2504, 0.0
    %v2566 = vadd.f32 %v2564, %v2565
    %v2567 = vsel %vm76, %v2506, 0.0
    %v2568 = vadd.f32 %v2566, %v2567
    %v2569 = vsel %vm76, %v2508, 0.0
    %v2570 = vadd.f32 %v2568, %v2569
    %v2571 = vsel %vm76, %v2510, 0.0
    %v2572 = vadd.f32 %v2570, %v2571
    %v2573 = vsel %vm76, %v2512, 0.0
    %v2574 = vadd.f32 %v2572, %v2573
    %v2575 = vsel %vm76, %v2514, 0.0
    %v2576 = vadd.f32 %v2574, %v2575
    %v2577 = vmul.f32 %v2545, 0.0625
    %v2578 = vmul.f32 %v2576, 0.0625
    %v2579 = vsel %vm76, %v2483, -inf
    %v2580 = vsel %vm76, %v2485, -inf
    %v2581 = vsel %vm76, %v2487, -inf
    %v2582 = vmax.f32 %v2579, %v2581
    %v2583 = vsel %vm76, %v2489, -inf
    %v2584 = vmax.f32 %v2580, %v2583
    %v2585 = vsel %vm76, %v2491, -inf
    %v2586 = vmax.f32 %v2582, %v2585
    %v2587 = vsel %vm76, %v2493, -inf
    %v2588 = vmax.f32 %v2584, %v2587
    %v2589 = vsel %vm76, %v2495, -inf
    %v2590 = vmax.f32 %v2586, %v2589
    %v2591 = vsel %vm76, %v2497, -inf
    %v2592 = vmax.f32 %v2588, %v2591
    %v2593 = vsel %vm76, %v2499, -inf
    %v2594 = vmax.f32 %v2590, %v2593
    %v2595 = vsel %vm76, %v2501, -inf
    %v2596 = vmax.f32 %v2592, %v2595
    %v2597 = vsel %vm76, %v2503, -inf
    %v2598 = vmax.f32 %v2594, %v2597
    %v2599 = vsel %vm76, %v2505, -inf
    %v2600 = vmax.f32 %v2596, %v2599
    %v2601 = vsel %vm76, %v2507, -inf
    %v2602 = vmax.f32 %v2598, %v2601
    %v2603 = vsel %vm76, %v2509, -inf
    %v2604 = vmax.f32 %v2600, %v2603
    %v2605 = vsel %vm76, %v2511, -inf
    %v2606 = vmax.f32 %v2602, %v2605
    %v2607 = vsel %vm76, %v2513, -inf
    %v2608 = vmax.f32 %v2604, %v2607
    %v2609 = vmax.f32 %v2606, %v2608
    %v2610 = vsel %vm76, %v2484, -inf
    %v2611 = vsel %vm76, %v2486, -inf
    %v2612 = vsel %vm76, %v2488, -inf
    %v2613 = vmax.f32 %v2610, %v2612
    %v2614 = vsel %vm76, %v2490, -inf
    %v2615 = vmax.f32 %v2611, %v2614
    %v2616 = vsel %vm76, %v2492, -inf
    %v2617 = vmax.f32 %v2613, %v2616
    %v2618 = vsel %vm76, %v2494, -inf
    %v2619 = vmax.f32 %v2615, %v2618
    %v2620 = vsel %vm76, %v2496, -inf
    %v2621 = vmax.f32 %v2617, %v2620
    %v2622 = vsel %vm76, %v2498, -inf
    %v2623 = vmax.f32 %v2619, %v2622
    %v2624 = vsel %vm76, %v2500, -inf
    %v2625 = vmax.f32 %v2621, %v2624
    %v2626 = vsel %vm76, %v2502, -inf
    %v2627 = vmax.f32 %v2623, %v2626
    %v2628 = vsel %vm76, %v2504, -inf
    %v2629 = vmax.f32 %v2625, %v2628
    %v2630 = vsel %vm76, %v2506, -inf
    %v2631 = vmax.f32 %v2627, %v2630
    %v2632 = vsel %vm76, %v2508, -inf
    %v2633 = vmax.f32 %v2629, %v2632
    %v2634 = vsel %vm76, %v2510, -inf
    %v2635 = vmax.f32 %v2631, %v2634
    %v2636 = vsel %vm76, %v2512, -inf
    %v2637 = vmax.f32 %v2633, %v2636
    %v2638 = vsel %vm76, %v2514, -inf
    %v2639 = vmax.f32 %v2635, %v2638
    %v2640 = vmax.f32 %v2637, %v2639
    %2643 = vrot.lane.b32.xlu0 %v2577, 3
    %v2644 = vpop.permute.xlu0 %2643
    %2645 = vrot.lane.b32.xlu0 %v2578, 3
    %v2646 = vpop.permute.xlu0 %2645
    %2649 = vst.msk [vmem:[#allocation2 + $0x3] sm:$0xff] %vm211, %v2644
    %2650 = vst.msk [vmem:[#allocation2 + $0xb] sm:$0xff] %vm211, %v2646
    %2651 = vst.msk [vmem:[#allocation2 - $0x3] sm:$0x8] %vm214, %v2644
    %2652 = vst.msk [vmem:[#allocation2 + $0xd] sm:$0x40] %vm216, %v2646
    %2653 = vst.msk [vmem:[#allocation2 - $0x1] sm:$0x4] %vm218, %v2644
    %2654 = vst.msk [vmem:[#allocation2 + $0xf] sm:$0x20] %vm220, %v2646
    %2655 = vst.msk [vmem:[#allocation2 + $0x1] sm:$0x2] %vm222, %v2644
    %2656 = vst.msk [vmem:[#allocation2 + $0x11] sm:$0x10] %vm224, %v2646
    %v2657 = vld [vmem:[#allocation2] sm:$0xff]
    %v2658 = vld [vmem:[#allocation2 + $0x8] sm:$0xff]
    %v2659 = vld [vmem:[#allocation2 + $0x10] sm:$0x3f]
    %2663 = vrot.lane.b32.xlu0 %v2657, 122
    %v2664 = vpop.permute.xlu0 %2663
    %2665 = vrot.lane.b32.xlu0 %v2658, 122
    %v2666 = vpop.permute.xlu0 %2665
    %2667 = vrot.lane.b32.xlu0 %v2659, 122
    %v2668 = vpop.permute.xlu0 %2667
    %2672 = vst.msk [vmem:[#allocation2] sm:$0xff] %vm241, %v2664
    %2673 = vst.msk [vmem:[#allocation2 + $0x8] sm:$0xff] %vm241, %v2666
    %2674 = vst.msk [vmem:[#allocation2 + $0x10] sm:$0x3f] %vm244, %v2668
    %v2675 = vld [vmem:[#allocation2] sm:$0xff]
    %v2676 = vld [vmem:[#allocation2 + $0x8] sm:$0xff]
    %v2677 = vld [vmem:[#allocation2 + $0x10] sm:$0x3f]
    %2681 = vrot.lane.b32.xlu0 %v2675, 2
    %v2682 = vpop.permute.xlu0 %2681
    %2683 = vrot.lane.b32.xlu0 %v2676, 2
    %v2684 = vpop.permute.xlu0 %2683
    %2685 = vrot.lane.b32.xlu0 %v2677, 2
    %v2686 = vpop.permute.xlu0 %2685
    %2690 = vst.msk [vmem:[#allocation2] sm:$0xff] %vm261, %v2682
    %2691 = vst.msk [vmem:[#allocation2 + $0x8] sm:$0xff] %vm261, %v2684
    %2692 = vst.msk [vmem:[#allocation2 + $0x10] sm:$0x3f] %vm264, %v2686
    %v2693 = vld [vmem:[#allocation2] sm:$0xff]
    %v2694 = vld [vmem:[#allocation2 + $0x8] sm:$0xff]
    %v2695 = vld [vmem:[#allocation2 + $0x10] sm:$0x3f]
    %2699 = vrot.lane.b32.xlu0 %v2693, 124
    %v2700 = vpop.permute.xlu0 %2699
    %2701 = vrot.lane.b32.xlu0 %v2694, 124
    %v2702 = vpop.permute.xlu0 %2701
    %2703 = vrot.lane.b32.xlu0 %v2695, 124
    %v2704 = vpop.permute.xlu0 %2703
    %2708 = vst.msk [vmem:[#allocation2] sm:$0xff] %vm281, %v2700
    %2709 = vst.msk [vmem:[#allocation2 + $0x8] sm:$0xff] %vm281, %v2702
    %2710 = vst.msk [vmem:[#allocation2 + $0x10] sm:$0x3f] %vm284, %v2704
    %v2711 = vld [vmem:[#allocation2] sm:$0xff]
    %v2712 = vld [vmem:[#allocation2 + $0x8] sm:$0xff]
    %v2713 = vld [vmem:[#allocation2 + $0x10] sm:$0x3f]
    %2717 = vrot.lane.b32.xlu0 %v2711, 4
    %v2718 = vpop.permute.xlu0 %2717
    %2719 = vrot.lane.b32.xlu0 %v2712, 4
    %v2720 = vpop.permute.xlu0 %2719
    %2721 = vrot.lane.b32.xlu0 %v2713, 4
    %v2722 = vpop.permute.xlu0 %2721
    %2726 = vst.msk [vmem:[#allocation2] sm:$0xff] %vm301, %v2718
    %2727 = vst.msk [vmem:[#allocation2 + $0x8] sm:$0xff] %vm301, %v2720
    %2728 = vst.msk [vmem:[#allocation2 + $0x10] sm:$0x3f] %vm304, %v2722
    %v2729 = vld [vmem:[#allocation2] sm:$0xff]
    %v2730 = vld [vmem:[#allocation2 + $0x8] sm:$0xff]
    %v2731 = vld [vmem:[#allocation2 + $0x10] sm:$0x3f]
    %2735 = vrot.lane.b32.xlu0 %v2729, 126
    %v2736 = vpop.permute.xlu0 %2735
    %2737 = vrot.lane.b32.xlu0 %v2730, 126
    %v2738 = vpop.permute.xlu0 %2737
    %2739 = vrot.lane.b32.xlu0 %v2731, 126
    %v2740 = vpop.permute.xlu0 %2739
    %2744 = vst.msk [vmem:[#allocation2] sm:$0xff] %vm321, %v2736
    %2745 = vst.msk [vmem:[#allocation2 + $0x8] sm:$0xff] %vm321, %v2738
    %2746 = vst.msk [vmem:[#allocation2 + $0x10] sm:$0x3f] %vm324, %v2740
    %v2747 = vld [vmem:[#allocation2] sm:$0xff]
    %v2748 = vld [vmem:[#allocation2 + $0x8] sm:$0xff]
    %v2749 = vld [vmem:[#allocation2 + $0x10] sm:$0x3f]
    %2753 = vrot.lane.b32.xlu0 %v2747, 6
    %v2754 = vpop.permute.xlu0 %2753
    %2755 = vrot.lane.b32.xlu0 %v2748, 6
    %v2756 = vpop.permute.xlu0 %2755
    %2757 = vrot.lane.b32.xlu0 %v2749, 6
    %v2758 = vpop.permute.xlu0 %2757
    %2762 = vst.msk [vmem:[#allocation2] sm:$0xff] %vm341, %v2754
    %2763 = vst.msk [vmem:[#allocation2 + $0x8] sm:$0xff] %vm341, %v2756
    %2764 = vst.msk [vmem:[#allocation2 + $0x10] sm:$0x3f] %vm344, %v2758
    %2767 = vrot.lane.b32.xlu0 %v2609, 3
    %v2768 = vpop.permute.xlu0 %2767
    %2769 = vrot.lane.b32.xlu0 %v2640, 3
    %v2770 = vpop.permute.xlu0 %2769
    %2773 = vst.msk [vmem:[%s354 + $0x3] sm:$0xff] %vm211, %v2768
    %2774 = vst.msk [vmem:[%s354 + $0xb] sm:$0xff] %vm211, %v2770
    %2775 = vst.msk [vmem:[%s354 - $0x3] sm:$0x8] %vm214, %v2768
    %2776 = vst.msk [vmem:[%s354 + $0xd] sm:$0x40] %vm216, %v2770
    %2777 = vst.msk [vmem:[%s354 - $0x1] sm:$0x4] %vm218, %v2768
    %2778 = vst.msk [vmem:[%s354 + $0xf] sm:$0x20] %vm220, %v2770
    %2779 = vst.msk [vmem:[%s354 + $0x1] sm:$0x2] %vm222, %v2768
    %2780 = vst.msk [vmem:[%s354 + $0x11] sm:$0x10] %vm224, %v2770
    %v2781 = vld [vmem:[%s354] sm:$0xff]
    %v2782 = vld [vmem:[%s354 + $0x8] sm:$0xff]
    %v2783 = vld [vmem:[%s354 + $0x10] sm:$0x3f]
    %2787 = vrot.lane.b32.xlu0 %v2781, 122
    %v2788 = vpop.permute.xlu0 %2787
    %2789 = vrot.lane.b32.xlu0 %v2782, 122
    %v2790 = vpop.permute.xlu0 %2789
    %2791 = vrot.lane.b32.xlu0 %v2783, 122
    %v2792 = vpop.permute.xlu0 %2791
    %2796 = vst.msk [vmem:[%s354] sm:$0xff] %vm241, %v2788
    %2797 = vst.msk [vmem:[%s354 + $0x8] sm:$0xff] %vm241, %v2790
    %2798 = vst.msk [vmem:[%s354 + $0x10] sm:$0x3f] %vm244, %v2792
    %v2799 = vld [vmem:[%s354] sm:$0xff]
    %v2800 = vld [vmem:[%s354 + $0x8] sm:$0xff]
    %v2801 = vld [vmem:[%s354 + $0x10] sm:$0x3f]
    %2805 = vrot.lane.b32.xlu0 %v2799, 2
    %v2806 = vpop.permute.xlu0 %2805
    %2807 = vrot.lane.b32.xlu0 %v2800, 2
    %v2808 = vpop.permute.xlu0 %2807
    %2809 = vrot.lane.b32.xlu0 %v2801, 2
    %v2810 = vpop.permute.xlu0 %2809
    %2814 = vst.msk [vmem:[%s354] sm:$0xff] %vm261, %v2806
    %2815 = vst.msk [vmem:[%s354 + $0x8] sm:$0xff] %vm261, %v2808
    %2816 = vst.msk [vmem:[%s354 + $0x10] sm:$0x3f] %vm264, %v2810
    %v2817 = vld [vmem:[%s354] sm:$0xff]
    %v2818 = vld [vmem:[%s354 + $0x8] sm:$0xff]
    %v2819 = vld [vmem:[%s354 + $0x10] sm:$0x3f]
    %2823 = vrot.lane.b32.xlu0 %v2817, 124
    %v2824 = vpop.permute.xlu0 %2823
    %2825 = vrot.lane.b32.xlu0 %v2818, 124
    %v2826 = vpop.permute.xlu0 %2825
    %2827 = vrot.lane.b32.xlu0 %v2819, 124
    %v2828 = vpop.permute.xlu0 %2827
    %2832 = vst.msk [vmem:[%s354] sm:$0xff] %vm281, %v2824
    %2833 = vst.msk [vmem:[%s354 + $0x8] sm:$0xff] %vm281, %v2826
    %2834 = vst.msk [vmem:[%s354 + $0x10] sm:$0x3f] %vm284, %v2828
    %v2835 = vld [vmem:[%s354] sm:$0xff]
    %v2836 = vld [vmem:[%s354 + $0x8] sm:$0xff]
    %v2837 = vld [vmem:[%s354 + $0x10] sm:$0x3f]
    %2841 = vrot.lane.b32.xlu0 %v2835, 4
    %v2842 = vpop.permute.xlu0 %2841
    %2843 = vrot.lane.b32.xlu0 %v2836, 4
    %v2844 = vpop.permute.xlu0 %2843
    %2845 = vrot.lane.b32.xlu0 %v2837, 4
    %v2846 = vpop.permute.xlu0 %2845
    %2850 = vst.msk [vmem:[%s354] sm:$0xff] %vm301, %v2842
    %2851 = vst.msk [vmem:[%s354 + $0x8] sm:$0xff] %vm301, %v2844
    %2852 = vst.msk [vmem:[%s354 + $0x10] sm:$0x3f] %vm304, %v2846
    %v2853 = vld [vmem:[%s354] sm:$0xff]
    %v2854 = vld [vmem:[%s354 + $0x8] sm:$0xff]
    %v2855 = vld [vmem:[%s354 + $0x10] sm:$0x3f]
    %2859 = vrot.lane.b32.xlu0 %v2853, 126
    %v2860 = vpop.permute.xlu0 %2859
    %2861 = vrot.lane.b32.xlu0 %v2854, 126
    %v2862 = vpop.permute.xlu0 %2861
    %2863 = vrot.lane.b32.xlu0 %v2855, 126
    %v2864 = vpop.permute.xlu0 %2863
    %2868 = vst.msk [vmem:[%s354] sm:$0xff] %vm321, %v2860
    %2869 = vst.msk [vmem:[%s354 + $0x8] sm:$0xff] %vm321, %v2862
    %2870 = vst.msk [vmem:[%s354 + $0x10] sm:$0x3f] %vm324, %v2864
    %v2871 = vld [vmem:[%s354] sm:$0xff]
    %v2872 = vld [vmem:[%s354 + $0x8] sm:$0xff]
    %v2873 = vld [vmem:[%s354 + $0x10] sm:$0x3f]
    %2877 = vrot.lane.b32.xlu0 %v2871, 6
    %v2878 = vpop.permute.xlu0 %2877
    %2879 = vrot.lane.b32.xlu0 %v2872, 6
    %v2880 = vpop.permute.xlu0 %2879
    %2881 = vrot.lane.b32.xlu0 %v2873, 6
    %v2882 = vpop.permute.xlu0 %2881
    %2886 = vst.msk [vmem:[%s354] sm:$0xff] %vm341, %v2878
    %2887 = vst.msk [vmem:[%s354 + $0x8] sm:$0xff] %vm341, %v2880
    %2888 = vst.msk [vmem:[%s354 + $0x10] sm:$0x3f] %vm344, %v2882
    %v2889 = vld [vmem:[#allocation2] sm:$0xff]
    %v2890 = vld [vmem:[#allocation2 + $0x8] sm:$0xff]
    %v2891 = vld [vmem:[#allocation2 + $0x10] sm:$0x3f]
    %v2892 = vld [vmem:[%s354] sm:$0xff]
    %v2893 = vld [vmem:[%s354 + $0x8] sm:$0xff]
    %v2894 = vld [vmem:[%s354 + $0x10] sm:$0x3f]
    %s2895 = sld [smem:[#allocation8]]
    %s2896 = sld [smem:[#allocation8 + $0x31]]
    %v2897 = vstv %s2895
    %v2898 = vmul.f32 %v2889, %v2897
    %v2899 = vmul.f32 %v2890, %v2897
    %v2900 = vstv %s2896
    %v2901 = vmul.f32 %v2892, %v2900
    %v2902 = vmul.f32 %v2893, %v2900
    %v2903 = vadd.f32 %v2898, 0.0
    %v2904 = vadd.f32 %v2899, 0.0
    %v2905 = vadd.f32 %v2901, 0.0
    %v2906 = vadd.f32 %v2902, 0.0
    %s2907 = sld [smem:[#allocation8 + $0x7]]
    %s2908 = sld [smem:[#allocation8 + $0x38]]
    %v2909 = vstv %s2907
    %v2910 = vmul.f32 %v2889, %v2909
    %v2911 = vmul.f32 %v2890, %v2909
    %v2912 = vmul.f32 %v2891, %v2909
    %v2913 = vstv %s2908
    %v2914 = vmul.f32 %v2892, %v2913
    %v2915 = vmul.f32 %v2893, %v2913
    %v2916 = vmul.f32 %v2894, %v2913
    %v2917 = vadd.f32 %v2910, 0.0
    %v2918 = vadd.f32 %v2911, 0.0
    %v2919 = vadd.f32 %v2912, 0.0
    %v2920 = vadd.f32 %v2914, 0.0
    %v2921 = vadd.f32 %v2915, 0.0
    %v2922 = vadd.f32 %v2916, 0.0
    %s2923 = sld [smem:[#allocation8 + $0xe]]
    %s2924 = sld [smem:[#allocation8 + $0x3f]]
    %v2925 = vstv %s2923
    %v2926 = vmul.f32 %v2889, %v2925
    %v2927 = vmul.f32 %v2890, %v2925
    %v2928 = vmul.f32 %v2891, %v2925
    %v2929 = vstv %s2924
    %v2930 = vmul.f32 %v2892, %v2929
    %v2931 = vmul.f32 %v2893, %v2929
    %v2932 = vmul.f32 %v2894, %v2929
    %v2936 = vrot.slane %v2926, 2
    %v2937 = vrot.slane %v2927, 2
    %v2938 = vsel %vm518, %v2936, %v2937
    %v2939 = vrot.slane %v2928, 2
    %v2940 = vsel %vm518, %v2937, %v2939
    %v2943 = vadd.f32 %v2903, %v2938
    %v2944 = vadd.f32 %v2904, %v2940
    %v2948 = vrot.slane %v2930, 2
    %v2949 = vrot.slane %v2931, 2
    %v2950 = vsel %vm518, %v2948, %v2949
    %v2951 = vrot.slane %v2932, 2
    %v2952 = vsel %vm518, %v2949, %v2951
    %v2955 = vadd.f32 %v2905, %v2950
    %v2956 = vadd.f32 %v2906, %v2952
    %s2957 = sld [smem:[#allocation8 + $0x15]]
    %s2958 = sld [smem:[#allocation8 + $0x46]]
    %v2959 = vstv %s2957
    %v2960 = vmul.f32 %v2889, %v2959
    %v2961 = vmul.f32 %v2890, %v2959
    %v2962 = vmul.f32 %v2891, %v2959
    %v2963 = vstv %s2958
    %v2964 = vmul.f32 %v2892, %v2963
    %v2965 = vmul.f32 %v2893, %v2963
    %v2966 = vmul.f32 %v2894, %v2963
    %v2970 = vrot.slane %v2960, 2
    %v2971 = vrot.slane %v2961, 2
    %v2972 = vsel %vm518, %v2970, %v2971
    %v2973 = vrot.slane %v2962, 2
    %v2974 = vsel %vm518, %v2971, %v2973
    %v2978 = vadd.f32 %v2917, %v2972
    %v2979 = vadd.f32 %v2918, %v2974
    %v2980 = vadd.f32 %v2919, %v2973
    %v2984 = vrot.slane %v2964, 2
    %v2985 = vrot.slane %v2965, 2
    %v2986 = vsel %vm518, %v2984, %v2985
    %v2987 = vrot.slane %v2966, 2
    %v2988 = vsel %vm518, %v2985, %v2987
    %v2992 = vadd.f32 %v2920, %v2986
    %v2993 = vadd.f32 %v2921, %v2988
    %v2994 = vadd.f32 %v2922, %v2987
    %s2995 = sld [smem:[#allocation8 + $0x1c]]
    %s2996 = sld [smem:[#allocation8 + $0x4d]]
    %v2997 = vstv %s2995
    %v2998 = vmul.f32 %v2889, %v2997
    %v2999 = vmul.f32 %v2890, %v2997
    %v3000 = vmul.f32 %v2891, %v2997
    %v3001 = vstv %s2996
    %v3002 = vmul.f32 %v2892, %v3001
    %v3003 = vmul.f32 %v2893, %v3001
    %v3004 = vmul.f32 %v2894, %v3001
    %v3008 = vrot.slane %v2998, 4
    %v3009 = vrot.slane %v2999, 4
    %v3010 = vsel %vm591, %v3008, %v3009
    %v3011 = vrot.slane %v3000, 4
    %v3012 = vsel %vm591, %v3009, %v3011
    %v3015 = vadd.f32 %v2943, %v3010
    %v3016 = vadd.f32 %v2944, %v3012
    %v3020 = vrot.slane %v3002, 4
    %v3021 = vrot.slane %v3003, 4
    %v3022 = vsel %vm591, %v3020, %v3021
    %v3023 = vrot.slane %v3004, 4
    %v3024 = vsel %vm591, %v3021, %v3023
    %v3027 = vadd.f32 %v2955, %v3022
    %v3028 = vadd.f32 %v2956, %v3024
    %s3029 = sld [smem:[#allocation8 + $0x23]]
    %s3030 = sld [smem:[#allocation8 + $0x54]]
    %v3031 = vstv %s3029
    %v3032 = vmul.f32 %v2889, %v3031
    %v3033 = vmul.f32 %v2890, %v3031
    %v3034 = vmul.f32 %v2891, %v3031
    %v3035 = vstv %s3030
    %v3036 = vmul.f32 %v2892, %v3035
    %v3037 = vmul.f32 %v2893, %v3035
    %v3038 = vmul.f32 %v2894, %v3035
    %v3042 = vrot.slane %v3032, 4
    %v3043 = vrot.slane %v3033, 4
    %v3044 = vsel %vm591, %v3042, %v3043
    %v3045 = vrot.slane %v3034, 4
    %v3046 = vsel %vm591, %v3043, %v3045
    %v3050 = vadd.f32 %v2978, %v3044
    %v3051 = vadd.f32 %v2979, %v3046
    %v3052 = vadd.f32 %v2980, %v3045
    %v3056 = vrot.slane %v3036, 4
    %v3057 = vrot.slane %v3037, 4
    %v3058 = vsel %vm591, %v3056, %v3057
    %v3059 = vrot.slane %v3038, 4
    %v3060 = vsel %vm591, %v3057, %v3059
    %v3064 = vadd.f32 %v2992, %v3058
    %v3065 = vadd.f32 %v2993, %v3060
    %v3066 = vadd.f32 %v2994, %v3059
    %s3067 = sld [smem:[#allocation8 + $0x2a]]
    %s3068 = sld [smem:[#allocation8 + $0x5b]]
    %v3069 = vstv %s3067
    %v3070 = vmul.f32 %v2889, %v3069
    %v3071 = vmul.f32 %v2890, %v3069
    %v3072 = vmul.f32 %v2891, %v3069
    %v3073 = vstv %s3068
    %v3074 = vmul.f32 %v2892, %v3073
    %v3075 = vmul.f32 %v2893, %v3073
    %v3076 = vmul.f32 %v2894, %v3073
    %v3080 = vrot.slane %v3070, 6
    %v3081 = vrot.slane %v3071, 6
    %v3082 = vsel %vm664, %v3080, %v3081
    %v3083 = vrot.slane %v3072, 6
    %v3084 = vsel %vm664, %v3081, %v3083
    %v3087 = vadd.f32 %v3015, %v3082
    %v3088 = vadd.f32 %v3016, %v3084
    %v3092 = vrot.slane %v3074, 6
    %v3093 = vrot.slane %v3075, 6
    %v3094 = vsel %vm664, %v3092, %v3093
    %v3095 = vrot.slane %v3076, 6
    %v3096 = vsel %vm664, %v3093, %v3095
    %v3099 = vadd.f32 %v3027, %v3094
    %v3100 = vadd.f32 %v3028, %v3096
    %s3101 = sld [smem:[#allocation8 + $0x1]]
    %s3102 = sld [smem:[#allocation8 + $0x32]]
    %v3103 = vstv %s3101
    %v3104 = vmul.f32 %v2889, %v3103
    %v3105 = vmul.f32 %v2890, %v3103
    %v3106 = vstv %s3102
    %v3107 = vmul.f32 %v2892, %v3106
    %v3108 = vmul.f32 %v2893, %v3106
    %3111 = vrot.lane.b32.xlu0 %v3104, 127
    %v3112 = vpop.permute.xlu0 %3111
    %3113 = vrot.lane.b32.xlu0 %v3105, 127
    %v3114 = vpop.permute.xlu0 %3113
    %v3117 = vadd.f32 %v3087, %v3112
    %v3118 = vadd.f32 %v3088, %v3114
    %3121 = vrot.lane.b32.xlu0 %v3107, 127
    %v3122 = vpop.permute.xlu0 %3121
    %3123 = vrot.lane.b32.xlu0 %v3108, 127
    %v3124 = vpop.permute.xlu0 %3123
    %v3127 = vadd.f32 %v3099, %v3122
    %v3128 = vadd.f32 %v3100, %v3124
    %s3129 = sld [smem:[#allocation8 + $0x8]]
    %s3130 = sld [smem:[#allocation8 + $0x39]]
    %v3131 = vstv %s3129
    %v3132 = vmul.f32 %v2889, %v3131
    %v3133 = vmul.f32 %v2890, %v3131
    %v3134 = vmul.f32 %v2891, %v3131
    %v3135 = vstv %s3130
    %v3136 = vmul.f32 %v2892, %v3135
    %v3137 = vmul.f32 %v2893, %v3135
    %v3138 = vmul.f32 %v2894, %v3135
    %3142 = vrot.lane.b32.xlu0 %v3132, 127
    %v3143 = vpop.permute.xlu0 %3142
    %3144 = vrot.lane.b32.xlu0 %v3133, 127
    %v3145 = vpop.permute.xlu0 %3144
    %3146 = vrot.lane.b32.xlu0 %v3134, 127
    %v3147 = vpop.permute.xlu0 %3146
    %v3151 = vadd.f32 %v3050, %v3143
    %v3152 = vadd.f32 %v3051, %v3145
    %v3153 = vadd.f32 %v3052, %v3147
    %3157 = vrot.lane.b32.xlu0 %v3136, 127
    %v3158 = vpop.permute.xlu0 %3157
    %3159 = vrot.lane.b32.xlu0 %v3137, 127
    %v3160 = vpop.permute.xlu0 %3159
    %3161 = vrot.lane.b32.xlu0 %v3138, 127
    %v3162 = vpop.permute.xlu0 %3161
    %v3166 = vadd.f32 %v3064, %v3158
    %v3167 = vadd.f32 %v3065, %v3160
    %v3168 = vadd.f32 %v3066, %v3162
    %s3169 = sld [smem:[#allocation8 + $0xf]]
    %s3170 = sld [smem:[#allocation8 + $0x40]]
    %v3171 = vstv %s3169
    %v3172 = vmul.f32 %v2889, %v3171
    %v3173 = vmul.f32 %v2890, %v3171
    %v3174 = vmul.f32 %v2891, %v3171
    %v3175 = vstv %s3170
    %v3176 = vmul.f32 %v2892, %v3175
    %v3177 = vmul.f32 %v2893, %v3175
    %v3178 = vmul.f32 %v2894, %v3175
    %v3182 = vrot.slane %v3172, 2
    %v3183 = vrot.slane %v3173, 2
    %v3184 = vsel %vm518, %v3182, %v3183
    %v3185 = vrot.slane %v3174, 2
    %v3186 = vsel %vm518, %v3183, %v3185
    %3187 = vrot.lane.b32.xlu0 %v3184, 127
    %v3188 = vpop.permute.xlu0 %3187
    %3189 = vrot.lane.b32.xlu0 %v3186, 127
    %v3190 = vpop.permute.xlu0 %3189
    %v3193 = vadd.f32 %v3117, %v3188
    %v3194 = vadd.f32 %v3118, %v3190
    %v3198 = vrot.slane %v3176, 2
    %v3199 = vrot.slane %v3177, 2
    %v3200 = vsel %vm518, %v3198, %v3199
    %v3201 = vrot.slane %v3178, 2
    %v3202 = vsel %vm518, %v3199, %v3201
    %3203 = vrot.lane.b32.xlu0 %v3200, 127
    %v3204 = vpop.permute.xlu0 %3203
    %3205 = vrot.lane.b32.xlu0 %v3202, 127
    %v3206 = vpop.permute.xlu0 %3205
    %v3209 = vadd.f32 %v3127, %v3204
    %v3210 = vadd.f32 %v3128, %v3206
    %s3211 = sld [smem:[#allocation8 + $0x16]]
    %s3212 = sld [smem:[#allocation8 + $0x47]]
    %v3213 = vstv %s3211
    %v3214 = vmul.f32 %v2889, %v3213
    %v3215 = vmul.f32 %v2890, %v3213
    %v3216 = vmul.f32 %v2891, %v3213
    %v3217 = vstv %s3212
    %v3218 = vmul.f32 %v2892, %v3217
    %v3219 = vmul.f32 %v2893, %v3217
    %v3220 = vmul.f32 %v2894, %v3217
    %v3224 = vrot.slane %v3214, 2
    %v3225 = vrot.slane %v3215, 2
    %v3226 = vsel %vm518, %v3224, %v3225
    %v3227 = vrot.slane %v3216, 2
    %v3228 = vsel %vm518, %v3225, %v3227
    %3229 = vrot.lane.b32.xlu0 %v3226, 127
    %v3230 = vpop.permute.xlu0 %3229
    %3231 = vrot.lane.b32.xlu0 %v3228, 127
    %v3232 = vpop.permute.xlu0 %3231
    %3233 = vrot.lane.b32.xlu0 %v3227, 127
    %v3234 = vpop.permute.xlu0 %3233
    %v3238 = vadd.f32 %v3151, %v3230
    %v3239 = vadd.f32 %v3152, %v3232
    %v3240 = vadd.f32 %v3153, %v3234
    %v3244 = vrot.slane %v3218, 2
    %v3245 = vrot.slane %v3219, 2
    %v3246 = vsel %vm518, %v3244, %v3245
    %v3247 = vrot.slane %v3220, 2
    %v3248 = vsel %vm518, %v3245, %v3247
    %3249 = vrot.lane.b32.xlu0 %v3246, 127
    %v3250 = vpop.permute.xlu0 %3249
    %3251 = vrot.lane.b32.xlu0 %v3248, 127
    %v3252 = vpop.permute.xlu0 %3251
    %3253 = vrot.lane.b32.xlu0 %v3247, 127
    %v3254 = vpop.permute.xlu0 %3253
    %v3258 = vadd.f32 %v3166, %v3250
    %v3259 = vadd.f32 %v3167, %v3252
    %v3260 = vadd.f32 %v3168, %v3254
    %s3261 = sld [smem:[#allocation8 + $0x1d]]
    %s3262 = sld [smem:[#allocation8 + $0x4e]]
    %v3263 = vstv %s3261
    %v3264 = vmul.f32 %v2889, %v3263
    %v3265 = vmul.f32 %v2890, %v3263
    %v3266 = vmul.f32 %v2891, %v3263
    %v3267 = vstv %s3262
    %v3268 = vmul.f32 %v2892, %v3267
    %v3269 = vmul.f32 %v2893, %v3267
    %v3270 = vmul.f32 %v2894, %v3267
    %v3274 = vrot.slane %v3264, 4
    %v3275 = vrot.slane %v3265, 4
    %v3276 = vsel %vm591, %v3274, %v3275
    %v3277 = vrot.slane %v3266, 4
    %v3278 = vsel %vm591, %v3275, %v3277
    %3279 = vrot.lane.b32.xlu0 %v3276, 127
    %v3280 = vpop.permute.xlu0 %3279
    %3281 = vrot.lane.b32.xlu0 %v3278, 127
    %v3282 = vpop.permute.xlu0 %3281
    %v3285 = vadd.f32 %v3193, %v3280
    %v3286 = vadd.f32 %v3194, %v3282
    %v3290 = vrot.slane %v3268, 4
    %v3291 = vrot.slane %v3269, 4
    %v3292 = vsel %vm591, %v3290, %v3291
    %v3293 = vrot.slane %v3270, 4
    %v3294 = vsel %vm591, %v3291, %v3293
    %3295 = vrot.lane.b32.xlu0 %v3292, 127
    %v3296 = vpop.permute.xlu0 %3295
    %3297 = vrot.lane.b32.xlu0 %v3294, 127
    %v3298 = vpop.permute.xlu0 %3297
    %v3301 = vadd.f32 %v3209, %v3296
    %v3302 = vadd.f32 %v3210, %v3298
    %s3303 = sld [smem:[#allocation8 + $0x24]]
    %s3304 = sld [smem:[#allocation8 + $0x55]]
    %v3305 = vstv %s3303
    %v3306 = vmul.f32 %v2889, %v3305
    %v3307 = vmul.f32 %v2890, %v3305
    %v3308 = vmul.f32 %v2891, %v3305
    %v3309 = vstv %s3304
    %v3310 = vmul.f32 %v2892, %v3309
    %v3311 = vmul.f32 %v2893, %v3309
    %v3312 = vmul.f32 %v2894, %v3309
    %v3316 = vrot.slane %v3306, 4
    %v3317 = vrot.slane %v3307, 4
    %v3318 = vsel %vm591, %v3316, %v3317
    %v3319 = vrot.slane %v3308, 4
    %v3320 = vsel %vm591, %v3317, %v3319
    %3321 = vrot.lane.b32.xlu0 %v3318, 127
    %v3322 = vpop.permute.xlu0 %3321
    %3323 = vrot.lane.b32.xlu0 %v3320, 127
    %v3324 = vpop.permute.xlu0 %3323
    %3325 = vrot.lane.b32.xlu0 %v3319, 127
    %v3326 = vpop.permute.xlu0 %3325
    %v3330 = vadd.f32 %v3238, %v3322
    %v3331 = vadd.f32 %v3239, %v3324
    %v3332 = vadd.f32 %v3240, %v3326
    %v3336 = vrot.slane %v3310, 4
    %v3337 = vrot.slane %v3311, 4
    %v3338 = vsel %vm591, %v3336, %v3337
    %v3339 = vrot.slane %v3312, 4
    %v3340 = vsel %vm591, %v3337, %v3339
    %3341 = vrot.lane.b32.xlu0 %v3338, 127
    %v3342 = vpop.permute.xlu0 %3341
    %3343 = vrot.lane.b32.xlu0 %v3340, 127
    %v3344 = vpop.permute.xlu0 %3343
    %3345 = vrot.lane.b32.xlu0 %v3339, 127
    %v3346 = vpop.permute.xlu0 %3345
    %v3350 = vadd.f32 %v3258, %v3342
    %v3351 = vadd.f32 %v3259, %v3344
    %v3352 = vadd.f32 %v3260, %v3346
    %s3353 = sld [smem:[#allocation8 + $0x2b]]
    %s3354 = sld [smem:[#allocation8 + $0x5c]]
    %v3355 = vstv %s3353
    %v3356 = vmul.f32 %v2889, %v3355
    %v3357 = vmul.f32 %v2890, %v3355
    %v3358 = vmul.f32 %v2891, %v3355
    %v3359 = vstv %s3354
    %v3360 = vmul.f32 %v2892, %v3359
    %v3361 = vmul.f32 %v2893, %v3359
    %v3362 = vmul.f32 %v2894, %v3359
    %v3366 = vrot.slane %v3356, 6
    %v3367 = vrot.slane %v3357, 6
    %v3368 = vsel %vm664, %v3366, %v3367
    %v3369 = vrot.slane %v3358, 6
    %v3370 = vsel %vm664, %v3367, %v3369
    %3371 = vrot.lane.b32.xlu0 %v3368, 127
    %v3372 = vpop.permute.xlu0 %3371
    %3373 = vrot.lane.b32.xlu0 %v3370, 127
    %v3374 = vpop.permute.xlu0 %3373
    %v3377 = vadd.f32 %v3285, %v3372
    %v3378 = vadd.f32 %v3286, %v3374
    %v3382 = vrot.slane %v3360, 6
    %v3383 = vrot.slane %v3361, 6
    %v3384 = vsel %vm664, %v3382, %v3383
    %v3385 = vrot.slane %v3362, 6
    %v3386 = vsel %vm664, %v3383, %v3385
    %3387 = vrot.lane.b32.xlu0 %v3384, 127
    %v3388 = vpop.permute.xlu0 %3387
    %3389 = vrot.lane.b32.xlu0 %v3386, 127
    %v3390 = vpop.permute.xlu0 %3389
    %v3393 = vadd.f32 %v3301, %v3388
    %v3394 = vadd.f32 %v3302, %v3390
    %s3395 = sld [smem:[#allocation8 + $0x2]]
    %s3396 = sld [smem:[#allocation8 + $0x33]]
    %v3397 = vstv %s3395
    %v3398 = vmul.f32 %v2889, %v3397
    %v3399 = vmul.f32 %v2890, %v3397
    %v3400 = vstv %s3396
    %v3401 = vmul.f32 %v2892, %v3400
    %v3402 = vmul.f32 %v2893, %v3400
    %3405 = vrot.lane.b32.xlu0 %v3398, 126
    %v3406 = vpop.permute.xlu0 %3405
    %3407 = vrot.lane.b32.xlu0 %v3399, 126
    %v3408 = vpop.permute.xlu0 %3407
    %v3411 = vadd.f32 %v3377, %v3406
    %v3412 = vadd.f32 %v3378, %v3408
    %3415 = vrot.lane.b32.xlu0 %v3401, 126
    %v3416 = vpop.permute.xlu0 %3415
    %3417 = vrot.lane.b32.xlu0 %v3402, 126
    %v3418 = vpop.permute.xlu0 %3417
    %v3421 = vadd.f32 %v3393, %v3416
    %v3422 = vadd.f32 %v3394, %v3418
    %s3423 = sld [smem:[#allocation8 + $0x9]]
    %s3424 = sld [smem:[#allocation8 + $0x3a]]
    %v3425 = vstv %s3423
    %v3426 = vmul.f32 %v2889, %v3425
    %v3427 = vmul.f32 %v2890, %v3425
    %v3428 = vmul.f32 %v2891, %v3425
    %v3429 = vstv %s3424
    %v3430 = vmul.f32 %v2892, %v3429
    %v3431 = vmul.f32 %v2893, %v3429
    %v3432 = vmul.f32 %v2894, %v3429
    %3436 = vrot.lane.b32.xlu0 %v3426, 126
    %v3437 = vpop.permute.xlu0 %3436
    %3438 = vrot.lane.b32.xlu0 %v3427, 126
    %v3439 = vpop.permute.xlu0 %3438
    %3440 = vrot.lane.b32.xlu0 %v3428, 126
    %v3441 = vpop.permute.xlu0 %3440
    %v3445 = vadd.f32 %v3330, %v3437
    %v3446 = vadd.f32 %v3331, %v3439
    %v3447 = vadd.f32 %v3332, %v3441
    %3451 = vrot.lane.b32.xlu0 %v3430, 126
    %v3452 = vpop.permute.xlu0 %3451
    %3453 = vrot.lane.b32.xlu0 %v3431, 126
    %v3454 = vpop.permute.xlu0 %3453
    %3455 = vrot.lane.b32.xlu0 %v3432, 126
    %v3456 = vpop.permute.xlu0 %3455
    %v3460 = vadd.f32 %v3350, %v3452
    %v3461 = vadd.f32 %v3351, %v3454
    %v3462 = vadd.f32 %v3352, %v3456
    %s3463 = sld [smem:[#allocation8 + $0x10]]
    %s3464 = sld [smem:[#allocation8 + $0x41]]
    %v3465 = vstv %s3463
    %v3466 = vmul.f32 %v2889, %v3465
    %v3467 = vmul.f32 %v2890, %v3465
    %v3468 = vmul.f32 %v2891, %v3465
    %v3469 = vstv %s3464
    %v3470 = vmul.f32 %v2892, %v3469
    %v3471 = vmul.f32 %v2893, %v3469
    %v3472 = vmul.f32 %v2894, %v3469
    %v3476 = vrot.slane %v3466, 2
    %v3477 = vrot.slane %v3467, 2
    %v3478 = vsel %vm518, %v3476, %v3477
    %v3479 = vrot.slane %v3468, 2
    %v3480 = vsel %vm518, %v3477, %v3479
    %3481 = vrot.lane.b32.xlu0 %v3478, 126
    %v3482 = vpop.permute.xlu0 %3481
    %3483 = vrot.lane.b32.xlu0 %v3480, 126
    %v3484 = vpop.permute.xlu0 %3483
    %v3487 = vadd.f32 %v3411, %v3482
    %v3488 = vadd.f32 %v3412, %v3484
    %v3492 = vrot.slane %v3470, 2
    %v3493 = vrot.slane %v3471, 2
    %v3494 = vsel %vm518, %v3492, %v3493
    %v3495 = vrot.slane %v3472, 2
    %v3496 = vsel %vm518, %v3493, %v3495
    %3497 = vrot.lane.b32.xlu0 %v3494, 126
    %v3498 = vpop.permute.xlu0 %3497
    %3499 = vrot.lane.b32.xlu0 %v3496, 126
    %v3500 = vpop.permute.xlu0 %3499
    %v3503 = vadd.f32 %v3421, %v3498
    %v3504 = vadd.f32 %v3422, %v3500
    %s3505 = sld [smem:[#allocation8 + $0x17]]
    %s3506 = sld [smem:[#allocation8 + $0x48]]
    %v3507 = vstv %s3505
    %v3508 = vmul.f32 %v2889, %v3507
    %v3509 = vmul.f32 %v2890, %v3507
    %v3510 = vmul.f32 %v2891, %v3507
    %v3511 = vstv %s3506
    %v3512 = vmul.f32 %v2892, %v3511
    %v3513 = vmul.f32 %v2893, %v3511
    %v3514 = vmul.f32 %v2894, %v3511
    %v3518 = vrot.slane %v3508, 2
    %v3519 = vrot.slane %v3509, 2
    %v3520 = vsel %vm518, %v3518, %v3519
    %v3521 = vrot.slane %v3510, 2
    %v3522 = vsel %vm518, %v3519, %v3521
    %3523 = vrot.lane.b32.xlu0 %v3520, 126
    %v3524 = vpop.permute.xlu0 %3523
    %3525 = vrot.lane.b32.xlu0 %v3522, 126
    %v3526 = vpop.permute.xlu0 %3525
    %3527 = vrot.lane.b32.xlu0 %v3521, 126
    %v3528 = vpop.permute.xlu0 %3527
    %v3532 = vadd.f32 %v3445, %v3524
    %v3533 = vadd.f32 %v3446, %v3526
    %v3534 = vadd.f32 %v3447, %v3528
    %v3538 = vrot.slane %v3512, 2
    %v3539 = vrot.slane %v3513, 2
    %v3540 = vsel %vm518, %v3538, %v3539
    %v3541 = vrot.slane %v3514, 2
    %v3542 = vsel %vm518, %v3539, %v3541
    %3543 = vrot.lane.b32.xlu0 %v3540, 126
    %v3544 = vpop.permute.xlu0 %3543
    %3545 = vrot.lane.b32.xlu0 %v3542, 126
    %v3546 = vpop.permute.xlu0 %3545
    %3547 = vrot.lane.b32.xlu0 %v3541, 126
    %v3548 = vpop.permute.xlu0 %3547
    %v3552 = vadd.f32 %v3460, %v3544
    %v3553 = vadd.f32 %v3461, %v3546
    %v3554 = vadd.f32 %v3462, %v3548
    %s3555 = sld [smem:[#allocation8 + $0x1e]]
    %s3556 = sld [smem:[#allocation8 + $0x4f]]
    %v3557 = vstv %s3555
    %v3558 = vmul.f32 %v2889, %v3557
    %v3559 = vmul.f32 %v2890, %v3557
    %v3560 = vmul.f32 %v2891, %v3557
    %v3561 = vstv %s3556
    %v3562 = vmul.f32 %v2892, %v3561
    %v3563 = vmul.f32 %v2893, %v3561
    %v3564 = vmul.f32 %v2894, %v3561
    %v3568 = vrot.slane %v3558, 4
    %v3569 = vrot.slane %v3559, 4
    %v3570 = vsel %vm591, %v3568, %v3569
    %v3571 = vrot.slane %v3560, 4
    %v3572 = vsel %vm591, %v3569, %v3571
    %3573 = vrot.lane.b32.xlu0 %v3570, 126
    %v3574 = vpop.permute.xlu0 %3573
    %3575 = vrot.lane.b32.xlu0 %v3572, 126
    %v3576 = vpop.permute.xlu0 %3575
    %v3579 = vadd.f32 %v3487, %v3574
    %v3580 = vadd.f32 %v3488, %v3576
    %v3584 = vrot.slane %v3562, 4
    %v3585 = vrot.slane %v3563, 4
    %v3586 = vsel %vm591, %v3584, %v3585
    %v3587 = vrot.slane %v3564, 4
    %v3588 = vsel %vm591, %v3585, %v3587
    %3589 = vrot.lane.b32.xlu0 %v3586, 126
    %v3590 = vpop.permute.xlu0 %3589
    %3591 = vrot.lane.b32.xlu0 %v3588, 126
    %v3592 = vpop.permute.xlu0 %3591
    %v3595 = vadd.f32 %v3503, %v3590
    %v3596 = vadd.f32 %v3504, %v3592
    %s3597 = sld [smem:[#allocation8 + $0x25]]
    %s3598 = sld [smem:[#allocation8 + $0x56]]
    %v3599 = vstv %s3597
    %v3600 = vmul.f32 %v2889, %v3599
    %v3601 = vmul.f32 %v2890, %v3599
    %v3602 = vmul.f32 %v2891, %v3599
    %v3603 = vstv %s3598
    %v3604 = vmul.f32 %v2892, %v3603
    %v3605 = vmul.f32 %v2893, %v3603
    %v3606 = vmul.f32 %v2894, %v3603
    %v3610 = vrot.slane %v3600, 4
    %v3611 = vrot.slane %v3601, 4
    %v3612 = vsel %vm591, %v3610, %v3611
    %v3613 = vrot.slane %v3602, 4
    %v3614 = vsel %vm591, %v3611, %v3613
    %3615 = vrot.lane.b32.xlu0 %v3612, 126
    %v3616 = vpop.permute.xlu0 %3615
    %3617 = vrot.lane.b32.xlu0 %v3614, 126
    %v3618 = vpop.permute.xlu0 %3617
    %3619 = vrot.lane.b32.xlu0 %v3613, 126
    %v3620 = vpop.permute.xlu0 %3619
    %v3624 = vadd.f32 %v3532, %v3616
    %v3625 = vadd.f32 %v3533, %v3618
    %v3626 = vadd.f32 %v3534, %v3620
    %v3630 = vrot.slane %v3604, 4
    %v3631 = vrot.slane %v3605, 4
    %v3632 = vsel %vm591, %v3630, %v3631
    %v3633 = vrot.slane %v3606, 4
    %v3634 = vsel %vm591, %v3631, %v3633
    %3635 = vrot.lane.b32.xlu0 %v3632, 126
    %v3636 = vpop.permute.xlu0 %3635
    %3637 = vrot.lane.b32.xlu0 %v3634, 126
    %v3638 = vpop.permute.xlu0 %3637
    %3639 = vrot.lane.b32.xlu0 %v3633, 126
    %v3640 = vpop.permute.xlu0 %3639
    %v3644 = vadd.f32 %v3552, %v3636
    %v3645 = vadd.f32 %v3553, %v3638
    %v3646 = vadd.f32 %v3554, %v3640
    %s3647 = sld [smem:[#allocation8 + $0x2c]]
    %s3648 = sld [smem:[#allocation8 + $0x5d]]
    %v3649 = vstv %s3647
    %v3650 = vmul.f32 %v2889, %v3649
    %v3651 = vmul.f32 %v2890, %v3649
    %v3652 = vmul.f32 %v2891, %v3649
    %v3653 = vstv %s3648
    %v3654 = vmul.f32 %v2892, %v3653
    %v3655 = vmul.f32 %v2893, %v3653
    %v3656 = vmul.f32 %v2894, %v3653
    %v3660 = vrot.slane %v3650, 6
    %v3661 = vrot.slane %v3651, 6
    %v3662 = vsel %vm664, %v3660, %v3661
    %v3663 = vrot.slane %v3652, 6
    %v3664 = vsel %vm664, %v3661, %v3663
    %3665 = vrot.lane.b32.xlu0 %v3662, 126
    %v3666 = vpop.permute.xlu0 %3665
    %3667 = vrot.lane.b32.xlu0 %v3664, 126
    %v3668 = vpop.permute.xlu0 %3667
    %v3671 = vadd.f32 %v3579, %v3666
    %v3672 = vadd.f32 %v3580, %v3668
    %v3676 = vrot.slane %v3654, 6
    %v3677 = vrot.slane %v3655, 6
    %v3678 = vsel %vm664, %v3676, %v3677
    %v3679 = vrot.slane %v3656, 6
    %v3680 = vsel %vm664, %v3677, %v3679
    %3681 = vrot.lane.b32.xlu0 %v3678, 126
    %v3682 = vpop.permute.xlu0 %3681
    %3683 = vrot.lane.b32.xlu0 %v3680, 126
    %v3684 = vpop.permute.xlu0 %3683
    %v3687 = vadd.f32 %v3595, %v3682
    %v3688 = vadd.f32 %v3596, %v3684
    %s3689 = sld [smem:[#allocation8 + $0x3]]
    %s3690 = sld [smem:[#allocation8 + $0x34]]
    %v3691 = vstv %s3689
    %v3692 = vmul.f32 %v2889, %v3691
    %v3693 = vmul.f32 %v2890, %v3691
    %v3694 = vstv %s3690
    %v3695 = vmul.f32 %v2892, %v3694
    %v3696 = vmul.f32 %v2893, %v3694
    %3699 = vrot.lane.b32.xlu0 %v3692, 125
    %v3700 = vpop.permute.xlu0 %3699
    %3701 = vrot.lane.b32.xlu0 %v3693, 125
    %v3702 = vpop.permute.xlu0 %3701
    %v3705 = vadd.f32 %v3671, %v3700
    %v3706 = vadd.f32 %v3672, %v3702
    %3709 = vrot.lane.b32.xlu0 %v3695, 125
    %v3710 = vpop.permute.xlu0 %3709
    %3711 = vrot.lane.b32.xlu0 %v3696, 125
    %v3712 = vpop.permute.xlu0 %3711
    %v3715 = vadd.f32 %v3687, %v3710
    %v3716 = vadd.f32 %v3688, %v3712
    %s3717 = sld [smem:[#allocation8 + $0xa]]
    %s3718 = sld [smem:[#allocation8 + $0x3b]]
    %v3719 = vstv %s3717
    %v3720 = vmul.f32 %v2889, %v3719
    %v3721 = vmul.f32 %v2890, %v3719
    %v3722 = vmul.f32 %v2891, %v3719
    %v3723 = vstv %s3718
    %v3724 = vmul.f32 %v2892, %v3723
    %v3725 = vmul.f32 %v2893, %v3723
    %v3726 = vmul.f32 %v2894, %v3723
    %3730 = vrot.lane.b32.xlu0 %v3720, 125
    %v3731 = vpop.permute.xlu0 %3730
    %3732 = vrot.lane.b32.xlu0 %v3721, 125
    %v3733 = vpop.permute.xlu0 %3732
    %3734 = vrot.lane.b32.xlu0 %v3722, 125
    %v3735 = vpop.permute.xlu0 %3734
    %v3739 = vadd.f32 %v3624, %v3731
    %v3740 = vadd.f32 %v3625, %v3733
    %v3741 = vadd.f32 %v3626, %v3735
    %3745 = vrot.lane.b32.xlu0 %v3724, 125
    %v3746 = vpop.permute.xlu0 %3745
    %3747 = vrot.lane.b32.xlu0 %v3725, 125
    %v3748 = vpop.permute.xlu0 %3747
    %3749 = vrot.lane.b32.xlu0 %v3726, 125
    %v3750 = vpop.permute.xlu0 %3749
    %v3754 = vadd.f32 %v3644, %v3746
    %v3755 = vadd.f32 %v3645, %v3748
    %v3756 = vadd.f32 %v3646, %v3750
    %s3757 = sld [smem:[#allocation8 + $0x11]]
    %s3758 = sld [smem:[#allocation8 + $0x42]]
    %v3759 = vstv %s3757
    %v3760 = vmul.f32 %v2889, %v3759
    %v3761 = vmul.f32 %v2890, %v3759
    %v3762 = vmul.f32 %v2891, %v3759
    %v3763 = vstv %s3758
    %v3764 = vmul.f32 %v2892, %v3763
    %v3765 = vmul.f32 %v2893, %v3763
    %v3766 = vmul.f32 %v2894, %v3763
    %v3770 = vrot.slane %v3760, 2
    %v3771 = vrot.slane %v3761, 2
    %v3772 = vsel %vm518, %v3770, %v3771
    %v3773 = vrot.slane %v3762, 2
    %v3774 = vsel %vm518, %v3771, %v3773
    %3775 = vrot.lane.b32.xlu0 %v3772, 125
    %v3776 = vpop.permute.xlu0 %3775
    %3777 = vrot.lane.b32.xlu0 %v3774, 125
    %v3778 = vpop.permute.xlu0 %3777
    %v3781 = vadd.f32 %v3705, %v3776
    %v3782 = vadd.f32 %v3706, %v3778
    %v3786 = vrot.slane %v3764, 2
    %v3787 = vrot.slane %v3765, 2
    %v3788 = vsel %vm518, %v3786, %v3787
    %v3789 = vrot.slane %v3766, 2
    %v3790 = vsel %vm518, %v3787, %v3789
    %3791 = vrot.lane.b32.xlu0 %v3788, 125
    %v3792 = vpop.permute.xlu0 %3791
    %3793 = vrot.lane.b32.xlu0 %v3790, 125
    %v3794 = vpop.permute.xlu0 %3793
    %v3797 = vadd.f32 %v3715, %v3792
    %v3798 = vadd.f32 %v3716, %v3794
    %s3799 = sld [smem:[#allocation8 + $0x18]]
    %s3800 = sld [smem:[#allocation8 + $0x49]]
    %v3801 = vstv %s3799
    %v3802 = vmul.f32 %v2889, %v3801
    %v3803 = vmul.f32 %v2890, %v3801
    %v3804 = vmul.f32 %v2891, %v3801
    %v3805 = vstv %s3800
    %v3806 = vmul.f32 %v2892, %v3805
    %v3807 = vmul.f32 %v2893, %v3805
    %v3808 = vmul.f32 %v2894, %v3805
    %v3812 = vrot.slane %v3802, 2
    %v3813 = vrot.slane %v3803, 2
    %v3814 = vsel %vm518, %v3812, %v3813
    %v3815 = vrot.slane %v3804, 2
    %v3816 = vsel %vm518, %v3813, %v3815
    %3817 = vrot.lane.b32.xlu0 %v3814, 125
    %v3818 = vpop.permute.xlu0 %3817
    %3819 = vrot.lane.b32.xlu0 %v3816, 125
    %v3820 = vpop.permute.xlu0 %3819
    %3821 = vrot.lane.b32.xlu0 %v3815, 125
    %v3822 = vpop.permute.xlu0 %3821
    %v3826 = vadd.f32 %v3739, %v3818
    %v3827 = vadd.f32 %v3740, %v3820
    %v3828 = vadd.f32 %v3741, %v3822
    %v3832 = vrot.slane %v3806, 2
    %v3833 = vrot.slane %v3807, 2
    %v3834 = vsel %vm518, %v3832, %v3833
    %v3835 = vrot.slane %v3808, 2
    %v3836 = vsel %vm518, %v3833, %v3835
    %3837 = vrot.lane.b32.xlu0 %v3834, 125
    %v3838 = vpop.permute.xlu0 %3837
    %3839 = vrot.lane.b32.xlu0 %v3836, 125
    %v3840 = vpop.permute.xlu0 %3839
    %3841 = vrot.lane.b32.xlu0 %v3835, 125
    %v3842 = vpop.permute.xlu0 %3841
    %v3846 = vadd.f32 %v3754, %v3838
    %v3847 = vadd.f32 %v3755, %v3840
    %v3848 = vadd.f32 %v3756, %v3842
    %s3849 = sld [smem:[#allocation8 + $0x1f]]
    %s3850 = sld [smem:[#allocation8 + $0x50]]
    %v3851 = vstv %s3849
    %v3852 = vmul.f32 %v2889, %v3851
    %v3853 = vmul.f32 %v2890, %v3851
    %v3854 = vmul.f32 %v2891, %v3851
    %v3855 = vstv %s3850
    %v3856 = vmul.f32 %v2892, %v3855
    %v3857 = vmul.f32 %v2893, %v3855
    %v3858 = vmul.f32 %v2894, %v3855
    %v3862 = vrot.slane %v3852, 4
    %v3863 = vrot.slane %v3853, 4
    %v3864 = vsel %vm591, %v3862, %v3863
    %v3865 = vrot.slane %v3854, 4
    %v3866 = vsel %vm591, %v3863, %v3865
    %3867 = vrot.lane.b32.xlu0 %v3864, 125
    %v3868 = vpop.permute.xlu0 %3867
    %3869 = vrot.lane.b32.xlu0 %v3866, 125
    %v3870 = vpop.permute.xlu0 %3869
    %v3873 = vadd.f32 %v3781, %v3868
    %v3874 = vadd.f32 %v3782, %v3870
    %v3878 = vrot.slane %v3856, 4
    %v3879 = vrot.slane %v3857, 4
    %v3880 = vsel %vm591, %v3878, %v3879
    %v3881 = vrot.slane %v3858, 4
    %v3882 = vsel %vm591, %v3879, %v3881
    %3883 = vrot.lane.b32.xlu0 %v3880, 125
    %v3884 = vpop.permute.xlu0 %3883
    %3885 = vrot.lane.b32.xlu0 %v3882, 125
    %v3886 = vpop.permute.xlu0 %3885
    %v3889 = vadd.f32 %v3797, %v3884
    %v3890 = vadd.f32 %v3798, %v3886
    %s3891 = sld [smem:[#allocation8 + $0x26]]
    %s3892 = sld [smem:[#allocation8 + $0x57]]
    %v3893 = vstv %s3891
    %v3894 = vmul.f32 %v2889, %v3893
    %v3895 = vmul.f32 %v2890, %v3893
    %v3896 = vmul.f32 %v2891, %v3893
    %v3897 = vstv %s3892
    %v3898 = vmul.f32 %v2892, %v3897
    %v3899 = vmul.f32 %v2893, %v3897
    %v3900 = vmul.f32 %v2894, %v3897
    %v3904 = vrot.slane %v3894, 4
    %v3905 = vrot.slane %v3895, 4
    %v3906 = vsel %vm591, %v3904, %v3905
    %v3907 = vrot.slane %v3896, 4
    %v3908 = vsel %vm591, %v3905, %v3907
    %3909 = vrot.lane.b32.xlu0 %v3906, 125
    %v3910 = vpop.permute.xlu0 %3909
    %3911 = vrot.lane.b32.xlu0 %v3908, 125
    %v3912 = vpop.permute.xlu0 %3911
    %3913 = vrot.lane.b32.xlu0 %v3907, 125
    %v3914 = vpop.permute.xlu0 %3913
    %v3918 = vadd.f32 %v3826, %v3910
    %v3919 = vadd.f32 %v3827, %v3912
    %v3920 = vadd.f32 %v3828, %v3914
    %v3924 = vrot.slane %v3898, 4
    %v3925 = vrot.slane %v3899, 4
    %v3926 = vsel %vm591, %v3924, %v3925
    %v3927 = vrot.slane %v3900, 4
    %v3928 = vsel %vm591, %v3925, %v3927
    %3929 = vrot.lane.b32.xlu0 %v3926, 125
    %v3930 = vpop.permute.xlu0 %3929
    %3931 = vrot.lane.b32.xlu0 %v3928, 125
    %v3932 = vpop.permute.xlu0 %3931
    %3933 = vrot.lane.b32.xlu0 %v3927, 125
    %v3934 = vpop.permute.xlu0 %3933
    %v3938 = vadd.f32 %v3846, %v3930
    %v3939 = vadd.f32 %v3847, %v3932
    %v3940 = vadd.f32 %v3848, %v3934
    %s3941 = sld [smem:[#allocation8 + $0x2d]]
    %s3942 = sld [smem:[#allocation8 + $0x5e]]
    %v3943 = vstv %s3941
    %v3944 = vmul.f32 %v2889, %v3943
    %v3945 = vmul.f32 %v2890, %v3943
    %v3946 = vmul.f32 %v2891, %v3943
    %v3947 = vstv %s3942
    %v3948 = vmul.f32 %v2892, %v3947
    %v3949 = vmul.f32 %v2893, %v3947
    %v3950 = vmul.f32 %v2894, %v3947
    %v3954 = vrot.slane %v3944, 6
    %v3955 = vrot.slane %v3945, 6
    %v3956 = vsel %vm664, %v3954, %v3955
    %v3957 = vrot.slane %v3946, 6
    %v3958 = vsel %vm664, %v3955, %v3957
    %3959 = vrot.lane.b32.xlu0 %v3956, 125
    %v3960 = vpop.permute.xlu0 %3959
    %3961 = vrot.lane.b32.xlu0 %v3958, 125
    %v3962 = vpop.permute.xlu0 %3961
    %v3965 = vadd.f32 %v3873, %v3960
    %v3966 = vadd.f32 %v3874, %v3962
    %v3970 = vrot.slane %v3948, 6
    %v3971 = vrot.slane %v3949, 6
    %v3972 = vsel %vm664, %v3970, %v3971
    %v3973 = vrot.slane %v3950, 6
    %v3974 = vsel %vm664, %v3971, %v3973
    %3975 = vrot.lane.b32.xlu0 %v3972, 125
    %v3976 = vpop.permute.xlu0 %3975
    %3977 = vrot.lane.b32.xlu0 %v3974, 125
    %v3978 = vpop.permute.xlu0 %3977
    %v3981 = vadd.f32 %v3889, %v3976
    %v3982 = vadd.f32 %v3890, %v3978
    %s3983 = sld [smem:[#allocation8 + $0x4]]
    %s3984 = sld [smem:[#allocation8 + $0x35]]
    %v3985 = vstv %s3983
    %v3986 = vmul.f32 %v2889, %v3985
    %v3987 = vmul.f32 %v2890, %v3985
    %v3988 = vstv %s3984
    %v3989 = vmul.f32 %v2892, %v3988
    %v3990 = vmul.f32 %v2893, %v3988
    %3993 = vrot.lane.b32.xlu0 %v3986, 124
    %v3994 = vpop.permute.xlu0 %3993
    %3995 = vrot.lane.b32.xlu0 %v3987, 124
    %v3996 = vpop.permute.xlu0 %3995
    %v3999 = vadd.f32 %v3965, %v3994
    %v4000 = vadd.f32 %v3966, %v3996
    %4003 = vrot.lane.b32.xlu0 %v3989, 124
    %v4004 = vpop.permute.xlu0 %4003
    %4005 = vrot.lane.b32.xlu0 %v3990, 124
    %v4006 = vpop.permute.xlu0 %4005
    %v4009 = vadd.f32 %v3981, %v4004
    %v4010 = vadd.f32 %v3982, %v4006
    %s4011 = sld [smem:[#allocation8 + $0xb]]
    %s4012 = sld [smem:[#allocation8 + $0x3c]]
    %v4013 = vstv %s4011
    %v4014 = vmul.f32 %v2889, %v4013
    %v4015 = vmul.f32 %v2890, %v4013
    %v4016 = vmul.f32 %v2891, %v4013
    %v4017 = vstv %s4012
    %v4018 = vmul.f32 %v2892, %v4017
    %v4019 = vmul.f32 %v2893, %v4017
    %v4020 = vmul.f32 %v2894, %v4017
    %4024 = vrot.lane.b32.xlu0 %v4014, 124
    %v4025 = vpop.permute.xlu0 %4024
    %4026 = vrot.lane.b32.xlu0 %v4015, 124
    %v4027 = vpop.permute.xlu0 %4026
    %4028 = vrot.lane.b32.xlu0 %v4016, 124
    %v4029 = vpop.permute.xlu0 %4028
    %v4033 = vadd.f32 %v3918, %v4025
    %v4034 = vadd.f32 %v3919, %v4027
    %v4035 = vadd.f32 %v3920, %v4029
    %4039 = vrot.lane.b32.xlu0 %v4018, 124
    %v4040 = vpop.permute.xlu0 %4039
    %4041 = vrot.lane.b32.xlu0 %v4019, 124
    %v4042 = vpop.permute.xlu0 %4041
    %4043 = vrot.lane.b32.xlu0 %v4020, 124
    %v4044 = vpop.permute.xlu0 %4043
    %v4048 = vadd.f32 %v3938, %v4040
    %v4049 = vadd.f32 %v3939, %v4042
    %v4050 = vadd.f32 %v3940, %v4044
    %s4051 = sld [smem:[#allocation8 + $0x12]]
    %s4052 = sld [smem:[#allocation8 + $0x43]]
    %v4053 = vstv %s4051
    %v4054 = vmul.f32 %v2889, %v4053
    %v4055 = vmul.f32 %v2890, %v4053
    %v4056 = vmul.f32 %v2891, %v4053
    %v4057 = vstv %s4052
    %v4058 = vmul.f32 %v2892, %v4057
    %v4059 = vmul.f32 %v2893, %v4057
    %v4060 = vmul.f32 %v2894, %v4057
    %v4064 = vrot.slane %v4054, 2
    %v4065 = vrot.slane %v4055, 2
    %v4066 = vsel %vm518, %v4064, %v4065
    %v4067 = vrot.slane %v4056, 2
    %v4068 = vsel %vm518, %v4065, %v4067
    %4069 = vrot.lane.b32.xlu0 %v4066, 124
    %v4070 = vpop.permute.xlu0 %4069
    %4071 = vrot.lane.b32.xlu0 %v4068, 124
    %v4072 = vpop.permute.xlu0 %4071
    %v4075 = vadd.f32 %v3999, %v4070
    %v4076 = vadd.f32 %v4000, %v4072
    %v4080 = vrot.slane %v4058, 2
    %v4081 = vrot.slane %v4059, 2
    %v4082 = vsel %vm518, %v4080, %v4081
    %v4083 = vrot.slane %v4060, 2
    %v4084 = vsel %vm518, %v4081, %v4083
    %4085 = vrot.lane.b32.xlu0 %v4082, 124
    %v4086 = vpop.permute.xlu0 %4085
    %4087 = vrot.lane.b32.xlu0 %v4084, 124
    %v4088 = vpop.permute.xlu0 %4087
    %v4091 = vadd.f32 %v4009, %v4086
    %v4092 = vadd.f32 %v4010, %v4088
    %s4093 = sld [smem:[#allocation8 + $0x19]]
    %s4094 = sld [smem:[#allocation8 + $0x4a]]
    %v4095 = vstv %s4093
    %v4096 = vmul.f32 %v2889, %v4095
    %v4097 = vmul.f32 %v2890, %v4095
    %v4098 = vmul.f32 %v2891, %v4095
    %v4099 = vstv %s4094
    %v4100 = vmul.f32 %v2892, %v4099
    %v4101 = vmul.f32 %v2893, %v4099
    %v4102 = vmul.f32 %v2894, %v4099
    %v4106 = vrot.slane %v4096, 2
    %v4107 = vrot.slane %v4097, 2
    %v4108 = vsel %vm518, %v4106, %v4107
    %v4109 = vrot.slane %v4098, 2
    %v4110 = vsel %vm518, %v4107, %v4109
    %4111 = vrot.lane.b32.xlu0 %v4108, 124
    %v4112 = vpop.permute.xlu0 %4111
    %4113 = vrot.lane.b32.xlu0 %v4110, 124
    %v4114 = vpop.permute.xlu0 %4113
    %4115 = vrot.lane.b32.xlu0 %v4109, 124
    %v4116 = vpop.permute.xlu0 %4115
    %v4120 = vadd.f32 %v4033, %v4112
    %v4121 = vadd.f32 %v4034, %v4114
    %v4122 = vadd.f32 %v4035, %v4116
    %v4126 = vrot.slane %v4100, 2
    %v4127 = vrot.slane %v4101, 2
    %v4128 = vsel %vm518, %v4126, %v4127
    %v4129 = vrot.slane %v4102, 2
    %v4130 = vsel %vm518, %v4127, %v4129
    %4131 = vrot.lane.b32.xlu0 %v4128, 124
    %v4132 = vpop.permute.xlu0 %4131
    %4133 = vrot.lane.b32.xlu0 %v4130, 124
    %v4134 = vpop.permute.xlu0 %4133
    %4135 = vrot.lane.b32.xlu0 %v4129, 124
    %v4136 = vpop.permute.xlu0 %4135
    %v4140 = vadd.f32 %v4048, %v4132
    %v4141 = vadd.f32 %v4049, %v4134
    %v4142 = vadd.f32 %v4050, %v4136
    %s4143 = sld [smem:[#allocation8 + $0x20]]
    %s4144 = sld [smem:[#allocation8 + $0x51]]
    %v4145 = vstv %s4143
    %v4146 = vmul.f32 %v2889, %v4145
    %v4147 = vmul.f32 %v2890, %v4145
    %v4148 = vmul.f32 %v2891, %v4145
    %v4149 = vstv %s4144
    %v4150 = vmul.f32 %v2892, %v4149
    %v4151 = vmul.f32 %v2893, %v4149
    %v4152 = vmul.f32 %v2894, %v4149
    %v4156 = vrot.slane %v4146, 4
    %v4157 = vrot.slane %v4147, 4
    %v4158 = vsel %vm591, %v4156, %v4157
    %v4159 = vrot.slane %v4148, 4
    %v4160 = vsel %vm591, %v4157, %v4159
    %4161 = vrot.lane.b32.xlu0 %v4158, 124
    %v4162 = vpop.permute.xlu0 %4161
    %4163 = vrot.lane.b32.xlu0 %v4160, 124
    %v4164 = vpop.permute.xlu0 %4163
    %v4167 = vadd.f32 %v4075, %v4162
    %v4168 = vadd.f32 %v4076, %v4164
    %v4172 = vrot.slane %v4150, 4
    %v4173 = vrot.slane %v4151, 4
    %v4174 = vsel %vm591, %v4172, %v4173
    %v4175 = vrot.slane %v4152, 4
    %v4176 = vsel %vm591, %v4173, %v4175
    %4177 = vrot.lane.b32.xlu0 %v4174, 124
    %v4178 = vpop.permute.xlu0 %4177
    %4179 = vrot.lane.b32.xlu0 %v4176, 124
    %v4180 = vpop.permute.xlu0 %4179
    %v4183 = vadd.f32 %v4091, %v4178
    %v4184 = vadd.f32 %v4092, %v4180
    %s4185 = sld [smem:[#allocation8 + $0x27]]
    %s4186 = sld [smem:[#allocation8 + $0x58]]
    %v4187 = vstv %s4185
    %v4188 = vmul.f32 %v2889, %v4187
    %v4189 = vmul.f32 %v2890, %v4187
    %v4190 = vmul.f32 %v2891, %v4187
    %v4191 = vstv %s4186
    %v4192 = vmul.f32 %v2892, %v4191
    %v4193 = vmul.f32 %v2893, %v4191
    %v4194 = vmul.f32 %v2894, %v4191
    %v4198 = vrot.slane %v4188, 4
    %v4199 = vrot.slane %v4189, 4
    %v4200 = vsel %vm591, %v4198, %v4199
    %v4201 = vrot.slane %v4190, 4
    %v4202 = vsel %vm591, %v4199, %v4201
    %4203 = vrot.lane.b32.xlu0 %v4200, 124
    %v4204 = vpop.permute.xlu0 %4203
    %4205 = vrot.lane.b32.xlu0 %v4202, 124
    %v4206 = vpop.permute.xlu0 %4205
    %4207 = vrot.lane.b32.xlu0 %v4201, 124
    %v4208 = vpop.permute.xlu0 %4207
    %v4212 = vadd.f32 %v4120, %v4204
    %v4213 = vadd.f32 %v4121, %v4206
    %v4214 = vadd.f32 %v4122, %v4208
    %v4218 = vrot.slane %v4192, 4
    %v4219 = vrot.slane %v4193, 4
    %v4220 = vsel %vm591, %v4218, %v4219
    %v4221 = vrot.slane %v4194, 4
    %v4222 = vsel %vm591, %v4219, %v4221
    %4223 = vrot.lane.b32.xlu0 %v4220, 124
    %v4224 = vpop.permute.xlu0 %4223
    %4225 = vrot.lane.b32.xlu0 %v4222, 124
    %v4226 = vpop.permute.xlu0 %4225
    %4227 = vrot.lane.b32.xlu0 %v4221, 124
    %v4228 = vpop.permute.xlu0 %4227
    %v4232 = vadd.f32 %v4140, %v4224
    %v4233 = vadd.f32 %v4141, %v4226
    %v4234 = vadd.f32 %v4142, %v4228
    %s4235 = sld [smem:[#allocation8 + $0x2e]]
    %s4236 = sld [smem:[#allocation8 + $0x5f]]
    %v4237 = vstv %s4235
    %v4238 = vmul.f32 %v2889, %v4237
    %v4239 = vmul.f32 %v2890, %v4237
    %v4240 = vmul.f32 %v2891, %v4237
    %v4241 = vstv %s4236
    %v4242 = vmul.f32 %v2892, %v4241
    %v4243 = vmul.f32 %v2893, %v4241
    %v4244 = vmul.f32 %v2894, %v4241
    %v4248 = vrot.slane %v4238, 6
    %v4249 = vrot.slane %v4239, 6
    %v4250 = vsel %vm664, %v4248, %v4249
    %v4251 = vrot.slane %v4240, 6
    %v4252 = vsel %vm664, %v4249, %v4251
    %4253 = vrot.lane.b32.xlu0 %v4250, 124
    %v4254 = vpop.permute.xlu0 %4253
    %4255 = vrot.lane.b32.xlu0 %v4252, 124
    %v4256 = vpop.permute.xlu0 %4255
    %v4259 = vadd.f32 %v4167, %v4254
    %v4260 = vadd.f32 %v4168, %v4256
    %v4264 = vrot.slane %v4242, 6
    %v4265 = vrot.slane %v4243, 6
    %v4266 = vsel %vm664, %v4264, %v4265
    %v4267 = vrot.slane %v4244, 6
    %v4268 = vsel %vm664, %v4265, %v4267
    %4269 = vrot.lane.b32.xlu0 %v4266, 124
    %v4270 = vpop.permute.xlu0 %4269
    %4271 = vrot.lane.b32.xlu0 %v4268, 124
    %v4272 = vpop.permute.xlu0 %4271
    %v4275 = vadd.f32 %v4183, %v4270
    %v4276 = vadd.f32 %v4184, %v4272
    %s4277 = sld [smem:[#allocation8 + $0x5]]
    %s4278 = sld [smem:[#allocation8 + $0x36]]
    %v4279 = vstv %s4277
    %v4280 = vmul.f32 %v2889, %v4279
    %v4281 = vmul.f32 %v2890, %v4279
    %v4282 = vstv %s4278
    %v4283 = vmul.f32 %v2892, %v4282
    %v4284 = vmul.f32 %v2893, %v4282
    %4287 = vrot.lane.b32.xlu0 %v4280, 123
    %v4288 = vpop.permute.xlu0 %4287
    %4289 = vrot.lane.b32.xlu0 %v4281, 123
    %v4290 = vpop.permute.xlu0 %4289
    %v4293 = vadd.f32 %v4259, %v4288
    %v4294 = vadd.f32 %v4260, %v4290
    %4297 = vrot.lane.b32.xlu0 %v4283, 123
    %v4298 = vpop.permute.xlu0 %4297
    %4299 = vrot.lane.b32.xlu0 %v4284, 123
    %v4300 = vpop.permute.xlu0 %4299
    %v4303 = vadd.f32 %v4275, %v4298
    %v4304 = vadd.f32 %v4276, %v4300
    %s4305 = sld [smem:[#allocation8 + $0xc]]
    %s4306 = sld [smem:[#allocation8 + $0x3d]]
    %v4307 = vstv %s4305
    %v4308 = vmul.f32 %v2889, %v4307
    %v4309 = vmul.f32 %v2890, %v4307
    %v4310 = vmul.f32 %v2891, %v4307
    %v4311 = vstv %s4306
    %v4312 = vmul.f32 %v2892, %v4311
    %v4313 = vmul.f32 %v2893, %v4311
    %v4314 = vmul.f32 %v2894, %v4311
    %4318 = vrot.lane.b32.xlu0 %v4308, 123
    %v4319 = vpop.permute.xlu0 %4318
    %4320 = vrot.lane.b32.xlu0 %v4309, 123
    %v4321 = vpop.permute.xlu0 %4320
    %4322 = vrot.lane.b32.xlu0 %v4310, 123
    %v4323 = vpop.permute.xlu0 %4322
    %v4327 = vadd.f32 %v4212, %v4319
    %v4328 = vadd.f32 %v4213, %v4321
    %v4329 = vadd.f32 %v4214, %v4323
    %4333 = vrot.lane.b32.xlu0 %v4312, 123
    %v4334 = vpop.permute.xlu0 %4333
    %4335 = vrot.lane.b32.xlu0 %v4313, 123
    %v4336 = vpop.permute.xlu0 %4335
    %4337 = vrot.lane.b32.xlu0 %v4314, 123
    %v4338 = vpop.permute.xlu0 %4337
    %v4342 = vadd.f32 %v4232, %v4334
    %v4343 = vadd.f32 %v4233, %v4336
    %v4344 = vadd.f32 %v4234, %v4338
    %s4345 = sld [smem:[#allocation8 + $0x13]]
    %s4346 = sld [smem:[#allocation8 + $0x44]]
    %v4347 = vstv %s4345
    %v4348 = vmul.f32 %v2889, %v4347
    %v4349 = vmul.f32 %v2890, %v4347
    %v4350 = vmul.f32 %v2891, %v4347
    %v4351 = vstv %s4346
    %v4352 = vmul.f32 %v2892, %v4351
    %v4353 = vmul.f32 %v2893, %v4351
    %v4354 = vmul.f32 %v2894, %v4351
    %v4358 = vrot.slane %v4348, 2
    %v4359 = vrot.slane %v4349, 2
    %v4360 = vsel %vm518, %v4358, %v4359
    %v4361 = vrot.slane %v4350, 2
    %v4362 = vsel %vm518, %v4359, %v4361
    %4363 = vrot.lane.b32.xlu0 %v4360, 123
    %v4364 = vpop.permute.xlu0 %4363
    %4365 = vrot.lane.b32.xlu0 %v4362, 123
    %v4366 = vpop.permute.xlu0 %4365
    %v4369 = vadd.f32 %v4293, %v4364
    %v4370 = vadd.f32 %v4294, %v4366
    %v4374 = vrot.slane %v4352, 2
    %v4375 = vrot.slane %v4353, 2
    %v4376 = vsel %vm518, %v4374, %v4375
    %v4377 = vrot.slane %v4354, 2
    %v4378 = vsel %vm518, %v4375, %v4377
    %4379 = vrot.lane.b32.xlu0 %v4376, 123
    %v4380 = vpop.permute.xlu0 %4379
    %4381 = vrot.lane.b32.xlu0 %v4378, 123
    %v4382 = vpop.permute.xlu0 %4381
    %v4385 = vadd.f32 %v4303, %v4380
    %v4386 = vadd.f32 %v4304, %v4382
    %s4387 = sld [smem:[#allocation8 + $0x1a]]
    %s4388 = sld [smem:[#allocation8 + $0x4b]]
    %v4389 = vstv %s4387
    %v4390 = vmul.f32 %v2889, %v4389
    %v4391 = vmul.f32 %v2890, %v4389
    %v4392 = vmul.f32 %v2891, %v4389
    %v4393 = vstv %s4388
    %v4394 = vmul.f32 %v2892, %v4393
    %v4395 = vmul.f32 %v2893, %v4393
    %v4396 = vmul.f32 %v2894, %v4393
    %v4400 = vrot.slane %v4390, 2
    %v4401 = vrot.slane %v4391, 2
    %v4402 = vsel %vm518, %v4400, %v4401
    %v4403 = vrot.slane %v4392, 2
    %v4404 = vsel %vm518, %v4401, %v4403
    %4405 = vrot.lane.b32.xlu0 %v4402, 123
    %v4406 = vpop.permute.xlu0 %4405
    %4407 = vrot.lane.b32.xlu0 %v4404, 123
    %v4408 = vpop.permute.xlu0 %4407
    %4409 = vrot.lane.b32.xlu0 %v4403, 123
    %v4410 = vpop.permute.xlu0 %4409
    %v4414 = vadd.f32 %v4327, %v4406
    %v4415 = vadd.f32 %v4328, %v4408
    %v4416 = vadd.f32 %v4329, %v4410
    %v4420 = vrot.slane %v4394, 2
    %v4421 = vrot.slane %v4395, 2
    %v4422 = vsel %vm518, %v4420, %v4421
    %v4423 = vrot.slane %v4396, 2
    %v4424 = vsel %vm518, %v4421, %v4423
    %4425 = vrot.lane.b32.xlu0 %v4422, 123
    %v4426 = vpop.permute.xlu0 %4425
    %4427 = vrot.lane.b32.xlu0 %v4424, 123
    %v4428 = vpop.permute.xlu0 %4427
    %4429 = vrot.lane.b32.xlu0 %v4423, 123
    %v4430 = vpop.permute.xlu0 %4429
    %v4434 = vadd.f32 %v4342, %v4426
    %v4435 = vadd.f32 %v4343, %v4428
    %v4436 = vadd.f32 %v4344, %v4430
    %s4437 = sld [smem:[#allocation8 + $0x21]]
    %s4438 = sld [smem:[#allocation8 + $0x52]]
    %v4439 = vstv %s4437
    %v4440 = vmul.f32 %v2889, %v4439
    %v4441 = vmul.f32 %v2890, %v4439
    %v4442 = vmul.f32 %v2891, %v4439
    %v4443 = vstv %s4438
    %v4444 = vmul.f32 %v2892, %v4443
    %v4445 = vmul.f32 %v2893, %v4443
    %v4446 = vmul.f32 %v2894, %v4443
    %v4450 = vrot.slane %v4440, 4
    %v4451 = vrot.slane %v4441, 4
    %v4452 = vsel %vm591, %v4450, %v4451
    %v4453 = vrot.slane %v4442, 4
    %v4454 = vsel %vm591, %v4451, %v4453
    %4455 = vrot.lane.b32.xlu0 %v4452, 123
    %v4456 = vpop.permute.xlu0 %4455
    %4457 = vrot.lane.b32.xlu0 %v4454, 123
    %v4458 = vpop.permute.xlu0 %4457
    %v4461 = vadd.f32 %v4369, %v4456
    %v4462 = vadd.f32 %v4370, %v4458
    %v4466 = vrot.slane %v4444, 4
    %v4467 = vrot.slane %v4445, 4
    %v4468 = vsel %vm591, %v4466, %v4467
    %v4469 = vrot.slane %v4446, 4
    %v4470 = vsel %vm591, %v4467, %v4469
    %4471 = vrot.lane.b32.xlu0 %v4468, 123
    %v4472 = vpop.permute.xlu0 %4471
    %4473 = vrot.lane.b32.xlu0 %v4470, 123
    %v4474 = vpop.permute.xlu0 %4473
    %v4477 = vadd.f32 %v4385, %v4472
    %v4478 = vadd.f32 %v4386, %v4474
    %s4479 = sld [smem:[#allocation8 + $0x28]]
    %s4480 = sld [smem:[#allocation8 + $0x59]]
    %v4481 = vstv %s4479
    %v4482 = vmul.f32 %v2889, %v4481
    %v4483 = vmul.f32 %v2890, %v4481
    %v4484 = vmul.f32 %v2891, %v4481
    %v4485 = vstv %s4480
    %v4486 = vmul.f32 %v2892, %v4485
    %v4487 = vmul.f32 %v2893, %v4485
    %v4488 = vmul.f32 %v2894, %v4485
    %v4492 = vrot.slane %v4482, 4
    %v4493 = vrot.slane %v4483, 4
    %v4494 = vsel %vm591, %v4492, %v4493
    %v4495 = vrot.slane %v4484, 4
    %v4496 = vsel %vm591, %v4493, %v4495
    %4497 = vrot.lane.b32.xlu0 %v4494, 123
    %v4498 = vpop.permute.xlu0 %4497
    %4499 = vrot.lane.b32.xlu0 %v4496, 123
    %v4500 = vpop.permute.xlu0 %4499
    %4501 = vrot.lane.b32.xlu0 %v4495, 123
    %v4502 = vpop.permute.xlu0 %4501
    %v4506 = vadd.f32 %v4414, %v4498
    %v4507 = vadd.f32 %v4415, %v4500
    %v4508 = vadd.f32 %v4416, %v4502
    %v4512 = vrot.slane %v4486, 4
    %v4513 = vrot.slane %v4487, 4
    %v4514 = vsel %vm591, %v4512, %v4513
    %v4515 = vrot.slane %v4488, 4
    %v4516 = vsel %vm591, %v4513, %v4515
    %4517 = vrot.lane.b32.xlu0 %v4514, 123
    %v4518 = vpop.permute.xlu0 %4517
    %4519 = vrot.lane.b32.xlu0 %v4516, 123
    %v4520 = vpop.permute.xlu0 %4519
    %4521 = vrot.lane.b32.xlu0 %v4515, 123
    %v4522 = vpop.permute.xlu0 %4521
    %v4526 = vadd.f32 %v4434, %v4518
    %v4527 = vadd.f32 %v4435, %v4520
    %v4528 = vadd.f32 %v4436, %v4522
    %s4529 = sld [smem:[#allocation8 + $0x2f]]
    %s4530 = sld [smem:[#allocation8 + $0x60]]
    %v4531 = vstv %s4529
    %v4532 = vmul.f32 %v2889, %v4531
    %v4533 = vmul.f32 %v2890, %v4531
    %v4534 = vmul.f32 %v2891, %v4531
    %v4535 = vstv %s4530
    %v4536 = vmul.f32 %v2892, %v4535
    %v4537 = vmul.f32 %v2893, %v4535
    %v4538 = vmul.f32 %v2894, %v4535
    %v4542 = vrot.slane %v4532, 6
    %v4543 = vrot.slane %v4533, 6
    %v4544 = vsel %vm664, %v4542, %v4543
    %v4545 = vrot.slane %v4534, 6
    %v4546 = vsel %vm664, %v4543, %v4545
    %4547 = vrot.lane.b32.xlu0 %v4544, 123
    %v4548 = vpop.permute.xlu0 %4547
    %4549 = vrot.lane.b32.xlu0 %v4546, 123
    %v4550 = vpop.permute.xlu0 %4549
    %v4553 = vadd.f32 %v4461, %v4548
    %v4554 = vadd.f32 %v4462, %v4550
    %v4558 = vrot.slane %v4536, 6
    %v4559 = vrot.slane %v4537, 6
    %v4560 = vsel %vm664, %v4558, %v4559
    %v4561 = vrot.slane %v4538, 6
    %v4562 = vsel %vm664, %v4559, %v4561
    %4563 = vrot.lane.b32.xlu0 %v4560, 123
    %v4564 = vpop.permute.xlu0 %4563
    %4565 = vrot.lane.b32.xlu0 %v4562, 123
    %v4566 = vpop.permute.xlu0 %4565
    %v4569 = vadd.f32 %v4477, %v4564
    %v4570 = vadd.f32 %v4478, %v4566
    %s4571 = sld [smem:[#allocation8 + $0x6]]
    %s4572 = sld [smem:[#allocation8 + $0x37]]
    %v4573 = vstv %s4571
    %v4574 = vmul.f32 %v2889, %v4573
    %v4575 = vmul.f32 %v2890, %v4573
    %v4576 = vstv %s4572
    %v4577 = vmul.f32 %v2892, %v4576
    %v4578 = vmul.f32 %v2893, %v4576
    %4581 = vrot.lane.b32.xlu0 %v4574, 122
    %v4582 = vpop.permute.xlu0 %4581
    %4583 = vrot.lane.b32.xlu0 %v4575, 122
    %v4584 = vpop.permute.xlu0 %4583
    %v4587 = vadd.f32 %v4553, %v4582
    %v4588 = vadd.f32 %v4554, %v4584
    %4591 = vrot.lane.b32.xlu0 %v4577, 122
    %v4592 = vpop.permute.xlu0 %4591
    %4593 = vrot.lane.b32.xlu0 %v4578, 122
    %v4594 = vpop.permute.xlu0 %4593
    %v4597 = vadd.f32 %v4569, %v4592
    %v4598 = vadd.f32 %v4570, %v4594
    %s4599 = sld [smem:[#allocation8 + $0xd]]
    %s4600 = sld [smem:[#allocation8 + $0x3e]]
    %v4601 = vstv %s4599
    %v4602 = vmul.f32 %v2889, %v4601
    %v4603 = vmul.f32 %v2890, %v4601
    %v4604 = vmul.f32 %v2891, %v4601
    %v4605 = vstv %s4600
    %v4606 = vmul.f32 %v2892, %v4605
    %v4607 = vmul.f32 %v2893, %v4605
    %v4608 = vmul.f32 %v2894, %v4605
    %4612 = vrot.lane.b32.xlu0 %v4602, 122
    %v4613 = vpop.permute.xlu0 %4612
    %4614 = vrot.lane.b32.xlu0 %v4603, 122
    %v4615 = vpop.permute.xlu0 %4614
    %4616 = vrot.lane.b32.xlu0 %v4604, 122
    %v4617 = vpop.permute.xlu0 %4616
    %v4621 = vadd.f32 %v4506, %v4613
    %v4622 = vadd.f32 %v4507, %v4615
    %v4623 = vadd.f32 %v4508, %v4617
    %4627 = vrot.lane.b32.xlu0 %v4606, 122
    %v4628 = vpop.permute.xlu0 %4627
    %4629 = vrot.lane.b32.xlu0 %v4607, 122
    %v4630 = vpop.permute.xlu0 %4629
    %4631 = vrot.lane.b32.xlu0 %v4608, 122
    %v4632 = vpop.permute.xlu0 %4631
    %v4636 = vadd.f32 %v4526, %v4628
    %v4637 = vadd.f32 %v4527, %v4630
    %v4638 = vadd.f32 %v4528, %v4632
    %s4639 = sld [smem:[#allocation8 + $0x14]]
    %s4640 = sld [smem:[#allocation8 + $0x45]]
    %v4641 = vstv %s4639
    %v4642 = vmul.f32 %v2889, %v4641
    %v4643 = vmul.f32 %v2890, %v4641
    %v4644 = vmul.f32 %v2891, %v4641
    %v4645 = vstv %s4640
    %v4646 = vmul.f32 %v2892, %v4645
    %v4647 = vmul.f32 %v2893, %v4645
    %v4648 = vmul.f32 %v2894, %v4645
    %v4652 = vrot.slane %v4642, 2
    %v4653 = vrot.slane %v4643, 2
    %v4654 = vsel %vm518, %v4652, %v4653
    %v4655 = vrot.slane %v4644, 2
    %v4656 = vsel %vm518, %v4653, %v4655
    %4657 = vrot.lane.b32.xlu0 %v4654, 122
    %v4658 = vpop.permute.xlu0 %4657
    %4659 = vrot.lane.b32.xlu0 %v4656, 122
    %v4660 = vpop.permute.xlu0 %4659
    %v4663 = vadd.f32 %v4587, %v4658
    %v4664 = vadd.f32 %v4588, %v4660
    %v4668 = vrot.slane %v4646, 2
    %v4669 = vrot.slane %v4647, 2
    %v4670 = vsel %vm518, %v4668, %v4669
    %v4671 = vrot.slane %v4648, 2
    %v4672 = vsel %vm518, %v4669, %v4671
    %4673 = vrot.lane.b32.xlu0 %v4670, 122
    %v4674 = vpop.permute.xlu0 %4673
    %4675 = vrot.lane.b32.xlu0 %v4672, 122
    %v4676 = vpop.permute.xlu0 %4675
    %v4679 = vadd.f32 %v4597, %v4674
    %v4680 = vadd.f32 %v4598, %v4676
    %s4681 = sld [smem:[#allocation8 + $0x1b]]
    %s4682 = sld [smem:[#allocation8 + $0x4c]]
    %v4683 = vstv %s4681
    %v4684 = vmul.f32 %v2889, %v4683
    %v4685 = vmul.f32 %v2890, %v4683
    %v4686 = vmul.f32 %v2891, %v4683
    %v4687 = vstv %s4682
    %v4688 = vmul.f32 %v2892, %v4687
    %v4689 = vmul.f32 %v2893, %v4687
    %v4690 = vmul.f32 %v2894, %v4687
    %v4694 = vrot.slane %v4684, 2
    %v4695 = vrot.slane %v4685, 2
    %v4696 = vsel %vm518, %v4694, %v4695
    %v4697 = vrot.slane %v4686, 2
    %v4698 = vsel %vm518, %v4695, %v4697
    %4699 = vrot.lane.b32.xlu0 %v4696, 122
    %v4700 = vpop.permute.xlu0 %4699
    %4701 = vrot.lane.b32.xlu0 %v4698, 122
    %v4702 = vpop.permute.xlu0 %4701
    %4703 = vrot.lane.b32.xlu0 %v4697, 122
    %v4704 = vpop.permute.xlu0 %4703
    %v4708 = vadd.f32 %v4621, %v4700
    %v4709 = vadd.f32 %v4622, %v4702
    %v4710 = vadd.f32 %v4623, %v4704
    %v4714 = vrot.slane %v4688, 2
    %v4715 = vrot.slane %v4689, 2
    %v4716 = vsel %vm518, %v4714, %v4715
    %v4717 = vrot.slane %v4690, 2
    %v4718 = vsel %vm518, %v4715, %v4717
    %4719 = vrot.lane.b32.xlu0 %v4716, 122
    %v4720 = vpop.permute.xlu0 %4719
    %4721 = vrot.lane.b32.xlu0 %v4718, 122
    %v4722 = vpop.permute.xlu0 %4721
    %4723 = vrot.lane.b32.xlu0 %v4717, 122
    %v4724 = vpop.permute.xlu0 %4723
    %v4728 = vadd.f32 %v4636, %v4720
    %v4729 = vadd.f32 %v4637, %v4722
    %v4730 = vadd.f32 %v4638, %v4724
    %s4731 = sld [smem:[#allocation8 + $0x22]]
    %s4732 = sld [smem:[#allocation8 + $0x53]]
    %v4733 = vstv %s4731
    %v4734 = vmul.f32 %v2889, %v4733
    %v4735 = vmul.f32 %v2890, %v4733
    %v4736 = vmul.f32 %v2891, %v4733
    %v4737 = vstv %s4732
    %v4738 = vmul.f32 %v2892, %v4737
    %v4739 = vmul.f32 %v2893, %v4737
    %v4740 = vmul.f32 %v2894, %v4737
    %v4744 = vrot.slane %v4734, 4
    %v4745 = vrot.slane %v4735, 4
    %v4746 = vsel %vm591, %v4744, %v4745
    %v4747 = vrot.slane %v4736, 4
    %v4748 = vsel %vm591, %v4745, %v4747
    %4749 = vrot.lane.b32.xlu0 %v4746, 122
    %v4750 = vpop.permute.xlu0 %4749
    %4751 = vrot.lane.b32.xlu0 %v4748, 122
    %v4752 = vpop.permute.xlu0 %4751
    %v4755 = vadd.f32 %v4663, %v4750
    %v4756 = vadd.f32 %v4664, %v4752
    %v4760 = vrot.slane %v4738, 4
    %v4761 = vrot.slane %v4739, 4
    %v4762 = vsel %vm591, %v4760, %v4761
    %v4763 = vrot.slane %v4740, 4
    %v4764 = vsel %vm591, %v4761, %v4763
    %4765 = vrot.lane.b32.xlu0 %v4762, 122
    %v4766 = vpop.permute.xlu0 %4765
    %4767 = vrot.lane.b32.xlu0 %v4764, 122
    %v4768 = vpop.permute.xlu0 %4767
    %v4771 = vadd.f32 %v4679, %v4766
    %v4772 = vadd.f32 %v4680, %v4768
    %s4773 = sld [smem:[#allocation8 + $0x29]]
    %s4774 = sld [smem:[#allocation8 + $0x5a]]
    %v4775 = vstv %s4773
    %v4776 = vmul.f32 %v2889, %v4775
    %v4777 = vmul.f32 %v2890, %v4775
    %v4778 = vmul.f32 %v2891, %v4775
    %v4779 = vstv %s4774
    %v4780 = vmul.f32 %v2892, %v4779
    %v4781 = vmul.f32 %v2893, %v4779
    %v4782 = vmul.f32 %v2894, %v4779
    %v4786 = vrot.slane %v4776, 4
    %v4787 = vrot.slane %v4777, 4
    %v4788 = vsel %vm591, %v4786, %v4787
    %v4789 = vrot.slane %v4778, 4
    %v4790 = vsel %vm591, %v4787, %v4789
    %4791 = vrot.lane.b32.xlu0 %v4788, 122
    %v4792 = vpop.permute.xlu0 %4791
    %4793 = vrot.lane.b32.xlu0 %v4790, 122
    %v4794 = vpop.permute.xlu0 %4793
    %4795 = vrot.lane.b32.xlu0 %v4789, 122
    %v4796 = vpop.permute.xlu0 %4795
    %v4800 = vadd.f32 %v4708, %v4792
    %v4801 = vadd.f32 %v4709, %v4794
    %v4802 = vadd.f32 %v4710, %v4796
    %v4806 = vrot.slane %v4780, 4
    %v4807 = vrot.slane %v4781, 4
    %v4808 = vsel %vm591, %v4806, %v4807
    %v4809 = vrot.slane %v4782, 4
    %v4810 = vsel %vm591, %v4807, %v4809
    %4811 = vrot.lane.b32.xlu0 %v4808, 122
    %v4812 = vpop.permute.xlu0 %4811
    %4813 = vrot.lane.b32.xlu0 %v4810, 122
    %v4814 = vpop.permute.xlu0 %4813
    %4815 = vrot.lane.b32.xlu0 %v4809, 122
    %v4816 = vpop.permute.xlu0 %4815
    %v4820 = vadd.f32 %v4728, %v4812
    %v4821 = vadd.f32 %v4729, %v4814
    %v4822 = vadd.f32 %v4730, %v4816
    %s4823 = sld [smem:[#allocation8 + $0x30]]
    %s4824 = sld [smem:[#allocation8 + $0x61]]
    %v4825 = vstv %s4823
    %v4826 = vmul.f32 %v2889, %v4825
    %v4827 = vmul.f32 %v2890, %v4825
    %v4828 = vmul.f32 %v2891, %v4825
    %v4829 = vstv %s4824
    %v4830 = vmul.f32 %v2892, %v4829
    %v4831 = vmul.f32 %v2893, %v4829
    %v4832 = vmul.f32 %v2894, %v4829
    %v4836 = vrot.slane %v4826, 6
    %v4837 = vrot.slane %v4827, 6
    %v4838 = vsel %vm664, %v4836, %v4837
    %v4839 = vrot.slane %v4828, 6
    %v4840 = vsel %vm664, %v4837, %v4839
    %4841 = vrot.lane.b32.xlu0 %v4838, 122
    %v4842 = vpop.permute.xlu0 %4841
    %4843 = vrot.lane.b32.xlu0 %v4840, 122
    %v4844 = vpop.permute.xlu0 %4843
    %v4847 = vadd.f32 %v4755, %v4842
    %v4848 = vadd.f32 %v4756, %v4844
    %v4852 = vrot.slane %v4830, 6
    %v4853 = vrot.slane %v4831, 6
    %v4854 = vsel %vm664, %v4852, %v4853
    %v4855 = vrot.slane %v4832, 6
    %v4856 = vsel %vm664, %v4853, %v4855
    %4857 = vrot.lane.b32.xlu0 %v4854, 122
    %v4858 = vpop.permute.xlu0 %4857
    %4859 = vrot.lane.b32.xlu0 %v4856, 122
    %v4860 = vpop.permute.xlu0 %4859
    %v4863 = vadd.f32 %v4771, %v4858
    %v4864 = vadd.f32 %v4772, %v4860
    %v4868 = vrot.slane %v4800, 1
    %v4869 = vrot.slane %v4801, 1
    %v4870 = vsel %vm2453, %v4868, %v4869
    %v4871 = vrot.slane %v4802, 1
    %v4872 = vsel %vm2453, %v4869, %v4871
    %v4875 = vadd.f32 %v4847, %v4870
    %v4876 = vadd.f32 %v4848, %v4872
    %v4880 = vrot.slane %v4820, 1
    %v4881 = vrot.slane %v4821, 1
    %v4882 = vsel %vm2453, %v4880, %v4881
    %v4883 = vrot.slane %v4822, 1
    %v4884 = vsel %vm2453, %v4881, %v4883
    %v4887 = vadd.f32 %v4863, %v4882
    %v4888 = vadd.f32 %v4864, %v4884
    %v4889 = vadd.f32 %v4875, %v4887
    %v4890 = vadd.f32 %v4876, %v4888
    %v4891 = vadd.f32 %v4889, %v2477
    %v4892 = vadd.f32 %v4890, %v2477
    %s4893 = scalar_lea.vmem [#allocation9], 16
    %4894 = vst.msk [vmem:[%s4893] sm:$0xff] %vm76, %v4891
    %4895 = vst.msk [vmem:[%s4893 + $0x8] sm:$0xff] %vm76, %v4892
    // Predicated region
    $region22: #{spatial_attention_forward.1} parent=1 // pred_check
      _
    $region23: #{spatial_attention_forward.1} parent=1 // pred_check_branch
      %4897 = sbr.rel (0) target = $region25
    $region24: #{spatial_attention_forward.1} parent=1 // pred_region
      %s4899 = ssub.s32 512, 512
      %4900 = vsyncadd [#allocation6], %s4899
      %s4901 = sshll.u32 [#allocation9], 4
      %s4902 = int_to_ptr.vmem [resolvable:$true] %s4901
      %4907 = dma.vmem_to_hbm [thread:$0]  %s4902, 512, %s3, [#allocation6], 128, 128, 8
    $region25: #{spatial_attention_forward.1} parent=1 // pred_fallthru
      _
    // Predicated region
    $region26: #{spatial_attention_forward.1} parent=1 // pred_check
      _
    $region27: #{spatial_attention_forward.1} parent=1 // pred_check_branch
      %4909 = sbr.rel (0) target = $region29
    $region28: #{spatial_attention_forward.1} parent=1 // pred_region
      %4910 = dma.done [#allocation6], 512
    $region29: #{spatial_attention_forward.1} parent=1 // pred_fallthru
      _
    %4911 = vsyncpa [#allocation5], 1
    %4912 = vsyncpa [#allocation6], 1
    %4913 = vsyncpa [#allocation7], 1

</llo_original>
